<compile_context>
chip_gen: v6e
topology: v6e:2x2x1
jax: 0.10.0
libtpu: 0.0.40
codegen_flags: <defaults>
</compile_context>

<pallas_src>
import functools

import jax
import jax.numpy as jnp
from jax.experimental import pallas as pl
from jax.experimental.pallas import tpu as pltpu

LANE = 128  # TPU lane width; channel dims are padded to a multiple of this.


def _round_up(x, m):
    return ((x + m - 1) // m) * m


def _fold_bn(gamma, beta, mean, var, eps=1e-5):
    scale = gamma / jnp.sqrt(var + eps)
    return scale, beta - mean * scale


def _space_to_depth(x, stride, pad):
    """(N,H,W,C) -> (N, stride*stride, Hq, Wq, C) phase tensor such that
    out[n, py*stride+px, i, j, c] == x_padded[n, i*stride+py, j*stride+px, c].
    Same total size as the padded input: no im2col-style 9x duplication."""
    n, h, w, c = x.shape
    hp, wp = h + 2 * pad, w + 2 * pad
    hq, wq = -(-hp // stride), -(-wp // stride)
    xp = jnp.pad(x, ((0, 0),
                     (pad, hq * stride - hp + pad),
                     (pad, wq * stride - wp + pad),
                     (0, 0)))
    xp = xp.reshape(n, hq, stride, wq, stride, c)
    xp = jnp.transpose(xp, (0, 2, 4, 1, 3, 5))
    return xp.reshape(n, stride * stride, hq, wq, c), (hq, wq)


# ---------------------------------------------------------------------------
# Pallas kernel: implicit-im2col conv (kxk, stride) + folded-BN bias
#                [+ residual] [+ ReLU], f32 accumulation.
# Grid step = (image n, Cout tile j, Cin tile k); Cin is the reduction axis.
# ---------------------------------------------------------------------------
def _conv_bn_act_kernel(*refs, ksize, stride, ho, wo, relu, has_residual):
    if has_residual:
        x_ref, w_ref, b_ref, r_ref, o_ref, acc_ref = refs
    else:
        x_ref, w_ref, b_ref, o_ref, acc_ref = refs
        r_ref = None

    k_idx = pl.program_id(2)

    @pl.when(k_idx == 0)
    def _init():
        acc_ref[...] = jnp.zeros_like(acc_ref)

    # Implicit im2col: ksize*ksize shifted (ho, wo, tcin) views of the resident
    # space-to-depth block; each is one (ho*wo, tcin) @ (tcin, tcout) MXU call.
    for dy in range(ksize):
        py, qy = dy % stride, dy // stride
        for dx in range(ksize):
            px, qx = dx % stride, dx // stride
            xs = x_ref[0, py * stride + px, pl.ds(qy, ho), pl.ds(qx, wo), :]
            xs = xs.reshape(ho * wo, xs.shape[-1])
            acc_ref[...] += jnp.dot(xs, w_ref[dy, dx],
                                    preferred_element_type=jnp.float32)

    @pl.when(k_idx == pl.num_programs(2) - 1)
    def _finalize():
        y = acc_ref[...] + b_ref[...]          # BN scale already folded into w
        if has_residual:
            y = y + r_ref[0, :, :].astype(jnp.float32)
        if relu:
            y = jnp.maximum(y, 0.0)
        o_ref[0, :, :] = y.astype(o_ref.dtype)


def conv_bn_act(x, w_oihw, bn, *, stride, relu, residual=None,
                out_dtype=jnp.float32):
    """Fused conv(kxk, stride) + eval-mode BN [+ residual] [+ ReLU].

    x:        (N, H, W, Cx) NHWC; channels beyond the weight's Cin must be 0.
    w_oihw:   (Cout, Cin, k, k) PyTorch layout, Cin <= Cx.
    bn:       (gamma, beta, running_mean, running_var).
    residual: optional (N, Ho*Wo, Cout_padded) array added before ReLU.
    Returns ((N, Ho*Wo, Cout_padded), (Ho, Wo)).
    """
    n, h, w, cx = x.shape
    cout, cin, kh, kw = w_oihw.shape
    assert kh == kw and cin <= cx
    ksize, pad = kh, (kh - 1) // 2

    cin_p = _round_up(cx, LANE)
    cout_p = _round_up(cout, LANE)

    # Fold BN scale into the bf16 weights (epilogue = add only); lane-pad both
    # channel dims to multiples of 128 for dense stores and full MXU width.
    scale, bias = _fold_bn(*bn)
    w_f = jnp.transpose(w_oihw, (2, 3, 1, 0)) * scale           # (k,k,Cin,Cout)
    w_f = jnp.pad(w_f, ((0, 0), (0, 0),
                        (0, cin_p - cin),
                        (0, cout_p - cout))).astype(jnp.bfloat16)
    bias_p = jnp.pad(bias, (0, cout_p - cout)).reshape(1, cout_p)
    bias_p = bias_p.astype(jnp.float32)

    xb = jnp.pad(x, ((0, 0), (0, 0), (0, 0), (0, cin_p - cx)))
    xb = xb.astype(jnp.bfloat16)                                # bf16 operands
    xph, (hq, wq) = _space_to_depth(xb, stride, pad)

    ho = (h + 2 * pad - ksize) // stride + 1
    wo = (w + 2 * pad - ksize) // stride + 1
    m = ho * wo

    # Channel tiles: 256 (v6e/v7x 256x256 MXU) when divisible, else 128.
    tcout = 256 if cout_p % 256 == 0 else 128
    tcin = 256 if cin_p % 256 == 0 else 128
    grid = (n, cout_p // tcout, cin_p // tcin)    # reduction (Cin) axis last

    in_specs = [
        pl.BlockSpec((1, stride * stride, hq, wq, tcin),
                     lambda ni, j, k: (ni, 0, 0, 0, k)),
        pl.BlockSpec((ksize, ksize, tcin, tcout),
                     lambda ni, j, k: (0, 0, k, j)),
        pl.BlockSpec((1, tcout), lambda ni, j, k: (0, j)),
    ]
    args = [xph, w_f, bias_p]
    if residual is not None:
        assert residual.shape == (n, m, cout_p)
        in_specs.append(pl.BlockSpec((1, m, tcout), lambda ni, j, k: (ni, 0, j)))
        args.append(residual)

    kernel = functools.partial(
        _conv_bn_act_kernel, ksize=ksize, stride=stride, ho=ho, wo=wo,
        relu=relu, has_residual=residual is not None)

    out = pl.pallas_call(
        kernel,
        out_shape=jax.ShapeDtypeStruct((n, m, cout_p), out_dtype),
        grid=grid,
        in_specs=in_specs,
        out_specs=pl.BlockSpec((1, m, tcout), lambda ni, j, k: (ni, 0, j)),
        scratch_shapes=[pltpu.VMEM((m, tcout), jnp.float32)],
        compiler_params=pltpu.CompilerParams(
            dimension_semantics=("parallel", "parallel", "arbitrary")),
    )(*args)
    return out, (ho, wo)


# ---------------------------------------------------------------------------
# BasicBlock forward (NCHW in / NCHW out, matching PyTorch conventions)
# ---------------------------------------------------------------------------
def basic_block_forward(x_nchw, params, stride):
    x = jnp.transpose(x_nchw, (0, 2, 3, 1))                 # NCHW -> NHWC
    n, h, w, in_planes = x.shape
    planes = params["w1"].shape[0]
    cp = _round_up(planes, LANE)

    # conv1 (3x3, stride) -> bn1 -> relu; bf16 intermediate in HBM.
    y1, (ho, wo) = conv_bn_act(x, params["w1"], params["bn1"], stride=stride,
                               relu=True, out_dtype=jnp.bfloat16)
    y1_nhwc = y1.reshape(n, ho, wo, cp)

    # shortcut branch (projection 1x1 conv + bn when shape changes); bf16.
    if stride != 1 or in_planes != planes:                   # expansion = 1
        short, _ = conv_bn_act(x, params["ws"], params["bns"], stride=stride,
                               relu=False, out_dtype=jnp.bfloat16)
    else:
        short = jnp.pad(x, ((0, 0), (0, 0), (0, 0), (0, cp - in_planes)))
        short = short.reshape(n, h * w, cp).astype(jnp.bfloat16)

    # conv2 (3x3, s=1) -> bn2 -> +shortcut -> relu, fused in one kernel.
    y2, _ = conv_bn_act(y1_nhwc, params["w2"], params["bn2"], stride=1,
                        relu=True, residual=short, out_dtype=jnp.float32)

    out = y2.reshape(n, ho, wo, cp)[..., :planes]
    return jnp.transpose(out, (0, 3, 1, 2))                  # NHWC -> NCHW


# ---------------------------------------------------------------------------
# Pure-JAX f32 reference (lax conv) for correctness check
# ---------------------------------------------------------------------------
def reference_forward(x_nchw, params, stride):
    x = jnp.transpose(x_nchw, (0, 2, 3, 1)).astype(jnp.float32)

    def conv(inp, w_oihw, s, pad):
        wt = jnp.transpose(w_oihw, (2, 3, 1, 0))             # HWIO
        return jax.lax.conv_general_dilated(
            inp, wt, window_strides=(s, s),
            padding=[(pad, pad), (pad, pad)],
            dimension_numbers=("NHWC", "HWIO", "NHWC"))

    def bn(inp, bnp):
        s, b = _fold_bn(*bnp)
        return inp * s + b

    y = jax.nn.relu(bn(conv(x, params["w1"], stride, 1), params["bn1"]))
    y = bn(conv(y, params["w2"], 1, 1), params["bn2"])
    in_planes, planes = x.shape[-1], params["w1"].shape[0]
    if stride != 1 or in_planes != planes:
        sc = bn(conv(x, params["ws"], stride, 0), params["bns"])
    else:
        sc = x
    return jnp.transpose(jax.nn.relu(y + sc), (0, 3, 1, 2))


# ---------------------------------------------------------------------------
if __name__ == "__main__":
    key = jax.random.PRNGKey(0)

    def bn_params(k, c):
        k1, k2, k3, k4 = jax.random.split(k, 4)
        gamma = 1.0 + 0.1 * jax.random.normal(k1, (c,), jnp.float32)
        beta = 0.1 * jax.random.normal(k2, (c,), jnp.float32)
        mean = 0.1 * jax.random.normal(k3, (c,), jnp.float32)
        var = jnp.abs(jax.random.normal(k4, (c,), jnp.float32)) + 0.5
        return (gamma, beta, mean, var)

    def make_params(k, in_planes, planes):
        ks = jax.random.split(k, 6)
        return {
            "w1": 0.1 * jax.random.normal(ks[0], (planes, in_planes, 3, 3), jnp.float32),
            "bn1": bn_params(ks[1], planes),
            "w2": 0.1 * jax.random.normal(ks[2], (planes, planes, 3, 3), jnp.float32),
            "bn2": bn_params(ks[3], planes),
            "ws": 0.1 * jax.random.normal(ks[4], (planes, in_planes, 1, 1), jnp.float32),
            "bns": bn_params(ks[5], planes),
        }

    fwd = jax.jit(basic_block_forward, static_argnames="stride")

    configs = [
        (4, 8, 2),   # downsampling block with projection (1x1, stride-2) shortcut
        (8, 8, 1),   # identity-shortcut block
    ]
    cfg_keys = jax.random.split(key, len(configs))
    for (in_planes, planes, stride), kc in zip(configs, cfg_keys):
        kx, kp = jax.random.split(kc)
        N, H, W = 2, 16, 16
        x = jax.random.normal(kx, (N, in_planes, H, W), jnp.float32)
        params = make_params(kp, in_planes, planes)

        out = jax.block_until_ready(fwd(x, params, stride=stride))
        ref = jax.block_until_ready(reference_forward(x, params, stride))

        assert out.shape == (N, planes, H // stride, W // stride), out.shape
        max_err = float(jnp.max(jnp.abs(out - ref)))
        # bf16 operands / f32 accumulation vs. full-f32 reference.
        assert jnp.allclose(out, ref, atol=5e-2, rtol=5e-2), max_err

    print("KERNEL_OK")
</pallas_src>

<mosaic_0001>
module attributes {stable_mosaic.version = 11 : i64} {
  func.func @_conv_bn_act_kernel(%arg0: i32, %arg1: i32, %arg2: i32, %arg3: memref<1x4x9x9x128xbf16, #tpu.memory_space<vmem>>, %arg4: memref<3x3x128x128xbf16, #tpu.memory_space<vmem>>, %arg5: memref<1x128xf32, #tpu.memory_space<vmem>>, %arg6: memref<1x64x128xbf16, #tpu.memory_space<vmem>>, %arg7: memref<64x128xf32, #tpu.memory_space<vmem>>) attributes {dimension_semantics = [#tpu.dimension_semantics<parallel>, #tpu.dimension_semantics<parallel>, #tpu.dimension_semantics<arbitrary>], iteration_bounds = array<i64: 2, 1, 1>, scalar_prefetch = 0 : i64, scratch_operands = 1 : i64, tpu.core_type = #tpu.core_type<tc>, window_params = [{transform_indices = @transform_0, window_bounds = array<i64: 1, 4, 9, 9, 128>}, {transform_indices = @transform_1, window_bounds = array<i64: 3, 3, 128, 128>}, {transform_indices = @transform_2, window_bounds = array<i64: 1, 128>}, {transform_indices = @transform_3, window_bounds = array<i64: 1, 64, 128>}]} {
    %c0_i32 = arith.constant 0 : i32
    %0 = arith.cmpi eq, %arg2, %c0_i32 : i32
    %1 = arith.extui %0 : i1 to i32
    %c0_i32_0 = arith.constant 0 : i32
    %2 = arith.cmpi ne, %1, %c0_i32_0 : i32
    scf.if %2 {
      %cst_124 = arith.constant 0.000000e+00 : f32
      %87 = vector.broadcast %cst_124 : f32 to vector<64x128xf32>
      %c0_125 = arith.constant 0 : index
      %c0_126 = arith.constant 0 : index
      %88 = vector.load %arg7[%c0_125, %c0_126] : memref<64x128xf32, #tpu.memory_space<vmem>>, vector<64x128xf32>
      tpu.vector_store %arg7[%c0_125, %c0_126], %87 {strides = array<i32>} : memref<64x128xf32, #tpu.memory_space<vmem>>, vector<64x128xf32>,
    } else {
    }
    %c0 = arith.constant 0 : index
    %c0_1 = arith.constant 0 : index
    %c0_2 = arith.constant 0 : index
    %c0_3 = arith.constant 0 : index
    %c0_4 = arith.constant 0 : index
    %3 = vector.load %arg3[%c0, %c0_1, %c0_2, %c0_3, %c0_4] : memref<1x4x9x9x128xbf16, #tpu.memory_space<vmem>>, vector<1x1x8x8x128xbf16>
    %4 = vector.shape_cast %3 : vector<1x1x8x8x128xbf16> to vector<8x8x128xbf16>
    %5 = vector.shape_cast %4 : vector<8x8x128xbf16> to vector<64x128xbf16>
    %c0_5 = arith.constant 0 : index
    %c0_6 = arith.constant 0 : index
    %6 = vector.load %arg7[%c0_5, %c0_6] : memref<64x128xf32, #tpu.memory_space<vmem>>, vector<64x128xf32>
    %c0_7 = arith.constant 0 : index
    %c0_8 = arith.constant 0 : index
    %c0_9 = arith.constant 0 : index
    %c0_10 = arith.constant 0 : index
    %7 = vector.load %arg4[%c0_7, %c0_8, %c0_9, %c0_10] : memref<3x3x128x128xbf16, #tpu.memory_space<vmem>>, vector<1x1x128x128xbf16>
    %8 = vector.shape_cast %7 : vector<1x1x128x128xbf16> to vector<128x128xbf16>
    %cst = arith.constant dense<0.000000e+00> : vector<64x128xf32>
    %9 = tpu.matmul %5, %8, %cst {dimension_numbers = #tpu.dot_dimension_numbers<[1], [0], [0], [1], [0, 0, 1, 1], [], []>} : vector<64x128xbf16>, vector<128x128xbf16>, vector<64x128xf32> -> vector<64x128xf32>
    %10 = arith.addf %6, %9 : vector<64x128xf32>
    %c0_11 = arith.constant 0 : index
    %c0_12 = arith.constant 0 : index
    %11 = vector.load %arg7[%c0_11, %c0_12] : memref<64x128xf32, #tpu.memory_space<vmem>>, vector<64x128xf32>
    tpu.vector_store %arg7[%c0_11, %c0_12], %10 {strides = array<i32>} : memref<64x128xf32, #tpu.memory_space<vmem>>, vector<64x128xf32>,
    %c0_13 = arith.constant 0 : index
    %c1 = arith.constant 1 : index
    %c0_14 = arith.constant 0 : index
    %c0_15 = arith.constant 0 : index
    %c0_16 = arith.constant 0 : index
    %12 = vector.load %arg3[%c0_13, %c1, %c0_14, %c0_15, %c0_16] : memref<1x4x9x9x128xbf16, #tpu.memory_space<vmem>>, vector<1x1x8x8x128xbf16>
    %13 = vector.shape_cast %12 : vector<1x1x8x8x128xbf16> to vector<8x8x128xbf16>
    %14 = vector.shape_cast %13 : vector<8x8x128xbf16> to vector<64x128xbf16>
    %c0_17 = arith.constant 0 : index
    %c0_18 = arith.constant 0 : index
    %15 = vector.load %arg7[%c0_17, %c0_18] : memref<64x128xf32, #tpu.memory_space<vmem>>, vector<64x128xf32>
    %c0_19 = arith.constant 0 : index
    %c1_20 = arith.constant 1 : index
    %c0_21 = arith.constant 0 : index
    %c0_22 = arith.constant 0 : index
    %16 = vector.load %arg4[%c0_19, %c1_20, %c0_21, %c0_22] : memref<3x3x128x128xbf16, #tpu.memory_space<vmem>>, vector<1x1x128x128xbf16>
    %17 = vector.shape_cast %16 : vector<1x1x128x128xbf16> to vector<128x128xbf16>
    %cst_23 = arith.constant dense<0.000000e+00> : vector<64x128xf32>
    %18 = tpu.matmul %14, %17, %cst_23 {dimension_numbers = #tpu.dot_dimension_numbers<[1], [0], [0], [1], [0, 0, 1, 1], [], []>} : vector<64x128xbf16>, vector<128x128xbf16>, vector<64x128xf32> -> vector<64x128xf32>
    %19 = arith.addf %15, %18 : vector<64x128xf32>
    %c0_24 = arith.constant 0 : index
    %c0_25 = arith.constant 0 : index
    %20 = vector.load %arg7[%c0_24, %c0_25] : memref<64x128xf32, #tpu.memory_space<vmem>>, vector<64x128xf32>
    tpu.vector_store %arg7[%c0_24, %c0_25], %19 {strides = array<i32>} : memref<64x128xf32, #tpu.memory_space<vmem>>, vector<64x128xf32>,
    %c0_26 = arith.constant 0 : index
    %c0_27 = arith.constant 0 : index
    %c0_28 = arith.constant 0 : index
    %c1_29 = arith.constant 1 : index
    %c0_30 = arith.constant 0 : index
    %21 = vector.load %arg3[%c0_26, %c0_27, %c0_28, %c1_29, %c0_30] : memref<1x4x9x9x128xbf16, #tpu.memory_space<vmem>>, vector<1x1x8x8x128xbf16>
    %22 = vector.shape_cast %21 : vector<1x1x8x8x128xbf16> to vector<8x8x128xbf16>
    %23 = vector.shape_cast %22 : vector<8x8x128xbf16> to vector<64x128xbf16>
    %c0_31 = arith.constant 0 : index
    %c0_32 = arith.constant 0 : index
    %24 = vector.load %arg7[%c0_31, %c0_32] : memref<64x128xf32, #tpu.memory_space<vmem>>, vector<64x128xf32>
    %c0_33 = arith.constant 0 : index
    %c2 = arith.constant 2 : index
    %c0_34 = arith.constant 0 : index
    %c0_35 = arith.constant 0 : index
    %25 = vector.load %arg4[%c0_33, %c2, %c0_34, %c0_35] : memref<3x3x128x128xbf16, #tpu.memory_space<vmem>>, vector<1x1x128x128xbf16>
    %26 = vector.shape_cast %25 : vector<1x1x128x128xbf16> to vector<128x128xbf16>
    %cst_36 = arith.constant dense<0.000000e+00> : vector<64x128xf32>
    %27 = tpu.matmul %23, %26, %cst_36 {dimension_numbers = #tpu.dot_dimension_numbers<[1], [0], [0], [1], [0, 0, 1, 1], [], []>} : vector<64x128xbf16>, vector<128x128xbf16>, vector<64x128xf32> -> vector<64x128xf32>
    %28 = arith.addf %24, %27 : vector<64x128xf32>
    %c0_37 = arith.constant 0 : index
    %c0_38 = arith.constant 0 : index
    %29 = vector.load %arg7[%c0_37, %c0_38] : memref<64x128xf32, #tpu.memory_space<vmem>>, vector<64x128xf32>
    tpu.vector_store %arg7[%c0_37, %c0_38], %28 {strides = array<i32>} : memref<64x128xf32, #tpu.memory_space<vmem>>, vector<64x128xf32>,
    %c0_39 = arith.constant 0 : index
    %c2_40 = arith.constant 2 : index
    %c0_41 = arith.constant 0 : index
    %c0_42 = arith.constant 0 : index
    %c0_43 = arith.constant 0 : index
    %30 = vector.load %arg3[%c0_39, %c2_40, %c0_41, %c0_42, %c0_43] : memref<1x4x9x9x128xbf16, #tpu.memory_space<vmem>>, vector<1x1x8x8x128xbf16>
    %31 = vector.shape_cast %30 : vector<1x1x8x8x128xbf16> to vector<8x8x128xbf16>
    %32 = vector.shape_cast %31 : vector<8x8x128xbf16> to vector<64x128xbf16>
    %c0_44 = arith.constant 0 : index
    %c0_45 = arith.constant 0 : index
    %33 = vector.load %arg7[%c0_44, %c0_45] : memref<64x128xf32, #tpu.memory_space<vmem>>, vector<64x128xf32>
    %c1_46 = arith.constant 1 : index
    %c0_47 = arith.constant 0 : index
    %c0_48 = arith.constant 0 : index
    %c0_49 = arith.constant 0 : index
    %34 = vector.load %arg4[%c1_46, %c0_47, %c0_48, %c0_49] : memref<3x3x128x128xbf16, #tpu.memory_space<vmem>>, vector<1x1x128x128xbf16>
    %35 = vector.shape_cast %34 : vector<1x1x128x128xbf16> to vector<128x128xbf16>
    %cst_50 = arith.constant dense<0.000000e+00> : vector<64x128xf32>
    %36 = tpu.matmul %32, %35, %cst_50 {dimension_numbers = #tpu.dot_dimension_numbers<[1], [0], [0], [1], [0, 0, 1, 1], [], []>} : vector<64x128xbf16>, vector<128x128xbf16>, vector<64x128xf32> -> vector<64x128xf32>
    %37 = arith.addf %33, %36 : vector<64x128xf32>
    %c0_51 = arith.constant 0 : index
    %c0_52 = arith.constant 0 : index
    %38 = vector.load %arg7[%c0_51, %c0_52] : memref<64x128xf32, #tpu.memory_space<vmem>>, vector<64x128xf32>
    tpu.vector_store %arg7[%c0_51, %c0_52], %37 {strides = array<i32>} : memref<64x128xf32, #tpu.memory_space<vmem>>, vector<64x128xf32>,
    %c0_53 = arith.constant 0 : index
    %c3 = arith.constant 3 : index
    %c0_54 = arith.constant 0 : index
    %c0_55 = arith.constant 0 : index
    %c0_56 = arith.constant 0 : index
    %39 = vector.load %arg3[%c0_53, %c3, %c0_54, %c0_55, %c0_56] : memref<1x4x9x9x128xbf16, #tpu.memory_space<vmem>>, vector<1x1x8x8x128xbf16>
    %40 = vector.shape_cast %39 : vector<1x1x8x8x128xbf16> to vector<8x8x128xbf16>
    %41 = vector.shape_cast %40 : vector<8x8x128xbf16> to vector<64x128xbf16>
    %c0_57 = arith.constant 0 : index
    %c0_58 = arith.constant 0 : index
    %42 = vector.load %arg7[%c0_57, %c0_58] : memref<64x128xf32, #tpu.memory_space<vmem>>, vector<64x128xf32>
    %c1_59 = arith.constant 1 : index
    %c1_60 = arith.constant 1 : index
    %c0_61 = arith.constant 0 : index
    %c0_62 = arith.constant 0 : index
    %43 = vector.load %arg4[%c1_59, %c1_60, %c0_61, %c0_62] : memref<3x3x128x128xbf16, #tpu.memory_space<vmem>>, vector<1x1x128x128xbf16>
    %44 = vector.shape_cast %43 : vector<1x1x128x128xbf16> to vector<128x128xbf16>
    %cst_63 = arith.constant dense<0.000000e+00> : vector<64x128xf32>
    %45 = tpu.matmul %41, %44, %cst_63 {dimension_numbers = #tpu.dot_dimension_numbers<[1], [0], [0], [1], [0, 0, 1, 1], [], []>} : vector<64x128xbf16>, vector<128x128xbf16>, vector<64x128xf32> -> vector<64x128xf32>
    %46 = arith.addf %42, %45 : vector<64x128xf32>
    %c0_64 = arith.constant 0 : index
    %c0_65 = arith.constant 0 : index
    %47 = vector.load %arg7[%c0_64, %c0_65] : memref<64x128xf32, #tpu.memory_space<vmem>>, vector<64x128xf32>
    tpu.vector_store %arg7[%c0_64, %c0_65], %46 {strides = array<i32>} : memref<64x128xf32, #tpu.memory_space<vmem>>, vector<64x128xf32>,
    %c0_66 = arith.constant 0 : index
    %c2_67 = arith.constant 2 : index
    %c0_68 = arith.constant 0 : index
    %c1_69 = arith.constant 1 : index
    %c0_70 = arith.constant 0 : index
    %48 = vector.load %arg3[%c0_66, %c2_67, %c0_68, %c1_69, %c0_70] : memref<1x4x9x9x128xbf16, #tpu.memory_space<vmem>>, vector<1x1x8x8x128xbf16>
    %49 = vector.shape_cast %48 : vector<1x1x8x8x128xbf16> to vector<8x8x128xbf16>
    %50 = vector.shape_cast %49 : vector<8x8x128xbf16> to vector<64x128xbf16>
    %c0_71 = arith.constant 0 : index
    %c0_72 = arith.constant 0 : index
    %51 = vector.load %arg7[%c0_71, %c0_72] : memref<64x128xf32, #tpu.memory_space<vmem>>, vector<64x128xf32>
    %c1_73 = arith.constant 1 : index
    %c2_74 = arith.constant 2 : index
    %c0_75 = arith.constant 0 : index
    %c0_76 = arith.constant 0 : index
    %52 = vector.load %arg4[%c1_73, %c2_74, %c0_75, %c0_76] : memref<3x3x128x128xbf16, #tpu.memory_space<vmem>>, vector<1x1x128x128xbf16>
    %53 = vector.shape_cast %52 : vector<1x1x128x128xbf16> to vector<128x128xbf16>
    %cst_77 = arith.constant dense<0.000000e+00> : vector<64x128xf32>
    %54 = tpu.matmul %50, %53, %cst_77 {dimension_numbers = #tpu.dot_dimension_numbers<[1], [0], [0], [1], [0, 0, 1, 1], [], []>} : vector<64x128xbf16>, vector<128x128xbf16>, vector<64x128xf32> -> vector<64x128xf32>
    %55 = arith.addf %51, %54 : vector<64x128xf32>
    %c0_78 = arith.constant 0 : index
    %c0_79 = arith.constant 0 : index
    %56 = vector.load %arg7[%c0_78, %c0_79] : memref<64x128xf32, #tpu.memory_space<vmem>>, vector<64x128xf32>
    tpu.vector_store %arg7[%c0_78, %c0_79], %55 {strides = array<i32>} : memref<64x128xf32, #tpu.memory_space<vmem>>, vector<64x128xf32>,
    %c0_80 = arith.constant 0 : index
    %c0_81 = arith.constant 0 : index
    %c1_82 = arith.constant 1 : index
    %c0_83 = arith.constant 0 : index
    %c0_84 = arith.constant 0 : index
    %57 = vector.load %arg3[%c0_80, %c0_81, %c1_82, %c0_83, %c0_84] : memref<1x4x9x9x128xbf16, #tpu.memory_space<vmem>>, vector<1x1x8x8x128xbf16>
    %58 = vector.shape_cast %57 : vector<1x1x8x8x128xbf16> to vector<8x8x128xbf16>
    %59 = vector.shape_cast %58 : vector<8x8x128xbf16> to vector<64x128xbf16>
    %c0_85 = arith.constant 0 : index
    %c0_86 = arith.constant 0 : index
    %60 = vector.load %arg7[%c0_85, %c0_86] : memref<64x128xf32, #tpu.memory_space<vmem>>, vector<64x128xf32>
    %c2_87 = arith.constant 2 : index
    %c0_88 = arith.constant 0 : index
    %c0_89 = arith.constant 0 : index
    %c0_90 = arith.constant 0 : index
    %61 = vector.load %arg4[%c2_87, %c0_88, %c0_89, %c0_90] : memref<3x3x128x128xbf16, #tpu.memory_space<vmem>>, vector<1x1x128x128xbf16>
    %62 = vector.shape_cast %61 : vector<1x1x128x128xbf16> to vector<128x128xbf16>
    %cst_91 = arith.constant dense<0.000000e+00> : vector<64x128xf32>
    %63 = tpu.matmul %59, %62, %cst_91 {dimension_numbers = #tpu.dot_dimension_numbers<[1], [0], [0], [1], [0, 0, 1, 1], [], []>} : vector<64x128xbf16>, vector<128x128xbf16>, vector<64x128xf32> -> vector<64x128xf32>
    %64 = arith.addf %60, %63 : vector<64x128xf32>
    %c0_92 = arith.constant 0 : index
    %c0_93 = arith.constant 0 : index
    %65 = vector.load %arg7[%c0_92, %c0_93] : memref<64x128xf32, #tpu.memory_space<vmem>>, vector<64x128xf32>
    tpu.vector_store %arg7[%c0_92, %c0_93], %64 {strides = array<i32>} : memref<64x128xf32, #tpu.memory_space<vmem>>, vector<64x128xf32>,
    %c0_94 = arith.constant 0 : index
    %c1_95 = arith.constant 1 : index
    %c1_96 = arith.constant 1 : index
    %c0_97 = arith.constant 0 : index
    %c0_98 = arith.constant 0 : index
    %66 = vector.load %arg3[%c0_94, %c1_95, %c1_96, %c0_97, %c0_98] : memref<1x4x9x9x128xbf16, #tpu.memory_space<vmem>>, vector<1x1x8x8x128xbf16>
    %67 = vector.shape_cast %66 : vector<1x1x8x8x128xbf16> to vector<8x8x128xbf16>
    %68 = vector.shape_cast %67 : vector<8x8x128xbf16> to vector<64x128xbf16>
    %c0_99 = arith.constant 0 : index
    %c0_100 = arith.constant 0 : index
    %69 = vector.load %arg7[%c0_99, %c0_100] : memref<64x128xf32, #tpu.memory_space<vmem>>, vector<64x128xf32>
    %c2_101 = arith.constant 2 : index
    %c1_102 = arith.constant 1 : index
    %c0_103 = arith.constant 0 : index
    %c0_104 = arith.constant 0 : index
    %70 = vector.load %arg4[%c2_101, %c1_102, %c0_103, %c0_104] : memref<3x3x128x128xbf16, #tpu.memory_space<vmem>>, vector<1x1x128x128xbf16>
    %71 = vector.shape_cast %70 : vector<1x1x128x128xbf16> to vector<128x128xbf16>
    %cst_105 = arith.constant dense<0.000000e+00> : vector<64x128xf32>
    %72 = tpu.matmul %68, %71, %cst_105 {dimension_numbers = #tpu.dot_dimension_numbers<[1], [0], [0], [1], [0, 0, 1, 1], [], []>} : vector<64x128xbf16>, vector<128x128xbf16>, vector<64x128xf32> -> vector<64x128xf32>
    %73 = arith.addf %69, %72 : vector<64x128xf32>
    %c0_106 = arith.constant 0 : index
    %c0_107 = arith.constant 0 : index
    %74 = vector.load %arg7[%c0_106, %c0_107] : memref<64x128xf32, #tpu.memory_space<vmem>>, vector<64x128xf32>
    tpu.vector_store %arg7[%c0_106, %c0_107], %73 {strides = array<i32>} : memref<64x128xf32, #tpu.memory_space<vmem>>, vector<64x128xf32>,
    %c0_108 = arith.constant 0 : index
    %c0_109 = arith.constant 0 : index
    %c1_110 = arith.constant 1 : index
    %c1_111 = arith.constant 1 : index
    %c0_112 = arith.constant 0 : index
    %75 = vector.load %arg3[%c0_108, %c0_109, %c1_110, %c1_111, %c0_112] : memref<1x4x9x9x128xbf16, #tpu.memory_space<vmem>>, vector<1x1x8x8x128xbf16>
    %76 = vector.shape_cast %75 : vector<1x1x8x8x128xbf16> to vector<8x8x128xbf16>
    %77 = vector.shape_cast %76 : vector<8x8x128xbf16> to vector<64x128xbf16>
    %c0_113 = arith.constant 0 : index
    %c0_114 = arith.constant 0 : index
    %78 = vector.load %arg7[%c0_113, %c0_114] : memref<64x128xf32, #tpu.memory_space<vmem>>, vector<64x128xf32>
    %c2_115 = arith.constant 2 : index
    %c2_116 = arith.constant 2 : index
    %c0_117 = arith.constant 0 : index
    %c0_118 = arith.constant 0 : index
    %79 = vector.load %arg4[%c2_115, %c2_116, %c0_117, %c0_118] : memref<3x3x128x128xbf16, #tpu.memory_space<vmem>>, vector<1x1x128x128xbf16>
    %80 = vector.shape_cast %79 : vector<1x1x128x128xbf16> to vector<128x128xbf16>
    %cst_119 = arith.constant dense<0.000000e+00> : vector<64x128xf32>
    %81 = tpu.matmul %77, %80, %cst_119 {dimension_numbers = #tpu.dot_dimension_numbers<[1], [0], [0], [1], [0, 0, 1, 1], [], []>} : vector<64x128xbf16>, vector<128x128xbf16>, vector<64x128xf32> -> vector<64x128xf32>
    %82 = arith.addf %78, %81 : vector<64x128xf32>
    %c0_120 = arith.constant 0 : index
    %c0_121 = arith.constant 0 : index
    %83 = vector.load %arg7[%c0_120, %c0_121] : memref<64x128xf32, #tpu.memory_space<vmem>>, vector<64x128xf32>
    tpu.vector_store %arg7[%c0_120, %c0_121], %82 {strides = array<i32>} : memref<64x128xf32, #tpu.memory_space<vmem>>, vector<64x128xf32>,
    %c0_i32_122 = arith.constant 0 : i32
    %84 = arith.cmpi eq, %arg2, %c0_i32_122 : i32
    %85 = arith.extui %84 : i1 to i32
    %c0_i32_123 = arith.constant 0 : i32
    %86 = arith.cmpi ne, %85, %c0_i32_123 : i32
    scf.if %86 {
      %c0_124 = arith.constant 0 : index
      %c0_125 = arith.constant 0 : index
      %87 = vector.load %arg7[%c0_124, %c0_125] : memref<64x128xf32, #tpu.memory_space<vmem>>, vector<64x128xf32>
      %c0_126 = arith.constant 0 : index
      %c0_127 = arith.constant 0 : index
      %88 = vector.load %arg5[%c0_126, %c0_127] : memref<1x128xf32, #tpu.memory_space<vmem>>, vector<1x128xf32>
      %89 = vector.broadcast %88 : vector<1x128xf32> to vector<64x128xf32>
      %90 = arith.addf %87, %89 : vector<64x128xf32>
      %cst_128 = arith.constant 0.000000e+00 : f32
      %91 = vector.broadcast %cst_128 : f32 to vector<64x128xf32>
      %92 = arith.maximumf %90, %91 : vector<64x128xf32>
      %93 = arith.truncf %92 : vector<64x128xf32> to vector<64x128xbf16>
      %c0_129 = arith.constant 0 : index
      %c0_130 = arith.constant 0 : index
      %c0_131 = arith.constant 0 : index
      %94 = vector.load %arg6[%c0_129, %c0_130, %c0_131] : memref<1x64x128xbf16, #tpu.memory_space<vmem>>, vector<1x64x128xbf16>
      %95 = vector.shape_cast %94 : vector<1x64x128xbf16> to vector<64x128xbf16>
      %96 = vector.shape_cast %93 : vector<64x128xbf16> to vector<1x64x128xbf16>
      tpu.vector_store %arg6[%c0_129, %c0_130, %c0_131], %96 {strides = array<i32>} : memref<1x64x128xbf16, #tpu.memory_space<vmem>>, vector<1x64x128xbf16>,
    } else {
    }
    return
  }
  func.func @transform_0(%arg0: i32, %arg1: i32, %arg2: i32) -> (i32, i32, i32, i32, i32) {
    %c0_i32 = arith.constant 0 : i32
    %c0_i32_0 = arith.constant 0 : i32
    %c0_i32_1 = arith.constant 0 : i32
    %c0_i32_2 = arith.constant 0 : i32
    return %arg0, %c0_i32, %c0_i32_0, %c0_i32_1, %arg2 : i32, i32, i32, i32, i32
  }
  func.func @transform_1(%arg0: i32, %arg1: i32, %arg2: i32) -> (i32, i32, i32, i32) {
    %c0_i32 = arith.constant 0 : i32
    %c0_i32_0 = arith.constant 0 : i32
    %c0_i32_1 = arith.constant 0 : i32
    return %c0_i32, %c0_i32_0, %arg2, %arg1 : i32, i32, i32, i32
  }
  func.func @transform_2(%arg0: i32, %arg1: i32, %arg2: i32) -> (i32, i32) {
    %c0_i32 = arith.constant 0 : i32
    %c0_i32_0 = arith.constant 0 : i32
    return %c0_i32, %arg1 : i32, i32
  }
  func.func @transform_3(%arg0: i32, %arg1: i32, %arg2: i32) -> (i32, i32, i32) {
    %c0_i32 = arith.constant 0 : i32
    %c0_i32_0 = arith.constant 0 : i32
    return %arg0, %c0_i32, %arg1 : i32, i32, i32
  }
}

module attributes {stable_mosaic.version = 11 : i64} {
  func.func @_conv_bn_act_kernel(%arg0: i32, %arg1: i32, %arg2: i32, %arg3: memref<1x4x8x8x128xbf16, #tpu.memory_space<vmem>>, %arg4: memref<1x1x128x128xbf16, #tpu.memory_space<vmem>>, %arg5: memref<1x128xf32, #tpu.memory_space<vmem>>, %arg6: memref<1x64x128xbf16, #tpu.memory_space<vmem>>, %arg7: memref<64x128xf32, #tpu.memory_space<vmem>>) attributes {dimension_semantics = [#tpu.dimension_semantics<parallel>, #tpu.dimension_semantics<parallel>, #tpu.dimension_semantics<arbitrary>], iteration_bounds = array<i64: 2, 1, 1>, scalar_prefetch = 0 : i64, scratch_operands = 1 : i64, tpu.core_type = #tpu.core_type<tc>, window_params = [{transform_indices = @transform_0, window_bounds = array<i64: 1, 4, 8, 8, 128>}, {transform_indices = @transform_1, window_bounds = array<i64: 1, 1, 128, 128>}, {transform_indices = @transform_2, window_bounds = array<i64: 1, 128>}, {transform_indices = @transform_3, window_bounds = array<i64: 1, 64, 128>}]} {
    %c0_i32 = arith.constant 0 : i32
    %0 = arith.cmpi eq, %arg2, %c0_i32 : i32
    %1 = arith.extui %0 : i1 to i32
    %c0_i32_0 = arith.constant 0 : i32
    %2 = arith.cmpi ne, %1, %c0_i32_0 : i32
    scf.if %2 {
      %cst_15 = arith.constant 0.000000e+00 : f32
      %15 = vector.broadcast %cst_15 : f32 to vector<64x128xf32>
      %c0_16 = arith.constant 0 : index
      %c0_17 = arith.constant 0 : index
      %16 = vector.load %arg7[%c0_16, %c0_17] : memref<64x128xf32, #tpu.memory_space<vmem>>, vector<64x128xf32>
      tpu.vector_store %arg7[%c0_16, %c0_17], %15 {strides = array<i32>} : memref<64x128xf32, #tpu.memory_space<vmem>>, vector<64x128xf32>,
    } else {
    }
    %c0 = arith.constant 0 : index
    %c0_1 = arith.constant 0 : index
    %c0_2 = arith.constant 0 : index
    %c0_3 = arith.constant 0 : index
    %c0_4 = arith.constant 0 : index
    %3 = vector.load %arg3[%c0, %c0_1, %c0_2, %c0_3, %c0_4] : memref<1x4x8x8x128xbf16, #tpu.memory_space<vmem>>, vector<1x1x8x8x128xbf16>
    %4 = vector.shape_cast %3 : vector<1x1x8x8x128xbf16> to vector<8x8x128xbf16>
    %5 = vector.shape_cast %4 : vector<8x8x128xbf16> to vector<64x128xbf16>
    %c0_5 = arith.constant 0 : index
    %c0_6 = arith.constant 0 : index
    %6 = vector.load %arg7[%c0_5, %c0_6] : memref<64x128xf32, #tpu.memory_space<vmem>>, vector<64x128xf32>
    %c0_7 = arith.constant 0 : index
    %c0_8 = arith.constant 0 : index
    %c0_9 = arith.constant 0 : index
    %c0_10 = arith.constant 0 : index
    %7 = vector.load %arg4[%c0_7, %c0_8, %c0_9, %c0_10] : memref<1x1x128x128xbf16, #tpu.memory_space<vmem>>, vector<1x1x128x128xbf16>
    %8 = vector.shape_cast %7 : vector<1x1x128x128xbf16> to vector<128x128xbf16>
    %cst = arith.constant dense<0.000000e+00> : vector<64x128xf32>
    %9 = tpu.matmul %5, %8, %cst {dimension_numbers = #tpu.dot_dimension_numbers<[1], [0], [0], [1], [0, 0, 1, 1], [], []>} : vector<64x128xbf16>, vector<128x128xbf16>, vector<64x128xf32> -> vector<64x128xf32>
    %10 = arith.addf %6, %9 : vector<64x128xf32>
    %c0_11 = arith.constant 0 : index
    %c0_12 = arith.constant 0 : index
    %11 = vector.load %arg7[%c0_11, %c0_12] : memref<64x128xf32, #tpu.memory_space<vmem>>, vector<64x128xf32>
    tpu.vector_store %arg7[%c0_11, %c0_12], %10 {strides = array<i32>} : memref<64x128xf32, #tpu.memory_space<vmem>>, vector<64x128xf32>,
    %c0_i32_13 = arith.constant 0 : i32
    %12 = arith.cmpi eq, %arg2, %c0_i32_13 : i32
    %13 = arith.extui %12 : i1 to i32
    %c0_i32_14 = arith.constant 0 : i32
    %14 = arith.cmpi ne, %13, %c0_i32_14 : i32
    scf.if %14 {
      %c0_15 = arith.constant 0 : index
      %c0_16 = arith.constant 0 : index
      %15 = vector.load %arg7[%c0_15, %c0_16] : memref<64x128xf32, #tpu.memory_space<vmem>>, vector<64x128xf32>
      %c0_17 = arith.constant 0 : index
      %c0_18 = arith.constant 0 : index
      %16 = vector.load %arg5[%c0_17, %c0_18] : memref<1x128xf32, #tpu.memory_space<vmem>>, vector<1x128xf32>
      %17 = vector.broadcast %16 : vector<1x128xf32> to vector<64x128xf32>
      %18 = arith.addf %15, %17 : vector<64x128xf32>
      %19 = arith.truncf %18 : vector<64x128xf32> to vector<64x128xbf16>
      %c0_19 = arith.constant 0 : index
      %c0_20 = arith.constant 0 : index
      %c0_21 = arith.constant 0 : index
      %20 = vector.load %arg6[%c0_19, %c0_20, %c0_21] : memref<1x64x128xbf16, #tpu.memory_space<vmem>>, vector<1x64x128xbf16>
      %21 = vector.shape_cast %20 : vector<1x64x128xbf16> to vector<64x128xbf16>
      %22 = vector.shape_cast %19 : vector<64x128xbf16> to vector<1x64x128xbf16>
      tpu.vector_store %arg6[%c0_19, %c0_20, %c0_21], %22 {strides = array<i32>} : memref<1x64x128xbf16, #tpu.memory_space<vmem>>, vector<1x64x128xbf16>,
    } else {
    }
    return
  }
  func.func @transform_0(%arg0: i32, %arg1: i32, %arg2: i32) -> (i32, i32, i32, i32, i32) {
    %c0_i32 = arith.constant 0 : i32
    %c0_i32_0 = arith.constant 0 : i32
    %c0_i32_1 = arith.constant 0 : i32
    %c0_i32_2 = arith.constant 0 : i32
    return %arg0, %c0_i32, %c0_i32_0, %c0_i32_1, %arg2 : i32, i32, i32, i32, i32
  }
  func.func @transform_1(%arg0: i32, %arg1: i32, %arg2: i32) -> (i32, i32, i32, i32) {
    %c0_i32 = arith.constant 0 : i32
    %c0_i32_0 = arith.constant 0 : i32
    %c0_i32_1 = arith.constant 0 : i32
    return %c0_i32, %c0_i32_0, %arg2, %arg1 : i32, i32, i32, i32
  }
  func.func @transform_2(%arg0: i32, %arg1: i32, %arg2: i32) -> (i32, i32) {
    %c0_i32 = arith.constant 0 : i32
    %c0_i32_0 = arith.constant 0 : i32
    return %c0_i32, %arg1 : i32, i32
  }
  func.func @transform_3(%arg0: i32, %arg1: i32, %arg2: i32) -> (i32, i32, i32) {
    %c0_i32 = arith.constant 0 : i32
    %c0_i32_0 = arith.constant 0 : i32
    return %arg0, %c0_i32, %arg1 : i32, i32, i32
  }
}

module attributes {stable_mosaic.version = 11 : i64} {
  func.func @_conv_bn_act_kernel(%arg0: i32, %arg1: i32, %arg2: i32, %arg3: memref<1x1x10x10x128xbf16, #tpu.memory_space<vmem>>, %arg4: memref<3x3x128x128xbf16, #tpu.memory_space<vmem>>, %arg5: memref<1x128xf32, #tpu.memory_space<vmem>>, %arg6: memref<1x64x128xbf16, #tpu.memory_space<vmem>>, %arg7: memref<1x64x128xf32, #tpu.memory_space<vmem>>, %arg8: memref<64x128xf32, #tpu.memory_space<vmem>>) attributes {dimension_semantics = [#tpu.dimension_semantics<parallel>, #tpu.dimension_semantics<parallel>, #tpu.dimension_semantics<arbitrary>], iteration_bounds = array<i64: 2, 1, 1>, scalar_prefetch = 0 : i64, scratch_operands = 1 : i64, tpu.core_type = #tpu.core_type<tc>, window_params = [{transform_indices = @transform_0, window_bounds = array<i64: 1, 1, 10, 10, 128>}, {transform_indices = @transform_1, window_bounds = array<i64: 3, 3, 128, 128>}, {transform_indices = @transform_2, window_bounds = array<i64: 1, 128>}, {transform_indices = @transform_3, window_bounds = array<i64: 1, 64, 128>}, {transform_indices = @transform_4, window_bounds = array<i64: 1, 64, 128>}]} {
    %c0_i32 = arith.constant 0 : i32
    %0 = arith.cmpi eq, %arg2, %c0_i32 : i32
    %1 = arith.extui %0 : i1 to i32
    %c0_i32_0 = arith.constant 0 : i32
    %2 = arith.cmpi ne, %1, %c0_i32_0 : i32
    scf.if %2 {
      %cst_125 = arith.constant 0.000000e+00 : f32
      %87 = vector.broadcast %cst_125 : f32 to vector<64x128xf32>
      %c0_126 = arith.constant 0 : index
      %c0_127 = arith.constant 0 : index
      %88 = vector.load %arg8[%c0_126, %c0_127] : memref<64x128xf32, #tpu.memory_space<vmem>>, vector<64x128xf32>
      tpu.vector_store %arg8[%c0_126, %c0_127], %87 {strides = array<i32>} : memref<64x128xf32, #tpu.memory_space<vmem>>, vector<64x128xf32>,
    } else {
    }
    %c0 = arith.constant 0 : index
    %c0_1 = arith.constant 0 : index
    %c0_2 = arith.constant 0 : index
    %c0_3 = arith.constant 0 : index
    %c0_4 = arith.constant 0 : index
    %3 = vector.load %arg3[%c0, %c0_1, %c0_2, %c0_3, %c0_4] : memref<1x1x10x10x128xbf16, #tpu.memory_space<vmem>>, vector<1x1x8x8x128xbf16>
    %4 = vector.shape_cast %3 : vector<1x1x8x8x128xbf16> to vector<8x8x128xbf16>
    %5 = vector.shape_cast %4 : vector<8x8x128xbf16> to vector<64x128xbf16>
    %c0_5 = arith.constant 0 : index
    %c0_6 = arith.constant 0 : index
    %6 = vector.load %arg8[%c0_5, %c0_6] : memref<64x128xf32, #tpu.memory_space<vmem>>, vector<64x128xf32>
    %c0_7 = arith.constant 0 : index
    %c0_8 = arith.constant 0 : index
    %c0_9 = arith.constant 0 : index
    %c0_10 = arith.constant 0 : index
    %7 = vector.load %arg4[%c0_7, %c0_8, %c0_9, %c0_10] : memref<3x3x128x128xbf16, #tpu.memory_space<vmem>>, vector<1x1x128x128xbf16>
    %8 = vector.shape_cast %7 : vector<1x1x128x128xbf16> to vector<128x128xbf16>
    %cst = arith.constant dense<0.000000e+00> : vector<64x128xf32>
    %9 = tpu.matmul %5, %8, %cst {dimension_numbers = #tpu.dot_dimension_numbers<[1], [0], [0], [1], [0, 0, 1, 1], [], []>} : vector<64x128xbf16>, vector<128x128xbf16>, vector<64x128xf32> -> vector<64x128xf32>
    %10 = arith.addf %6, %9 : vector<64x128xf32>
    %c0_11 = arith.constant 0 : index
    %c0_12 = arith.constant 0 : index
    %11 = vector.load %arg8[%c0_11, %c0_12] : memref<64x128xf32, #tpu.memory_space<vmem>>, vector<64x128xf32>
    tpu.vector_store %arg8[%c0_11, %c0_12], %10 {strides = array<i32>} : memref<64x128xf32, #tpu.memory_space<vmem>>, vector<64x128xf32>,
    %c0_13 = arith.constant 0 : index
    %c0_14 = arith.constant 0 : index
    %c0_15 = arith.constant 0 : index
    %c1 = arith.constant 1 : index
    %c0_16 = arith.constant 0 : index
    %12 = vector.load %arg3[%c0_13, %c0_14, %c0_15, %c1, %c0_16] : memref<1x1x10x10x128xbf16, #tpu.memory_space<vmem>>, vector<1x1x8x8x128xbf16>
    %13 = vector.shape_cast %12 : vector<1x1x8x8x128xbf16> to vector<8x8x128xbf16>
    %14 = vector.shape_cast %13 : vector<8x8x128xbf16> to vector<64x128xbf16>
    %c0_17 = arith.constant 0 : index
    %c0_18 = arith.constant 0 : index
    %15 = vector.load %arg8[%c0_17, %c0_18] : memref<64x128xf32, #tpu.memory_space<vmem>>, vector<64x128xf32>
    %c0_19 = arith.constant 0 : index
    %c1_20 = arith.constant 1 : index
    %c0_21 = arith.constant 0 : index
    %c0_22 = arith.constant 0 : index
    %16 = vector.load %arg4[%c0_19, %c1_20, %c0_21, %c0_22] : memref<3x3x128x128xbf16, #tpu.memory_space<vmem>>, vector<1x1x128x128xbf16>
    %17 = vector.shape_cast %16 : vector<1x1x128x128xbf16> to vector<128x128xbf16>
    %cst_23 = arith.constant dense<0.000000e+00> : vector<64x128xf32>
    %18 = tpu.matmul %14, %17, %cst_23 {dimension_numbers = #tpu.dot_dimension_numbers<[1], [0], [0], [1], [0, 0, 1, 1], [], []>} : vector<64x128xbf16>, vector<128x128xbf16>, vector<64x128xf32> -> vector<64x128xf32>
    %19 = arith.addf %15, %18 : vector<64x128xf32>
    %c0_24 = arith.constant 0 : index
    %c0_25 = arith.constant 0 : index
    %20 = vector.load %arg8[%c0_24, %c0_25] : memref<64x128xf32, #tpu.memory_space<vmem>>, vector<64x128xf32>
    tpu.vector_store %arg8[%c0_24, %c0_25], %19 {strides = array<i32>} : memref<64x128xf32, #tpu.memory_space<vmem>>, vector<64x128xf32>,
    %c0_26 = arith.constant 0 : index
    %c0_27 = arith.constant 0 : index
    %c0_28 = arith.constant 0 : index
    %c2 = arith.constant 2 : index
    %c0_29 = arith.constant 0 : index
    %21 = vector.load %arg3[%c0_26, %c0_27, %c0_28, %c2, %c0_29] : memref<1x1x10x10x128xbf16, #tpu.memory_space<vmem>>, vector<1x1x8x8x128xbf16>
    %22 = vector.shape_cast %21 : vector<1x1x8x8x128xbf16> to vector<8x8x128xbf16>
    %23 = vector.shape_cast %22 : vector<8x8x128xbf16> to vector<64x128xbf16>
    %c0_30 = arith.constant 0 : index
    %c0_31 = arith.constant 0 : index
    %24 = vector.load %arg8[%c0_30, %c0_31] : memref<64x128xf32, #tpu.memory_space<vmem>>, vector<64x128xf32>
    %c0_32 = arith.constant 0 : index
    %c2_33 = arith.constant 2 : index
    %c0_34 = arith.constant 0 : index
    %c0_35 = arith.constant 0 : index
    %25 = vector.load %arg4[%c0_32, %c2_33, %c0_34, %c0_35] : memref<3x3x128x128xbf16, #tpu.memory_space<vmem>>, vector<1x1x128x128xbf16>
    %26 = vector.shape_cast %25 : vector<1x1x128x128xbf16> to vector<128x128xbf16>
    %cst_36 = arith.constant dense<0.000000e+00> : vector<64x128xf32>
    %27 = tpu.matmul %23, %26, %cst_36 {dimension_numbers = #tpu.dot_dimension_numbers<[1], [0], [0], [1], [0, 0, 1, 1], [], []>} : vector<64x128xbf16>, vector<128x128xbf16>, vector<64x128xf32> -> vector<64x128xf32>
    %28 = arith.addf %24, %27 : vector<64x128xf32>
    %c0_37 = arith.constant 0 : index
    %c0_38 = arith.constant 0 : index
    %29 = vector.load %arg8[%c0_37, %c0_38] : memref<64x128xf32, #tpu.memory_space<vmem>>, vector<64x128xf32>
    tpu.vector_store %arg8[%c0_37, %c0_38], %28 {strides = array<i32>} : memref<64x128xf32, #tpu.memory_space<vmem>>, vector<64x128xf32>,
    %c0_39 = arith.constant 0 : index
    %c0_40 = arith.constant 0 : index
    %c1_41 = arith.constant 1 : index
    %c0_42 = arith.constant 0 : index
    %c0_43 = arith.constant 0 : index
    %30 = vector.load %arg3[%c0_39, %c0_40, %c1_41, %c0_42, %c0_43] : memref<1x1x10x10x128xbf16, #tpu.memory_space<vmem>>, vector<1x1x8x8x128xbf16>
    %31 = vector.shape_cast %30 : vector<1x1x8x8x128xbf16> to vector<8x8x128xbf16>
    %32 = vector.shape_cast %31 : vector<8x8x128xbf16> to vector<64x128xbf16>
    %c0_44 = arith.constant 0 : index
    %c0_45 = arith.constant 0 : index
    %33 = vector.load %arg8[%c0_44, %c0_45] : memref<64x128xf32, #tpu.memory_space<vmem>>, vector<64x128xf32>
    %c1_46 = arith.constant 1 : index
    %c0_47 = arith.constant 0 : index
    %c0_48 = arith.constant 0 : index
    %c0_49 = arith.constant 0 : index
    %34 = vector.load %arg4[%c1_46, %c0_47, %c0_48, %c0_49] : memref<3x3x128x128xbf16, #tpu.memory_space<vmem>>, vector<1x1x128x128xbf16>
    %35 = vector.shape_cast %34 : vector<1x1x128x128xbf16> to vector<128x128xbf16>
    %cst_50 = arith.constant dense<0.000000e+00> : vector<64x128xf32>
    %36 = tpu.matmul %32, %35, %cst_50 {dimension_numbers = #tpu.dot_dimension_numbers<[1], [0], [0], [1], [0, 0, 1, 1], [], []>} : vector<64x128xbf16>, vector<128x128xbf16>, vector<64x128xf32> -> vector<64x128xf32>
    %37 = arith.addf %33, %36 : vector<64x128xf32>
    %c0_51 = arith.constant 0 : index
    %c0_52 = arith.constant 0 : index
    %38 = vector.load %arg8[%c0_51, %c0_52] : memref<64x128xf32, #tpu.memory_space<vmem>>, vector<64x128xf32>
    tpu.vector_store %arg8[%c0_51, %c0_52], %37 {strides = array<i32>} : memref<64x128xf32, #tpu.memory_space<vmem>>, vector<64x128xf32>,
    %c0_53 = arith.constant 0 : index
    %c0_54 = arith.constant 0 : index
    %c1_55 = arith.constant 1 : index
    %c1_56 = arith.constant 1 : index
    %c0_57 = arith.constant 0 : index
    %39 = vector.load %arg3[%c0_53, %c0_54, %c1_55, %c1_56, %c0_57] : memref<1x1x10x10x128xbf16, #tpu.memory_space<vmem>>, vector<1x1x8x8x128xbf16>
    %40 = vector.shape_cast %39 : vector<1x1x8x8x128xbf16> to vector<8x8x128xbf16>
    %41 = vector.shape_cast %40 : vector<8x8x128xbf16> to vector<64x128xbf16>
    %c0_58 = arith.constant 0 : index
    %c0_59 = arith.constant 0 : index
    %42 = vector.load %arg8[%c0_58, %c0_59] : memref<64x128xf32, #tpu.memory_space<vmem>>, vector<64x128xf32>
    %c1_60 = arith.constant 1 : index
    %c1_61 = arith.constant 1 : index
    %c0_62 = arith.constant 0 : index
    %c0_63 = arith.constant 0 : index
    %43 = vector.load %arg4[%c1_60, %c1_61, %c0_62, %c0_63] : memref<3x3x128x128xbf16, #tpu.memory_space<vmem>>, vector<1x1x128x128xbf16>
    %44 = vector.shape_cast %43 : vector<1x1x128x128xbf16> to vector<128x128xbf16>
    %cst_64 = arith.constant dense<0.000000e+00> : vector<64x128xf32>
    %45 = tpu.matmul %41, %44, %cst_64 {dimension_numbers = #tpu.dot_dimension_numbers<[1], [0], [0], [1], [0, 0, 1, 1], [], []>} : vector<64x128xbf16>, vector<128x128xbf16>, vector<64x128xf32> -> vector<64x128xf32>
    %46 = arith.addf %42, %45 : vector<64x128xf32>
    %c0_65 = arith.constant 0 : index
    %c0_66 = arith.constant 0 : index
    %47 = vector.load %arg8[%c0_65, %c0_66] : memref<64x128xf32, #tpu.memory_space<vmem>>, vector<64x128xf32>
    tpu.vector_store %arg8[%c0_65, %c0_66], %46 {strides = array<i32>} : memref<64x128xf32, #tpu.memory_space<vmem>>, vector<64x128xf32>,
    %c0_67 = arith.constant 0 : index
    %c0_68 = arith.constant 0 : index
    %c1_69 = arith.constant 1 : index
    %c2_70 = arith.constant 2 : index
    %c0_71 = arith.constant 0 : index
    %48 = vector.load %arg3[%c0_67, %c0_68, %c1_69, %c2_70, %c0_71] : memref<1x1x10x10x128xbf16, #tpu.memory_space<vmem>>, vector<1x1x8x8x128xbf16>
    %49 = vector.shape_cast %48 : vector<1x1x8x8x128xbf16> to vector<8x8x128xbf16>
    %50 = vector.shape_cast %49 : vector<8x8x128xbf16> to vector<64x128xbf16>
    %c0_72 = arith.constant 0 : index
    %c0_73 = arith.constant 0 : index
    %51 = vector.load %arg8[%c0_72, %c0_73] : memref<64x128xf32, #tpu.memory_space<vmem>>, vector<64x128xf32>
    %c1_74 = arith.constant 1 : index
    %c2_75 = arith.constant 2 : index
    %c0_76 = arith.constant 0 : index
    %c0_77 = arith.constant 0 : index
    %52 = vector.load %arg4[%c1_74, %c2_75, %c0_76, %c0_77] : memref<3x3x128x128xbf16, #tpu.memory_space<vmem>>, vector<1x1x128x128xbf16>
    %53 = vector.shape_cast %52 : vector<1x1x128x128xbf16> to vector<128x128xbf16>
    %cst_78 = arith.constant dense<0.000000e+00> : vector<64x128xf32>
    %54 = tpu.matmul %50, %53, %cst_78 {dimension_numbers = #tpu.dot_dimension_numbers<[1], [0], [0], [1], [0, 0, 1, 1], [], []>} : vector<64x128xbf16>, vector<128x128xbf16>, vector<64x128xf32> -> vector<64x128xf32>
    %55 = arith.addf %51, %54 : vector<64x128xf32>
    %c0_79 = arith.constant 0 : index
    %c0_80 = arith.constant 0 : index
    %56 = vector.load %arg8[%c0_79, %c0_80] : memref<64x128xf32, #tpu.memory_space<vmem>>, vector<64x128xf32>
    tpu.vector_store %arg8[%c0_79, %c0_80], %55 {strides = array<i32>} : memref<64x128xf32, #tpu.memory_space<vmem>>, vector<64x128xf32>,
    %c0_81 = arith.constant 0 : index
    %c0_82 = arith.constant 0 : index
    %c2_83 = arith.constant 2 : index
    %c0_84 = arith.constant 0 : index
    %c0_85 = arith.constant 0 : index
    %57 = vector.load %arg3[%c0_81, %c0_82, %c2_83, %c0_84, %c0_85] : memref<1x1x10x10x128xbf16, #tpu.memory_space<vmem>>, vector<1x1x8x8x128xbf16>
    %58 = vector.shape_cast %57 : vector<1x1x8x8x128xbf16> to vector<8x8x128xbf16>
    %59 = vector.shape_cast %58 : vector<8x8x128xbf16> to vector<64x128xbf16>
    %c0_86 = arith.constant 0 : index
    %c0_87 = arith.constant 0 : index
    %60 = vector.load %arg8[%c0_86, %c0_87] : memref<64x128xf32, #tpu.memory_space<vmem>>, vector<64x128xf32>
    %c2_88 = arith.constant 2 : index
    %c0_89 = arith.constant 0 : index
    %c0_90 = arith.constant 0 : index
    %c0_91 = arith.constant 0 : index
    %61 = vector.load %arg4[%c2_88, %c0_89, %c0_90, %c0_91] : memref<3x3x128x128xbf16, #tpu.memory_space<vmem>>, vector<1x1x128x128xbf16>
    %62 = vector.shape_cast %61 : vector<1x1x128x128xbf16> to vector<128x128xbf16>
    %cst_92 = arith.constant dense<0.000000e+00> : vector<64x128xf32>
    %63 = tpu.matmul %59, %62, %cst_92 {dimension_numbers = #tpu.dot_dimension_numbers<[1], [0], [0], [1], [0, 0, 1, 1], [], []>} : vector<64x128xbf16>, vector<128x128xbf16>, vector<64x128xf32> -> vector<64x128xf32>
    %64 = arith.addf %60, %63 : vector<64x128xf32>
    %c0_93 = arith.constant 0 : index
    %c0_94 = arith.constant 0 : index
    %65 = vector.load %arg8[%c0_93, %c0_94] : memref<64x128xf32, #tpu.memory_space<vmem>>, vector<64x128xf32>
    tpu.vector_store %arg8[%c0_93, %c0_94], %64 {strides = array<i32>} : memref<64x128xf32, #tpu.memory_space<vmem>>, vector<64x128xf32>,
    %c0_95 = arith.constant 0 : index
    %c0_96 = arith.constant 0 : index
    %c2_97 = arith.constant 2 : index
    %c1_98 = arith.constant 1 : index
    %c0_99 = arith.constant 0 : index
    %66 = vector.load %arg3[%c0_95, %c0_96, %c2_97, %c1_98, %c0_99] : memref<1x1x10x10x128xbf16, #tpu.memory_space<vmem>>, vector<1x1x8x8x128xbf16>
    %67 = vector.shape_cast %66 : vector<1x1x8x8x128xbf16> to vector<8x8x128xbf16>
    %68 = vector.shape_cast %67 : vector<8x8x128xbf16> to vector<64x128xbf16>
    %c0_100 = arith.constant 0 : index
    %c0_101 = arith.constant 0 : index
    %69 = vector.load %arg8[%c0_100, %c0_101] : memref<64x128xf32, #tpu.memory_space<vmem>>, vector<64x128xf32>
    %c2_102 = arith.constant 2 : index
    %c1_103 = arith.constant 1 : index
    %c0_104 = arith.constant 0 : index
    %c0_105 = arith.constant 0 : index
    %70 = vector.load %arg4[%c2_102, %c1_103, %c0_104, %c0_105] : memref<3x3x128x128xbf16, #tpu.memory_space<vmem>>, vector<1x1x128x128xbf16>
    %71 = vector.shape_cast %70 : vector<1x1x128x128xbf16> to vector<128x128xbf16>
    %cst_106 = arith.constant dense<0.000000e+00> : vector<64x128xf32>
    %72 = tpu.matmul %68, %71, %cst_106 {dimension_numbers = #tpu.dot_dimension_numbers<[1], [0], [0], [1], [0, 0, 1, 1], [], []>} : vector<64x128xbf16>, vector<128x128xbf16>, vector<64x128xf32> -> vector<64x128xf32>
    %73 = arith.addf %69, %72 : vector<64x128xf32>
    %c0_107 = arith.constant 0 : index
    %c0_108 = arith.constant 0 : index
    %74 = vector.load %arg8[%c0_107, %c0_108] : memref<64x128xf32, #tpu.memory_space<vmem>>, vector<64x128xf32>
    tpu.vector_store %arg8[%c0_107, %c0_108], %73 {strides = array<i32>} : memref<64x128xf32, #tpu.memory_space<vmem>>, vector<64x128xf32>,
    %c0_109 = arith.constant 0 : index
    %c0_110 = arith.constant 0 : index
    %c2_111 = arith.constant 2 : index
    %c2_112 = arith.constant 2 : index
    %c0_113 = arith.constant 0 : index
    %75 = vector.load %arg3[%c0_109, %c0_110, %c2_111, %c2_112, %c0_113] : memref<1x1x10x10x128xbf16, #tpu.memory_space<vmem>>, vector<1x1x8x8x128xbf16>
    %76 = vector.shape_cast %75 : vector<1x1x8x8x128xbf16> to vector<8x8x128xbf16>
    %77 = vector.shape_cast %76 : vector<8x8x128xbf16> to vector<64x128xbf16>
    %c0_114 = arith.constant 0 : index
    %c0_115 = arith.constant 0 : index
    %78 = vector.load %arg8[%c0_114, %c0_115] : memref<64x128xf32, #tpu.memory_space<vmem>>, vector<64x128xf32>
    %c2_116 = arith.constant 2 : index
    %c2_117 = arith.constant 2 : index
    %c0_118 = arith.constant 0 : index
    %c0_119 = arith.constant 0 : index
    %79 = vector.load %arg4[%c2_116, %c2_117, %c0_118, %c0_119] : memref<3x3x128x128xbf16, #tpu.memory_space<vmem>>, vector<1x1x128x128xbf16>
    %80 = vector.shape_cast %79 : vector<1x1x128x128xbf16> to vector<128x128xbf16>
    %cst_120 = arith.constant dense<0.000000e+00> : vector<64x128xf32>
    %81 = tpu.matmul %77, %80, %cst_120 {dimension_numbers = #tpu.dot_dimension_numbers<[1], [0], [0], [1], [0, 0, 1, 1], [], []>} : vector<64x128xbf16>, vector<128x128xbf16>, vector<64x128xf32> -> vector<64x128xf32>
    %82 = arith.addf %78, %81 : vector<64x128xf32>
    %c0_121 = arith.constant 0 : index
    %c0_122 = arith.constant 0 : index
    %83 = vector.load %arg8[%c0_121, %c0_122] : memref<64x128xf32, #tpu.memory_space<vmem>>, vector<64x128xf32>
    tpu.vector_store %arg8[%c0_121, %c0_122], %82 {strides = array<i32>} : memref<64x128xf32, #tpu.memory_space<vmem>>, vector<64x128xf32>,
    %c0_i32_123 = arith.constant 0 : i32
    %84 = arith.cmpi eq, %arg2, %c0_i32_123 : i32
    %85 = arith.extui %84 : i1 to i32
    %c0_i32_124 = arith.constant 0 : i32
    %86 = arith.cmpi ne, %85, %c0_i32_124 : i32
    scf.if %86 {
      %c0_125 = arith.constant 0 : index
      %c0_126 = arith.constant 0 : index
      %87 = vector.load %arg8[%c0_125, %c0_126] : memref<64x128xf32, #tpu.memory_space<vmem>>, vector<64x128xf32>
      %c0_127 = arith.constant 0 : index
      %c0_128 = arith.constant 0 : index
      %88 = vector.load %arg5[%c0_127, %c0_128] : memref<1x128xf32, #tpu.memory_space<vmem>>, vector<1x128xf32>
      %89 = vector.broadcast %88 : vector<1x128xf32> to vector<64x128xf32>
      %90 = arith.addf %87, %89 : vector<64x128xf32>
      %c0_129 = arith.constant 0 : index
      %c0_130 = arith.constant 0 : index
      %c0_131 = arith.constant 0 : index
      %91 = vector.load %arg6[%c0_129, %c0_130, %c0_131] : memref<1x64x128xbf16, #tpu.memory_space<vmem>>, vector<1x64x128xbf16>
      %92 = vector.shape_cast %91 : vector<1x64x128xbf16> to vector<64x128xbf16>
      %93 = arith.extf %92 : vector<64x128xbf16> to vector<64x128xf32>
      %94 = arith.addf %90, %93 : vector<64x128xf32>
      %cst_132 = arith.constant 0.000000e+00 : f32
      %95 = vector.broadcast %cst_132 : f32 to vector<64x128xf32>
      %96 = arith.maximumf %94, %95 : vector<64x128xf32>
      %c0_133 = arith.constant 0 : index
      %c0_134 = arith.constant 0 : index
      %c0_135 = arith.constant 0 : index
      %97 = vector.load %arg7[%c0_133, %c0_134, %c0_135] : memref<1x64x128xf32, #tpu.memory_space<vmem>>, vector<1x64x128xf32>
      %98 = vector.shape_cast %97 : vector<1x64x128xf32> to vector<64x128xf32>
      %99 = vector.shape_cast %96 : vector<64x128xf32> to vector<1x64x128xf32>
      tpu.vector_store %arg7[%c0_133, %c0_134, %c0_135], %99 {strides = array<i32>} : memref<1x64x128xf32, #tpu.memory_space<vmem>>, vector<1x64x128xf32>,
    } else {
    }
    return
  }
  func.func @transform_0(%arg0: i32, %arg1: i32, %arg2: i32) -> (i32, i32, i32, i32, i32) {
    %c0_i32 = arith.constant 0 : i32
    %c0_i32_0 = arith.constant 0 : i32
    %c0_i32_1 = arith.constant 0 : i32
    %c0_i32_2 = arith.constant 0 : i32
    return %arg0, %c0_i32, %c0_i32_0, %c0_i32_1, %arg2 : i32, i32, i32, i32, i32
  }
  func.func @transform_1(%arg0: i32, %arg1: i32, %arg2: i32) -> (i32, i32, i32, i32) {
    %c0_i32 = arith.constant 0 : i32
    %c0_i32_0 = arith.constant 0 : i32
    %c0_i32_1 = arith.constant 0 : i32
    return %c0_i32, %c0_i32_0, %arg2, %arg1 : i32, i32, i32, i32
  }
  func.func @transform_2(%arg0: i32, %arg1: i32, %arg2: i32) -> (i32, i32) {
    %c0_i32 = arith.constant 0 : i32
    %c0_i32_0 = arith.constant 0 : i32
    return %c0_i32, %arg1 : i32, i32
  }
  func.func @transform_3(%arg0: i32, %arg1: i32, %arg2: i32) -> (i32, i32, i32) {
    %c0_i32 = arith.constant 0 : i32
    %c0_i32_0 = arith.constant 0 : i32
    return %arg0, %c0_i32, %arg1 : i32, i32, i32
  }
  func.func @transform_4(%arg0: i32, %arg1: i32, %arg2: i32) -> (i32, i32, i32) {
    %c0_i32 = arith.constant 0 : i32
    %c0_i32_0 = arith.constant 0 : i32
    return %arg0, %c0_i32, %arg1 : i32, i32, i32
  }
}

</mosaic_0001>

<llo_original>
// kernel: basic_block_forward.4
$region0: #{basic_block_forward.4}
  #allocation0 [shape = 'u32[]', space=smem, size = 0x4, offset = 0x4, fixed_abs, tag = 'smem constant byte address 0x4 - core index']
  #allocation1 [shape = 'u32[144,128]{1,0:T(1,128)}', space=vmem, size = 0x12000, scoped, tag = 'internal scratch']
  #allocation2 [shape = 'f32[64,128]{1,0:T(8,128)}', space=vmem, size = 0x8000, scoped, tag = 'scratch operand']
  %s0 = inlined_call_operand.vmem [shape: bf16[2,4,8,8,128], index: 0, kind: input, shape index: {}]
  %s1 = inlined_call_operand.vmem [shape: bf16[1,1,128,128], index: 1, kind: input, shape index: {}]
  %s2 = inlined_call_operand.vmem [shape: f32[1,128], index: 2, kind: input, shape index: {}]
  %s3 = inlined_call_operand.vmem [shape: bf16[2,64,128], index: 3, kind: output, shape index: {}]
  %s4 = sld [smem:[#allocation0]]
  $region53: #{basic_block_forward.4} parent=0
    _
  %s6 = ssub.s32 1, %s4
  %s7 = scalar_select 0, %s6, %s4
  loop: start=0, step=1, limit=4
  $region2: #{basic_block_forward.4} parent=0 // loop_pre_header
    _
  $region3: #{basic_block_forward.4} parent=0 // loop_header
    %s9 = sphi 0, %s13
    %p10 = scmp.ge.s32.totalorder %s9, 4
    %s16 = sphi 0, %s35
    %s17 = sphi 0, %s31
    %s18 = sphi 0, %s27
    %s19 = sphi 0, %s16
    %s20 = sphi 0, %s17
    %s21 = sphi 0, %s18
    %s22 = sphi 0, %s19
    %s23 = sphi 0, %s20
    %s24 = sphi 0, %s21
    %s40 = sphi 0, %s42
    %s43 = sphi 0, %s40
    %s44 = sphi 0, %s43
    %s60 = sphi 0, %s44
    %s68 = sphi 0, %s70
    %s71 = sphi 0, %s68
    %s72 = sphi 0, %s71
    %s88 = sphi 0, %s72
    %s94 = sphi 0, %s96
    %s97 = sphi 0, %s94
    %s98 = sphi 0, %s97
    %s114 = sphi 0, %s98
    %s122 = sphi 0, %s124
    %s125 = sphi 0, %s122
    %s126 = sphi 0, %s125
    %s142 = sphi 0, %s126
  $region4: #{basic_block_forward.4} parent=0 // loop_header_branch
    %12 = sbr.rel (%p10) target = $region8
  $region5: #{basic_block_forward.4} parent=0 // loop_body
    %s14 = ssub.s32 %s9, 1
    %s15 = ssub.s32 %s9, 2
    %s25 = sadd.s32 1, %s18
    %p26 = scmp.ge.s32.totalorder %s25, 1
    %s27 = scalar_select %p26, 0, %s25
    %s28 = sadd.s32 1, %s17
    %s29 = scalar_select %p26, %s28, %s17
    %p30 = scmp.ge.s32.totalorder %s29, 1
    %s31 = scalar_select %p30, 0, %s29
    %s32 = sadd.s32 1, %s16
    %s33 = scalar_select %p30, %s32, %s16
    %p34 = scmp.ge.s32.totalorder %s33, 2
    %s35 = scalar_select %p34, 0, %s33
    %s36 = ssub.s32 %s16, %s35
    %s37 = ssub.s32 %s18, %s27
    %s38 = sor.u32 %s36, %s37
    %p39 = scmp.eq.s32.totalorder %s38, 0
    %s41 = sadd.s32 %s40, 1
    %s42 = scalar_select %p39, %s40, %s41
    %p45 = pneg %p39
    %p46 = scmp.eq.s32.totalorder %s9, 1
    %p47 = por %p45, %p46
    %p48 = scmp.ne.s32.totalorder %s40, %s43
    %p49 = scmp.eq.s32.totalorder %s9, 0
    %p50 = por %p48, %p49
    %p51 = scmp.ne.s32.totalorder %s40, %s43
    %p52 = scmp.eq.s32.totalorder %s14, 1
    %p53 = por %p51, %p52
    %p54 = scmp.ne.s32.totalorder %s43, %s44
    %p55 = scmp.eq.s32.totalorder %s14, 0
    %p56 = por %p54, %p55
    %p57 = scmp.ne.s32.totalorder %s43, %s44
    %p58 = scmp.eq.s32.totalorder %s15, 1
    %p59 = por %p57, %p58
    %p61 = scmp.ne.s32.totalorder %s44, %s60
    %p62 = scmp.eq.s32.totalorder %s15, 0
    %p63 = por %p61, %p62
    %s64 = ssub.s32 %s18, %s27
    %s65 = ssub.s32 %s17, %s31
    %s66 = sor.u32 %s64, %s65
    %p67 = scmp.eq.s32.totalorder %s66, 0
    %s69 = sadd.s32 %s68, 1
    %s70 = scalar_select %p67, %s68, %s69
    %p73 = pneg %p67
    %p74 = scmp.eq.s32.totalorder %s9, 1
    %p75 = por %p73, %p74
    %p76 = scmp.ne.s32.totalorder %s68, %s71
    %p77 = scmp.eq.s32.totalorder %s9, 0
    %p78 = por %p76, %p77
    %p79 = scmp.ne.s32.totalorder %s68, %s71
    %p80 = scmp.eq.s32.totalorder %s14, 1
    %p81 = por %p79, %p80
    %p82 = scmp.ne.s32.totalorder %s71, %s72
    %p83 = scmp.eq.s32.totalorder %s14, 0
    %p84 = por %p82, %p83
    %p85 = scmp.ne.s32.totalorder %s71, %s72
    %p86 = scmp.eq.s32.totalorder %s15, 1
    %p87 = por %p85, %p86
    %p89 = scmp.ne.s32.totalorder %s72, %s88
    %p90 = scmp.eq.s32.totalorder %s15, 0
    %p91 = por %p89, %p90
    %s92 = ssub.s32 %s17, %s31
    %p93 = scmp.eq.s32.totalorder %s92, 0
    %s95 = sadd.s32 %s94, 1
    %s96 = scalar_select %p93, %s94, %s95
    %p99 = pneg %p93
    %p100 = scmp.eq.s32.totalorder %s9, 1
    %p101 = por %p99, %p100
    %p102 = scmp.ne.s32.totalorder %s94, %s97
    %p103 = scmp.eq.s32.totalorder %s9, 0
    %p104 = por %p102, %p103
    %p105 = scmp.ne.s32.totalorder %s94, %s97
    %p106 = scmp.eq.s32.totalorder %s14, 1
    %p107 = por %p105, %p106
    %p108 = scmp.ne.s32.totalorder %s97, %s98
    %p109 = scmp.eq.s32.totalorder %s14, 0
    %p110 = por %p108, %p109
    %p111 = scmp.ne.s32.totalorder %s97, %s98
    %p112 = scmp.eq.s32.totalorder %s15, 1
    %p113 = por %p111, %p112
    %p115 = scmp.ne.s32.totalorder %s98, %s114
    %p116 = scmp.eq.s32.totalorder %s15, 0
    %p117 = por %p115, %p116
    %s118 = ssub.s32 %s16, %s35
    %s119 = ssub.s32 %s17, %s31
    %s120 = sor.u32 %s118, %s119
    %p121 = scmp.eq.s32.totalorder %s120, 0
    %s123 = sadd.s32 %s122, 1
    %s124 = scalar_select %p121, %s122, %s123
    %p127 = pneg %p121
    %p128 = scmp.eq.s32.totalorder %s9, 1
    %p129 = por %p127, %p128
    %p130 = scmp.ne.s32.totalorder %s122, %s125
    %p131 = scmp.eq.s32.totalorder %s9, 0
    %p132 = por %p130, %p131
    %p133 = scmp.ne.s32.totalorder %s122, %s125
    %p134 = scmp.eq.s32.totalorder %s14, 1
    %p135 = por %p133, %p134
    %p136 = scmp.ne.s32.totalorder %s125, %s126
    %p137 = scmp.eq.s32.totalorder %s14, 0
    %p138 = por %p136, %p137
    %p139 = scmp.ne.s32.totalorder %s125, %s126
    %p140 = scmp.eq.s32.totalorder %s15, 1
    %p141 = por %p139, %p140
    %p143 = scmp.ne.s32.totalorder %s126, %s142
    %p144 = scmp.eq.s32.totalorder %s15, 0
    %p145 = por %p143, %p144
    %p146 = scmp.le.s32.totalorder 1, %s9
    %p147 = scmp.lt.s32.totalorder %s9, 3
    %p148 = pnand %p146, %p147
    %p149 = pneg %p148
    // Predicated region
    $region9: #{basic_block_forward.4} parent=5 // pred_check
      _
    $region10: #{basic_block_forward.4} parent=5 // pred_check_branch
      %151 = sbr.rel (%p148) target = $region12
    $region11: #{basic_block_forward.4} parent=5 // pred_region
      %s152 = ssub.s32 %s9, 1
      // Predicated region
      $region13: #{basic_block_forward.4} parent=11 // pred_check
        %p153 = pneg %p84
      $region14: #{basic_block_forward.4} parent=11 // pred_check_branch
        %155 = sbr.rel (%p153) target = $region16
      $region15: #{basic_block_forward.4} parent=11 // pred_region
        %s156 = smul.u32 16, %s21
        %p157 = scmp.lt.s32.totalorder %s156, 15
        %s158 = scalar_select %p157, %s156, 15
        %p159 = scmp.lt.s32.totalorder %s20, 0
        %s160 = scalar_select %p159, %s20, 0
        %s161 = sadd.s32 %s160, %s158
        %s162 = smul.addr %s161, 4
        %s163 = scalar_lea.vmem %s1, %s162
        %s164 = smul.u32 16, %s21
      $region16: #{basic_block_forward.4} parent=11 // pred_fallthru
        _
      // Predicated region
      $region17: #{basic_block_forward.4} parent=11 // pred_check
        %p165 = pneg %p110
      $region18: #{basic_block_forward.4} parent=11 // pred_check_branch
        %167 = sbr.rel (%p165) target = $region20
      $region19: #{basic_block_forward.4} parent=11 // pred_region
        %p168 = scmp.lt.s32.totalorder %s20, 0
        %s169 = scalar_select %p168, %s20, 0
        %s170 = scalar_lea.vmem %s2, %s169
      $region20: #{basic_block_forward.4} parent=11 // pred_fallthru
        _
    $region12: #{basic_block_forward.4} parent=5 // pred_fallthru
      _
    %p171 = scmp.lt.s32.totalorder %s9, 2
    // Predicated region
    $region21: #{basic_block_forward.4} parent=5 // pred_check
      %p172 = pneg %p171
    $region22: #{basic_block_forward.4} parent=5 // pred_check_branch
      %174 = sbr.rel (%p172) target = $region24
    $region23: #{basic_block_forward.4} parent=5 // pred_region
      // Predicated region
      $region25: #{basic_block_forward.4} parent=23 // pred_check
        %p175 = pneg %p50
      $region26: #{basic_block_forward.4} parent=23 // pred_check_branch
        %177 = sbr.rel (%p175) target = $region28
      $region27: #{basic_block_forward.4} parent=23 // pred_region
        %p178 = scmp.lt.s32.totalorder %s16, 1
        %s179 = scalar_select %p178, %s16, 1
        %p180 = scmp.lt.s32.totalorder %s18, 0
        %s181 = scalar_select %p180, %s18, 0
        %s182 = smul.addr %s179, 32
        %s183 = sadd.s32 %s181, %s182
        %s184 = smul.addr %s183, 4
        %s185 = scalar_lea.vmem %s0, %s184
      $region28: #{basic_block_forward.4} parent=23 // pred_fallthru
        _
    $region24: #{basic_block_forward.4} parent=5 // pred_fallthru
      _
    %p186 = scmp.le.s32.totalorder 1, %s9
    %p187 = scmp.lt.s32.totalorder %s9, 3
    %p188 = pnand %p186, %p187
    %p189 = pneg %p188
    // Predicated region
    $region29: #{basic_block_forward.4} parent=5 // pred_check
      _
    $region30: #{basic_block_forward.4} parent=5 // pred_check_branch
      %191 = sbr.rel (%p188) target = $region32
    $region31: #{basic_block_forward.4} parent=5 // pred_region
      %s192 = ssub.s32 %s9, 1
      %p193 = scmp.lt.s32.totalorder %s19, 1
      %s194 = scalar_select %p193, %s19, 1
      %p195 = scmp.lt.s32.totalorder %s21, 0
      %s196 = scalar_select %p195, %s21, 0
      %s197 = smul.addr %s194, 32
      %s198 = sadd.s32 %s196, %s197
      %s199 = smul.addr %s198, 4
      %s200 = scalar_lea.vmem %s0, %s199
      %p201 = pneg %p56
      %p202 = pneg %p53
      %s203 = smul.u32 16, %s21
      %p204 = scmp.lt.s32.totalorder %s203, 15
      %s205 = scalar_select %p204, %s203, 15
      %p206 = scmp.lt.s32.totalorder %s20, 0
      %s207 = scalar_select %p206, %s20, 0
      %s208 = sadd.s32 %s207, %s205
      %s209 = smul.addr %s208, 4
      %s210 = scalar_lea.vmem %s1, %s209
      %p211 = pneg %p84
      %p212 = pneg %p81
      %p213 = scmp.lt.s32.totalorder %s20, 0
      %s214 = scalar_select %p213, %s20, 0
      %s215 = scalar_lea.vmem %s2, %s214
      %p216 = pneg %p110
      %p217 = pneg %p107
      %p218 = pneg %p138
      %p219 = pneg %p135
      %p220 = scmp.lt.s32.totalorder %s19, 1
      %s221 = scalar_select %p220, %s19, 1
      %p222 = scmp.lt.s32.totalorder %s20, 0
      %s223 = scalar_select %p222, %s20, 0
      %s224 = smul.addr %s221, 8
      %s225 = sadd.s32 %s223, %s224
      %s226 = smul.addr %s225, 4
      %s227 = scalar_lea.vmem %s3, %s226
      %p228 = scmp.lt.s32.totalorder %s19, 1
      %s229 = scalar_select %p228, %s19, 1
      %p230 = scmp.lt.s32.totalorder %s21, 0
      %s231 = scalar_select %p230, %s21, 0
      %s232 = smul.addr %s229, 32
      %s233 = sadd.s32 %s231, %s232
      %s234 = smul.addr %s233, 4
      %s235 = scalar_lea.vmem %s0, %s234
      %s236 = smul.u32 16, %s21
      %p237 = scmp.lt.s32.totalorder %s236, 15
      %s238 = scalar_select %p237, %s236, 15
      %p239 = scmp.lt.s32.totalorder %s20, 0
      %s240 = scalar_select %p239, %s20, 0
      %s241 = sadd.s32 %s240, %s238
      %s242 = smul.addr %s241, 4
      %s243 = scalar_lea.vmem %s1, %s242
      %s244 = smul.u32 16, %s21
      %p245 = scmp.lt.s32.totalorder %s20, 0
      %s246 = scalar_select %p245, %s20, 0
      %s247 = scalar_lea.vmem %s2, %s246
      %p248 = scmp.lt.s32.totalorder %s19, 1
      %s249 = scalar_select %p248, %s19, 1
      %p250 = scmp.lt.s32.totalorder %s20, 0
      %s251 = scalar_select %p250, %s20, 0
      %s252 = smul.addr %s249, 8
      %s253 = sadd.s32 %s251, %s252
      %s254 = smul.addr %s253, 4
      %s255 = scalar_lea.vmem %s3, %s254
      %p257 = scmp.eq.s32.totalorder %s21, 0
      // Predicated region
      $region33: #{basic_block_forward.4} parent=31 // pred_check
        %p258 = pneg %p257
      $region34: #{basic_block_forward.4} parent=31 // pred_check_branch
        %260 = sbr.rel (%p258) target = $region36
      $region35: #{basic_block_forward.4} parent=31 // pred_region
        %261 = vst [vmem:[#allocation2] sm:$0xff] 0.0
        %262 = vst [vmem:[#allocation2 + $0x8] sm:$0xff] 0.0
        %263 = vst [vmem:[#allocation2 + $0x10] sm:$0xff] 0.0
        %264 = vst [vmem:[#allocation2 + $0x18] sm:$0xff] 0.0
        %265 = vst [vmem:[#allocation2 + $0x20] sm:$0xff] 0.0
        %266 = vst [vmem:[#allocation2 + $0x28] sm:$0xff] 0.0
        %267 = vst [vmem:[#allocation2 + $0x30] sm:$0xff] 0.0
        %268 = vst [vmem:[#allocation2 + $0x38] sm:$0xff] 0.0
      $region36: #{basic_block_forward.4} parent=31 // pred_fallthru
        _
      %v269 = vld [vmem:[%s235] sm:$0xf]
      %v270 = vld [vmem:[%s235 + $0x4] sm:$0xf]
      %v271 = vld [vmem:[%s235 + $0x8] sm:$0xf]
      %v272 = vld [vmem:[%s235 + $0xc] sm:$0xf]
      %v273 = vld [vmem:[%s235 + $0x10] sm:$0xf]
      %v274 = vld [vmem:[%s235 + $0x14] sm:$0xf]
      %v275 = vld [vmem:[%s235 + $0x18] sm:$0xf]
      %v276 = vld [vmem:[%s235 + $0x1c] sm:$0xf]
      %v277 = vld [vmem:[#allocation2] sm:$0xff]
      %v278 = vld [vmem:[#allocation2 + $0x8] sm:$0xff]
      %v279 = vld [vmem:[#allocation2 + $0x10] sm:$0xff]
      %v280 = vld [vmem:[#allocation2 + $0x18] sm:$0xff]
      %v281 = vld [vmem:[#allocation2 + $0x20] sm:$0xff]
      %v282 = vld [vmem:[#allocation2 + $0x28] sm:$0xff]
      %v283 = vld [vmem:[#allocation2 + $0x30] sm:$0xff]
      %v284 = vld [vmem:[#allocation2 + $0x38] sm:$0xff]
      %v285 = vld [vmem:[%s243] sm:$0xf]
      %v286 = vld [vmem:[%s243 + $0x4] sm:$0xf]
      %v287 = vld [vmem:[%s243 + $0x8] sm:$0xf]
      %v288 = vld [vmem:[%s243 + $0xc] sm:$0xf]
      %v289 = vld [vmem:[%s243 + $0x10] sm:$0xf]
      %v290 = vld [vmem:[%s243 + $0x14] sm:$0xf]
      %v291 = vld [vmem:[%s243 + $0x18] sm:$0xf]
      %v292 = vld [vmem:[%s243 + $0x1c] sm:$0xf]
      %v293 = vld [vmem:[%s243 + $0x20] sm:$0xf]
      %v294 = vld [vmem:[%s243 + $0x24] sm:$0xf]
      %v295 = vld [vmem:[%s243 + $0x28] sm:$0xf]
      %v296 = vld [vmem:[%s243 + $0x2c] sm:$0xf]
      %v297 = vld [vmem:[%s243 + $0x30] sm:$0xf]
      %v298 = vld [vmem:[%s243 + $0x34] sm:$0xf]
      %v299 = vld [vmem:[%s243 + $0x38] sm:$0xf]
      %v300 = vld [vmem:[%s243 + $0x3c] sm:$0xf]
      %v309 = vunpack.c.l.b16 %v269
      %v310 = vunpack.c.l.b16 %v270
      %v311 = vunpack.c.l.b16 %v271
      %v312 = vunpack.c.l.b16 %v272
      %v313 = vunpack.c.l.b16 %v273
      %v314 = vunpack.c.l.b16 %v274
      %v315 = vunpack.c.l.b16 %v275
      %v316 = vunpack.c.l.b16 %v276
      %v317 = vpack.c.b16 %v310, %v309
      %v318 = vpack.c.b16 %v312, %v311
      %v319 = vpack.c.b16 %v314, %v313
      %v320 = vpack.c.b16 %v316, %v315
      %v341 = vunpack.c.l.b16 %v285
      %v342 = vunpack.c.l.b16 %v286
      %v343 = vunpack.c.l.b16 %v287
      %v344 = vunpack.c.l.b16 %v288
      %v345 = vunpack.c.l.b16 %v289
      %v346 = vunpack.c.l.b16 %v290
      %v347 = vunpack.c.l.b16 %v291
      %v348 = vunpack.c.l.b16 %v292
      %v349 = vunpack.c.l.b16 %v293
      %v350 = vunpack.c.l.b16 %v294
      %v351 = vunpack.c.l.b16 %v295
      %v352 = vunpack.c.l.b16 %v296
      %v353 = vunpack.c.l.b16 %v297
      %v354 = vunpack.c.l.b16 %v298
      %v355 = vunpack.c.l.b16 %v299
      %v356 = vunpack.c.l.b16 %v300
      %v357 = vpack.c.b16 %v342, %v341
      %v358 = vpack.c.b16 %v344, %v343
      %v359 = vpack.c.b16 %v346, %v345
      %v360 = vpack.c.b16 %v348, %v347
      %v361 = vpack.c.b16 %v350, %v349
      %v362 = vpack.c.b16 %v352, %v351
      %v363 = vpack.c.b16 %v354, %v353
      %v364 = vpack.c.b16 %v356, %v355
      %373 = vmatprep.subr.bf16.mxu0 0
      %374 = vmatpush1.bf16.msra.mxu0 %v364
      %375 = vmatprep.subr.bf16.mxu0 0
      %376 = vmatpush1.bf16.msra.mxu0 %v363
      %377 = vmatprep.subr.bf16.mxu0 0
      %378 = vmatpush1.bf16.msra.mxu0 %v362
      %379 = vmatprep.subr.bf16.mxu0 0
      %380 = vmatpush1.bf16.msra.mxu0 %v361
      %381 = vmatprep.subr.bf16.mxu0 0
      %382 = vmatpush1.bf16.msra.mxu0 %v360
      %383 = vmatprep.subr.bf16.mxu0 0
      %384 = vmatpush1.bf16.msra.mxu0 %v359
      %385 = vmatprep.subr.bf16.mxu0 0
      %386 = vmatpush1.bf16.msra.mxu0 %v358
      %387 = vmatprep.subr.bf16.mxu0 0
      %388 = vmatpush1.bf16.msra.mxu0 %v357
      %389 = vmatprep.subr.bf16.mxu0 0
      %390 = vmatpush2.bf16.msra.mxu0 0
      %391 = vmatprep.subr.bf16.mxu0 0
      %392 = vmatpush2.bf16.msra.mxu0 0
      %393 = vmatprep.subr.bf16.mxu0 0
      %394 = vmatpush2.bf16.msra.mxu0 0
      %395 = vmatprep.subr.bf16.mxu0 0
      %396 = vmatpush2.bf16.msra.mxu0 0
      %397 = vmatprep.subr.bf16.mxu0 0
      %398 = vmatpush2.bf16.msra.mxu0 0
      %399 = vmatprep.subr.bf16.mxu0 0
      %400 = vmatpush2.bf16.msra.mxu0 0
      %401 = vmatprep.subr.bf16.mxu0 0
      %402 = vmatpush2.bf16.msra.mxu0 0
      %403 = vmatprep.subr.bf16.mxu0 0
      %404 = vmatpush2.bf16.msra.mxu0 0
      %405 = vmatprep.mubr.bf16.mxu0 0
      %406 = vmatmul.mubr.bf16.gmra.mxu0 %v317
      %v407 = vpop.f32.mrf.mxu0
      %v408 = vadd.f32 0.0, %v407
      %v409 = vpop.f32.mrf.mxu0
      %v410 = vpop.f32.mrf.mxu0
      %v411 = vadd.f32 0.0, %v410
      %v412 = vpop.f32.mrf.mxu0
      %413 = vmatprep.mubr.bf16.mxu0 0
      %414 = vmatmul.mubr.bf16.gmra.mxu0 %v318
      %v415 = vpop.f32.mrf.mxu0
      %v416 = vadd.f32 0.0, %v415
      %v417 = vpop.f32.mrf.mxu0
      %v418 = vpop.f32.mrf.mxu0
      %v419 = vadd.f32 0.0, %v418
      %v420 = vpop.f32.mrf.mxu0
      %421 = vmatprep.mubr.bf16.mxu0 0
      %422 = vmatmul.mubr.bf16.gmra.mxu0 %v319
      %v423 = vpop.f32.mrf.mxu0
      %v424 = vadd.f32 0.0, %v423
      %v425 = vpop.f32.mrf.mxu0
      %v426 = vpop.f32.mrf.mxu0
      %v427 = vadd.f32 0.0, %v426
      %v428 = vpop.f32.mrf.mxu0
      %429 = vmatprep.mubr.bf16.mxu0 0
      %430 = vmatmul.mubr.bf16.gmra.mxu0 %v320
      %v431 = vpop.f32.mrf.mxu0
      %v432 = vadd.f32 0.0, %v431
      %v433 = vpop.f32.mrf.mxu0
      %v434 = vpop.f32.mrf.mxu0
      %v435 = vadd.f32 0.0, %v434
      %v436 = vpop.f32.mrf.mxu0
      %437 = vdwg.mxu0
      %v438 = vadd.f32 %v277, %v408
      %v439 = vadd.f32 %v278, %v411
      %v440 = vadd.f32 %v279, %v416
      %v441 = vadd.f32 %v280, %v419
      %v442 = vadd.f32 %v281, %v424
      %v443 = vadd.f32 %v282, %v427
      %v444 = vadd.f32 %v283, %v432
      %v445 = vadd.f32 %v284, %v435
      %446 = vst [vmem:[#allocation2] sm:$0xff] %v438
      %447 = vst [vmem:[#allocation2 + $0x8] sm:$0xff] %v439
      %448 = vst [vmem:[#allocation2 + $0x10] sm:$0xff] %v440
      %449 = vst [vmem:[#allocation2 + $0x18] sm:$0xff] %v441
      %450 = vst [vmem:[#allocation2 + $0x20] sm:$0xff] %v442
      %451 = vst [vmem:[#allocation2 + $0x28] sm:$0xff] %v443
      %452 = vst [vmem:[#allocation2 + $0x30] sm:$0xff] %v444
      %453 = vst [vmem:[#allocation2 + $0x38] sm:$0xff] %v445
      // Predicated region
      $region37: #{basic_block_forward.4} parent=31 // pred_check
        %p454 = pneg %p257
      $region38: #{basic_block_forward.4} parent=31 // pred_check_branch
        %456 = sbr.rel (%p454) target = $region40
      $region39: #{basic_block_forward.4} parent=31 // pred_region
        %v457 = vld [vmem:[#allocation2] sm:$0xff]
        %v458 = vld [vmem:[#allocation2 + $0x8] sm:$0xff]
        %v459 = vld [vmem:[#allocation2 + $0x10] sm:$0xff]
        %v460 = vld [vmem:[#allocation2 + $0x18] sm:$0xff]
        %v461 = vld [vmem:[#allocation2 + $0x20] sm:$0xff]
        %v462 = vld [vmem:[#allocation2 + $0x28] sm:$0xff]
        %v463 = vld [vmem:[#allocation2 + $0x30] sm:$0xff]
        %v464 = vld [vmem:[#allocation2 + $0x38] sm:$0xff]
        %v465 = vld [vmem:[%s247] sm:$0x1]
        %v467 = vlaneseq
        %v468 = vshrl.u32 %v467, 7
        %v469 = vsub.s32 0, %v468
        %v470 = vrot.slane %v465, %v469
        %v472 = vadd.f32 %v457, %v470
        %v473 = vadd.f32 %v458, %v470
        %v474 = vadd.f32 %v459, %v470
        %v475 = vadd.f32 %v460, %v470
        %v476 = vadd.f32 %v461, %v470
        %v477 = vadd.f32 %v462, %v470
        %v478 = vadd.f32 %v463, %v470
        %v479 = vadd.f32 %v464, %v470
        %v480 = vpack.c.bf16 %v473, %v472
        %v481 = vpack.c.bf16 %v475, %v474
        %v482 = vpack.c.bf16 %v477, %v476
        %v483 = vpack.c.bf16 %v479, %v478
        %v488 = vunpack.c.l.b16 %v480
        %v489 = vunpack.c.h.b16 %v480
        %v490 = vunpack.c.l.b16 %v481
        %v491 = vunpack.c.h.b16 %v481
        %v492 = vunpack.c.l.b16 %v482
        %v493 = vunpack.c.h.b16 %v482
        %v494 = vunpack.c.l.b16 %v483
        %v495 = vunpack.c.h.b16 %v483
        %v496 = vpack.c.b16 %v488, %v488
        %v497 = vpack.c.b16 %v489, %v489
        %v498 = vpack.c.b16 %v490, %v490
        %v499 = vpack.c.b16 %v491, %v491
        %v500 = vpack.c.b16 %v492, %v492
        %v501 = vpack.c.b16 %v493, %v493
        %v502 = vpack.c.b16 %v494, %v494
        %v503 = vpack.c.b16 %v495, %v495
        %512 = vst [vmem:[%s255] sm:$0xf] %v496
        %513 = vst [vmem:[%s255 + $0x4] sm:$0xf] %v497
        %514 = vst [vmem:[%s255 + $0x8] sm:$0xf] %v498
        %515 = vst [vmem:[%s255 + $0xc] sm:$0xf] %v499
        %516 = vst [vmem:[%s255 + $0x10] sm:$0xf] %v500
        %517 = vst [vmem:[%s255 + $0x14] sm:$0xf] %v501
        %518 = vst [vmem:[%s255 + $0x18] sm:$0xf] %v502
        %519 = vst [vmem:[%s255 + $0x1c] sm:$0xf] %v503
      $region40: #{basic_block_forward.4} parent=31 // pred_fallthru
        _
      %p520 = scmp.lt.s32.totalorder %s19, 1
      %s521 = scalar_select %p520, %s19, 1
      %p522 = scmp.lt.s32.totalorder %s20, 0
      %s523 = scalar_select %p522, %s20, 0
      %s524 = smul.addr %s521, 8
      %s525 = sadd.s32 %s523, %s524
      %s526 = smul.addr %s525, 4
      %s527 = scalar_lea.vmem %s3, %s526
      // Predicated region
      $region41: #{basic_block_forward.4} parent=31 // pred_check
        %p528 = pneg %p135
      $region42: #{basic_block_forward.4} parent=31 // pred_check_branch
        %530 = sbr.rel (%p528) target = $region44
      $region43: #{basic_block_forward.4} parent=31 // pred_region
        _
      $region44: #{basic_block_forward.4} parent=31 // pred_fallthru
        _
    $region32: #{basic_block_forward.4} parent=5 // pred_fallthru
      _
    %p531 = scmp.le.s32.totalorder 2, %s9
    // Predicated region
    $region45: #{basic_block_forward.4} parent=5 // pred_check
      %p532 = pneg %p531
    $region46: #{basic_block_forward.4} parent=5 // pred_check_branch
      %534 = sbr.rel (%p532) target = $region48
    $region47: #{basic_block_forward.4} parent=5 // pred_region
      %s535 = ssub.s32 %s9, 2
      // Predicated region
      $region49: #{basic_block_forward.4} parent=47 // pred_check
        %p536 = pneg %p141
      $region50: #{basic_block_forward.4} parent=47 // pred_check_branch
        %538 = sbr.rel (%p536) target = $region52
      $region51: #{basic_block_forward.4} parent=47 // pred_region
        %p539 = scmp.lt.s32.totalorder %s22, 1
        %s540 = scalar_select %p539, %s22, 1
        %p541 = scmp.lt.s32.totalorder %s23, 0
        %s542 = scalar_select %p541, %s23, 0
        %s543 = smul.addr %s540, 8
        %s544 = sadd.s32 %s542, %s543
        %s545 = smul.addr %s544, 4
        %s546 = scalar_lea.vmem %s3, %s545
      $region52: #{basic_block_forward.4} parent=47 // pred_fallthru
        _
    $region48: #{basic_block_forward.4} parent=5 // pred_fallthru
      _
  $region6: #{basic_block_forward.4} parent=0 // loop_footer
    %s13 = sadd.s32 1, %s9
  $region7: #{basic_block_forward.4} parent=0 // loop_footer_branch
    %8 = sbr.rel target = $region3
  $region8: #{basic_block_forward.4} parent=0 // loop_exit
    _

// kernel: basic_block_forward.3
$region0: #{basic_block_forward.3}
  #allocation0 [shape = 'u32[]', space=smem, size = 0x4, offset = 0x4, fixed_abs, tag = 'smem constant byte address 0x4 - core index']
  #allocation1 [shape = 'u32[144,128]{1,0:T(1,128)}', space=vmem, size = 0x12000, scoped, tag = 'internal scratch']
  #allocation2 [shape = 'f32[64,128]{1,0:T(8,128)}', space=vmem, size = 0x8000, scoped, tag = 'scratch operand']
  %s0 = inlined_call_operand.vmem [shape: bf16[2,4,9,9,128], index: 0, kind: input, shape index: {}]
  %s1 = inlined_call_operand.vmem [shape: bf16[3,3,128,128], index: 1, kind: input, shape index: {}]
  %s2 = inlined_call_operand.vmem [shape: f32[1,128], index: 2, kind: input, shape index: {}]
  %s3 = inlined_call_operand.vmem [shape: bf16[2,64,128], index: 3, kind: output, shape index: {}]
  %s4 = sld [smem:[#allocation0]]
  $region53: #{basic_block_forward.3} parent=0
    _
  %s6 = ssub.s32 1, %s4
  %s7 = scalar_select 0, %s6, %s4
  loop: start=0, step=1, limit=4
  $region2: #{basic_block_forward.3} parent=0 // loop_pre_header
    _
  $region3: #{basic_block_forward.3} parent=0 // loop_header
    %s9 = sphi 0, %s13
    %p10 = scmp.ge.s32.totalorder %s9, 4
    %s16 = sphi 0, %s35
    %s17 = sphi 0, %s31
    %s18 = sphi 0, %s27
    %s19 = sphi 0, %s16
    %s20 = sphi 0, %s17
    %s21 = sphi 0, %s18
    %s22 = sphi 0, %s19
    %s23 = sphi 0, %s20
    %s24 = sphi 0, %s21
    %s40 = sphi 0, %s42
    %s43 = sphi 0, %s40
    %s44 = sphi 0, %s43
    %s60 = sphi 0, %s44
    %s68 = sphi 0, %s70
    %s71 = sphi 0, %s68
    %s72 = sphi 0, %s71
    %s88 = sphi 0, %s72
    %s94 = sphi 0, %s96
    %s97 = sphi 0, %s94
    %s98 = sphi 0, %s97
    %s114 = sphi 0, %s98
    %s122 = sphi 0, %s124
    %s125 = sphi 0, %s122
    %s126 = sphi 0, %s125
    %s142 = sphi 0, %s126
  $region4: #{basic_block_forward.3} parent=0 // loop_header_branch
    %12 = sbr.rel (%p10) target = $region8
  $region5: #{basic_block_forward.3} parent=0 // loop_body
    %s14 = ssub.s32 %s9, 1
    %s15 = ssub.s32 %s9, 2
    %s25 = sadd.s32 1, %s18
    %p26 = scmp.ge.s32.totalorder %s25, 1
    %s27 = scalar_select %p26, 0, %s25
    %s28 = sadd.s32 1, %s17
    %s29 = scalar_select %p26, %s28, %s17
    %p30 = scmp.ge.s32.totalorder %s29, 1
    %s31 = scalar_select %p30, 0, %s29
    %s32 = sadd.s32 1, %s16
    %s33 = scalar_select %p30, %s32, %s16
    %p34 = scmp.ge.s32.totalorder %s33, 2
    %s35 = scalar_select %p34, 0, %s33
    %s36 = ssub.s32 %s16, %s35
    %s37 = ssub.s32 %s18, %s27
    %s38 = sor.u32 %s36, %s37
    %p39 = scmp.eq.s32.totalorder %s38, 0
    %s41 = sadd.s32 %s40, 1
    %s42 = scalar_select %p39, %s40, %s41
    %p45 = pneg %p39
    %p46 = scmp.eq.s32.totalorder %s9, 1
    %p47 = por %p45, %p46
    %p48 = scmp.ne.s32.totalorder %s40, %s43
    %p49 = scmp.eq.s32.totalorder %s9, 0
    %p50 = por %p48, %p49
    %p51 = scmp.ne.s32.totalorder %s40, %s43
    %p52 = scmp.eq.s32.totalorder %s14, 1
    %p53 = por %p51, %p52
    %p54 = scmp.ne.s32.totalorder %s43, %s44
    %p55 = scmp.eq.s32.totalorder %s14, 0
    %p56 = por %p54, %p55
    %p57 = scmp.ne.s32.totalorder %s43, %s44
    %p58 = scmp.eq.s32.totalorder %s15, 1
    %p59 = por %p57, %p58
    %p61 = scmp.ne.s32.totalorder %s44, %s60
    %p62 = scmp.eq.s32.totalorder %s15, 0
    %p63 = por %p61, %p62
    %s64 = ssub.s32 %s18, %s27
    %s65 = ssub.s32 %s17, %s31
    %s66 = sor.u32 %s64, %s65
    %p67 = scmp.eq.s32.totalorder %s66, 0
    %s69 = sadd.s32 %s68, 1
    %s70 = scalar_select %p67, %s68, %s69
    %p73 = pneg %p67
    %p74 = scmp.eq.s32.totalorder %s9, 1
    %p75 = por %p73, %p74
    %p76 = scmp.ne.s32.totalorder %s68, %s71
    %p77 = scmp.eq.s32.totalorder %s9, 0
    %p78 = por %p76, %p77
    %p79 = scmp.ne.s32.totalorder %s68, %s71
    %p80 = scmp.eq.s32.totalorder %s14, 1
    %p81 = por %p79, %p80
    %p82 = scmp.ne.s32.totalorder %s71, %s72
    %p83 = scmp.eq.s32.totalorder %s14, 0
    %p84 = por %p82, %p83
    %p85 = scmp.ne.s32.totalorder %s71, %s72
    %p86 = scmp.eq.s32.totalorder %s15, 1
    %p87 = por %p85, %p86
    %p89 = scmp.ne.s32.totalorder %s72, %s88
    %p90 = scmp.eq.s32.totalorder %s15, 0
    %p91 = por %p89, %p90
    %s92 = ssub.s32 %s17, %s31
    %p93 = scmp.eq.s32.totalorder %s92, 0
    %s95 = sadd.s32 %s94, 1
    %s96 = scalar_select %p93, %s94, %s95
    %p99 = pneg %p93
    %p100 = scmp.eq.s32.totalorder %s9, 1
    %p101 = por %p99, %p100
    %p102 = scmp.ne.s32.totalorder %s94, %s97
    %p103 = scmp.eq.s32.totalorder %s9, 0
    %p104 = por %p102, %p103
    %p105 = scmp.ne.s32.totalorder %s94, %s97
    %p106 = scmp.eq.s32.totalorder %s14, 1
    %p107 = por %p105, %p106
    %p108 = scmp.ne.s32.totalorder %s97, %s98
    %p109 = scmp.eq.s32.totalorder %s14, 0
    %p110 = por %p108, %p109
    %p111 = scmp.ne.s32.totalorder %s97, %s98
    %p112 = scmp.eq.s32.totalorder %s15, 1
    %p113 = por %p111, %p112
    %p115 = scmp.ne.s32.totalorder %s98, %s114
    %p116 = scmp.eq.s32.totalorder %s15, 0
    %p117 = por %p115, %p116
    %s118 = ssub.s32 %s16, %s35
    %s119 = ssub.s32 %s17, %s31
    %s120 = sor.u32 %s118, %s119
    %p121 = scmp.eq.s32.totalorder %s120, 0
    %s123 = sadd.s32 %s122, 1
    %s124 = scalar_select %p121, %s122, %s123
    %p127 = pneg %p121
    %p128 = scmp.eq.s32.totalorder %s9, 1
    %p129 = por %p127, %p128
    %p130 = scmp.ne.s32.totalorder %s122, %s125
    %p131 = scmp.eq.s32.totalorder %s9, 0
    %p132 = por %p130, %p131
    %p133 = scmp.ne.s32.totalorder %s122, %s125
    %p134 = scmp.eq.s32.totalorder %s14, 1
    %p135 = por %p133, %p134
    %p136 = scmp.ne.s32.totalorder %s125, %s126
    %p137 = scmp.eq.s32.totalorder %s14, 0
    %p138 = por %p136, %p137
    %p139 = scmp.ne.s32.totalorder %s125, %s126
    %p140 = scmp.eq.s32.totalorder %s15, 1
    %p141 = por %p139, %p140
    %p143 = scmp.ne.s32.totalorder %s126, %s142
    %p144 = scmp.eq.s32.totalorder %s15, 0
    %p145 = por %p143, %p144
    %p146 = scmp.le.s32.totalorder 1, %s9
    %p147 = scmp.lt.s32.totalorder %s9, 3
    %p148 = pnand %p146, %p147
    %p149 = pneg %p148
    // Predicated region
    $region9: #{basic_block_forward.3} parent=5 // pred_check
      _
    $region10: #{basic_block_forward.3} parent=5 // pred_check_branch
      %151 = sbr.rel (%p148) target = $region12
    $region11: #{basic_block_forward.3} parent=5 // pred_region
      %s152 = ssub.s32 %s9, 1
      // Predicated region
      $region13: #{basic_block_forward.3} parent=11 // pred_check
        %p153 = pneg %p84
      $region14: #{basic_block_forward.3} parent=11 // pred_check_branch
        %155 = sbr.rel (%p153) target = $region16
      $region15: #{basic_block_forward.3} parent=11 // pred_region
        %s156 = smul.u32 16, %s21
        %p157 = scmp.lt.s32.totalorder %s156, 15
        %s158 = scalar_select %p157, %s156, 15
        %p159 = scmp.lt.s32.totalorder %s20, 0
        %s160 = scalar_select %p159, %s20, 0
        %s161 = sadd.s32 %s160, %s158
        %s162 = smul.addr %s161, 4
        %s163 = scalar_lea.vmem %s1, %s162
        %s164 = smul.u32 16, %s21
      $region16: #{basic_block_forward.3} parent=11 // pred_fallthru
        _
      // Predicated region
      $region17: #{basic_block_forward.3} parent=11 // pred_check
        %p165 = pneg %p110
      $region18: #{basic_block_forward.3} parent=11 // pred_check_branch
        %167 = sbr.rel (%p165) target = $region20
      $region19: #{basic_block_forward.3} parent=11 // pred_region
        %p168 = scmp.lt.s32.totalorder %s20, 0
        %s169 = scalar_select %p168, %s20, 0
        %s170 = scalar_lea.vmem %s2, %s169
      $region20: #{basic_block_forward.3} parent=11 // pred_fallthru
        _
    $region12: #{basic_block_forward.3} parent=5 // pred_fallthru
      _
    %p171 = scmp.lt.s32.totalorder %s9, 2
    // Predicated region
    $region21: #{basic_block_forward.3} parent=5 // pred_check
      %p172 = pneg %p171
    $region22: #{basic_block_forward.3} parent=5 // pred_check_branch
      %174 = sbr.rel (%p172) target = $region24
    $region23: #{basic_block_forward.3} parent=5 // pred_region
      // Predicated region
      $region25: #{basic_block_forward.3} parent=23 // pred_check
        %p175 = pneg %p50
      $region26: #{basic_block_forward.3} parent=23 // pred_check_branch
        %177 = sbr.rel (%p175) target = $region28
      $region27: #{basic_block_forward.3} parent=23 // pred_region
        %p178 = scmp.lt.s32.totalorder %s16, 1
        %s179 = scalar_select %p178, %s16, 1
        %p180 = scmp.lt.s32.totalorder %s18, 0
        %s181 = scalar_select %p180, %s18, 0
        %s182 = smul.addr %s179, 72
        %s183 = sadd.s32 %s181, %s182
        %s184 = smul.addr %s183, 4
        %s185 = scalar_lea.vmem %s0, %s184
      $region28: #{basic_block_forward.3} parent=23 // pred_fallthru
        _
    $region24: #{basic_block_forward.3} parent=5 // pred_fallthru
      _
    %p186 = scmp.le.s32.totalorder 1, %s9
    %p187 = scmp.lt.s32.totalorder %s9, 3
    %p188 = pnand %p186, %p187
    %p189 = pneg %p188
    // Predicated region
    $region29: #{basic_block_forward.3} parent=5 // pred_check
      _
    $region30: #{basic_block_forward.3} parent=5 // pred_check_branch
      %191 = sbr.rel (%p188) target = $region32
    $region31: #{basic_block_forward.3} parent=5 // pred_region
      %s192 = ssub.s32 %s9, 1
      %p193 = scmp.lt.s32.totalorder %s19, 1
      %s194 = scalar_select %p193, %s19, 1
      %p195 = scmp.lt.s32.totalorder %s21, 0
      %s196 = scalar_select %p195, %s21, 0
      %s197 = smul.addr %s194, 72
      %s198 = sadd.s32 %s196, %s197
      %s199 = smul.addr %s198, 4
      %s200 = scalar_lea.vmem %s0, %s199
      %p201 = pneg %p56
      %p202 = pneg %p53
      %s203 = smul.u32 16, %s21
      %p204 = scmp.lt.s32.totalorder %s203, 15
      %s205 = scalar_select %p204, %s203, 15
      %p206 = scmp.lt.s32.totalorder %s20, 0
      %s207 = scalar_select %p206, %s20, 0
      %s208 = sadd.s32 %s207, %s205
      %s209 = smul.addr %s208, 4
      %s210 = scalar_lea.vmem %s1, %s209
      %p211 = pneg %p84
      %p212 = pneg %p81
      %p213 = scmp.lt.s32.totalorder %s20, 0
      %s214 = scalar_select %p213, %s20, 0
      %s215 = scalar_lea.vmem %s2, %s214
      %p216 = pneg %p110
      %p217 = pneg %p107
      %p218 = pneg %p138
      %p219 = pneg %p135
      %p220 = scmp.lt.s32.totalorder %s19, 1
      %s221 = scalar_select %p220, %s19, 1
      %p222 = scmp.lt.s32.totalorder %s20, 0
      %s223 = scalar_select %p222, %s20, 0
      %s224 = smul.addr %s221, 8
      %s225 = sadd.s32 %s223, %s224
      %s226 = smul.addr %s225, 4
      %s227 = scalar_lea.vmem %s3, %s226
      %p228 = scmp.lt.s32.totalorder %s19, 1
      %s229 = scalar_select %p228, %s19, 1
      %p230 = scmp.lt.s32.totalorder %s21, 0
      %s231 = scalar_select %p230, %s21, 0
      %s232 = smul.addr %s229, 72
      %s233 = sadd.s32 %s231, %s232
      %s234 = smul.addr %s233, 4
      %s235 = scalar_lea.vmem %s0, %s234
      %s236 = smul.u32 16, %s21
      %p237 = scmp.lt.s32.totalorder %s236, 15
      %s238 = scalar_select %p237, %s236, 15
      %p239 = scmp.lt.s32.totalorder %s20, 0
      %s240 = scalar_select %p239, %s20, 0
      %s241 = sadd.s32 %s240, %s238
      %s242 = smul.addr %s241, 4
      %s243 = scalar_lea.vmem %s1, %s242
      %s244 = smul.u32 16, %s21
      %p245 = scmp.lt.s32.totalorder %s20, 0
      %s246 = scalar_select %p245, %s20, 0
      %s247 = scalar_lea.vmem %s2, %s246
      %p248 = scmp.lt.s32.totalorder %s19, 1
      %s249 = scalar_select %p248, %s19, 1
      %p250 = scmp.lt.s32.totalorder %s20, 0
      %s251 = scalar_select %p250, %s20, 0
      %s252 = smul.addr %s249, 8
      %s253 = sadd.s32 %s251, %s252
      %s254 = smul.addr %s253, 4
      %s255 = scalar_lea.vmem %s3, %s254
      %p257 = scmp.eq.s32.totalorder %s21, 0
      // Predicated region
      $region33: #{basic_block_forward.3} parent=31 // pred_check
        %p258 = pneg %p257
      $region34: #{basic_block_forward.3} parent=31 // pred_check_branch
        %260 = sbr.rel (%p258) target = $region36
      $region35: #{basic_block_forward.3} parent=31 // pred_region
        %261 = vst [vmem:[#allocation2] sm:$0xff] 0.0
        %262 = vst [vmem:[#allocation2 + $0x8] sm:$0xff] 0.0
        %263 = vst [vmem:[#allocation2 + $0x10] sm:$0xff] 0.0
        %264 = vst [vmem:[#allocation2 + $0x18] sm:$0xff] 0.0
        %265 = vst [vmem:[#allocation2 + $0x20] sm:$0xff] 0.0
        %266 = vst [vmem:[#allocation2 + $0x28] sm:$0xff] 0.0
        %267 = vst [vmem:[#allocation2 + $0x30] sm:$0xff] 0.0
        %268 = vst [vmem:[#allocation2 + $0x38] sm:$0xff] 0.0
      $region36: #{basic_block_forward.3} parent=31 // pred_fallthru
        _
      %v269 = vld [vmem:[%s235] sm:$0xf]
      %v270 = vld [vmem:[%s235 + $0x8] sm:$0xf]
      %v271 = vld [vmem:[%s235 + $0x10] sm:$0xf]
      %v272 = vld [vmem:[%s235 + $0x18] sm:$0xf]
      %v273 = vld [vmem:[%s235 + $0x20] sm:$0xf]
      %v274 = vld [vmem:[%s235 + $0x28] sm:$0xf]
      %v275 = vld [vmem:[%s235 + $0x30] sm:$0xf]
      %v276 = vld [vmem:[%s235 + $0x38] sm:$0xf]
      %v277 = vld [vmem:[#allocation2] sm:$0xff]
      %v278 = vld [vmem:[#allocation2 + $0x8] sm:$0xff]
      %v279 = vld [vmem:[#allocation2 + $0x10] sm:$0xff]
      %v280 = vld [vmem:[#allocation2 + $0x18] sm:$0xff]
      %v281 = vld [vmem:[#allocation2 + $0x20] sm:$0xff]
      %v282 = vld [vmem:[#allocation2 + $0x28] sm:$0xff]
      %v283 = vld [vmem:[#allocation2 + $0x30] sm:$0xff]
      %v284 = vld [vmem:[#allocation2 + $0x38] sm:$0xff]
      %v285 = vld [vmem:[%s243] sm:$0xf]
      %v286 = vld [vmem:[%s243 + $0x4] sm:$0xf]
      %v287 = vld [vmem:[%s243 + $0x8] sm:$0xf]
      %v288 = vld [vmem:[%s243 + $0xc] sm:$0xf]
      %v289 = vld [vmem:[%s243 + $0x10] sm:$0xf]
      %v290 = vld [vmem:[%s243 + $0x14] sm:$0xf]
      %v291 = vld [vmem:[%s243 + $0x18] sm:$0xf]
      %v292 = vld [vmem:[%s243 + $0x1c] sm:$0xf]
      %v293 = vld [vmem:[%s243 + $0x20] sm:$0xf]
      %v294 = vld [vmem:[%s243 + $0x24] sm:$0xf]
      %v295 = vld [vmem:[%s243 + $0x28] sm:$0xf]
      %v296 = vld [vmem:[%s243 + $0x2c] sm:$0xf]
      %v297 = vld [vmem:[%s243 + $0x30] sm:$0xf]
      %v298 = vld [vmem:[%s243 + $0x34] sm:$0xf]
      %v299 = vld [vmem:[%s243 + $0x38] sm:$0xf]
      %v300 = vld [vmem:[%s243 + $0x3c] sm:$0xf]
      %v309 = vunpack.c.l.b16 %v269
      %v310 = vunpack.c.l.b16 %v270
      %v311 = vunpack.c.l.b16 %v271
      %v312 = vunpack.c.l.b16 %v272
      %v313 = vunpack.c.l.b16 %v273
      %v314 = vunpack.c.l.b16 %v274
      %v315 = vunpack.c.l.b16 %v275
      %v316 = vunpack.c.l.b16 %v276
      %v317 = vpack.c.b16 %v310, %v309
      %v318 = vpack.c.b16 %v312, %v311
      %v319 = vpack.c.b16 %v314, %v313
      %v320 = vpack.c.b16 %v316, %v315
      %v341 = vunpack.c.l.b16 %v285
      %v342 = vunpack.c.l.b16 %v286
      %v343 = vunpack.c.l.b16 %v287
      %v344 = vunpack.c.l.b16 %v288
      %v345 = vunpack.c.l.b16 %v289
      %v346 = vunpack.c.l.b16 %v290
      %v347 = vunpack.c.l.b16 %v291
      %v348 = vunpack.c.l.b16 %v292
      %v349 = vunpack.c.l.b16 %v293
      %v350 = vunpack.c.l.b16 %v294
      %v351 = vunpack.c.l.b16 %v295
      %v352 = vunpack.c.l.b16 %v296
      %v353 = vunpack.c.l.b16 %v297
      %v354 = vunpack.c.l.b16 %v298
      %v355 = vunpack.c.l.b16 %v299
      %v356 = vunpack.c.l.b16 %v300
      %v357 = vpack.c.b16 %v342, %v341
      %v358 = vpack.c.b16 %v344, %v343
      %v359 = vpack.c.b16 %v346, %v345
      %v360 = vpack.c.b16 %v348, %v347
      %v361 = vpack.c.b16 %v350, %v349
      %v362 = vpack.c.b16 %v352, %v351
      %v363 = vpack.c.b16 %v354, %v353
      %v364 = vpack.c.b16 %v356, %v355
      %373 = vmatprep.subr.bf16.mxu0 0
      %374 = vmatpush1.bf16.msra.mxu0 %v364
      %375 = vmatprep.subr.bf16.mxu0 0
      %376 = vmatpush1.bf16.msra.mxu0 %v363
      %377 = vmatprep.subr.bf16.mxu0 0
      %378 = vmatpush1.bf16.msra.mxu0 %v362
      %379 = vmatprep.subr.bf16.mxu0 0
      %380 = vmatpush1.bf16.msra.mxu0 %v361
      %381 = vmatprep.subr.bf16.mxu0 0
      %382 = vmatpush1.bf16.msra.mxu0 %v360
      %383 = vmatprep.subr.bf16.mxu0 0
      %384 = vmatpush1.bf16.msra.mxu0 %v359
      %385 = vmatprep.subr.bf16.mxu0 0
      %386 = vmatpush1.bf16.msra.mxu0 %v358
      %387 = vmatprep.subr.bf16.mxu0 0
      %388 = vmatpush1.bf16.msra.mxu0 %v357
      %389 = vmatprep.subr.bf16.mxu0 0
      %390 = vmatpush2.bf16.msra.mxu0 0
      %391 = vmatprep.subr.bf16.mxu0 0
      %392 = vmatpush2.bf16.msra.mxu0 0
      %393 = vmatprep.subr.bf16.mxu0 0
      %394 = vmatpush2.bf16.msra.mxu0 0
      %395 = vmatprep.subr.bf16.mxu0 0
      %396 = vmatpush2.bf16.msra.mxu0 0
      %397 = vmatprep.subr.bf16.mxu0 0
      %398 = vmatpush2.bf16.msra.mxu0 0
      %399 = vmatprep.subr.bf16.mxu0 0
      %400 = vmatpush2.bf16.msra.mxu0 0
      %401 = vmatprep.subr.bf16.mxu0 0
      %402 = vmatpush2.bf16.msra.mxu0 0
      %403 = vmatprep.subr.bf16.mxu0 0
      %404 = vmatpush2.bf16.msra.mxu0 0
      %405 = vmatprep.mubr.bf16.mxu0 0
      %406 = vmatmul.mubr.bf16.gmra.mxu0 %v317
      %v407 = vpop.f32.mrf.mxu0
      %v408 = vadd.f32 0.0, %v407
      %v409 = vpop.f32.mrf.mxu0
      %v410 = vpop.f32.mrf.mxu0
      %v411 = vadd.f32 0.0, %v410
      %v412 = vpop.f32.mrf.mxu0
      %413 = vmatprep.mubr.bf16.mxu0 0
      %414 = vmatmul.mubr.bf16.gmra.mxu0 %v318
      %v415 = vpop.f32.mrf.mxu0
      %v416 = vadd.f32 0.0, %v415
      %v417 = vpop.f32.mrf.mxu0
      %v418 = vpop.f32.mrf.mxu0
      %v419 = vadd.f32 0.0, %v418
      %v420 = vpop.f32.mrf.mxu0
      %421 = vmatprep.mubr.bf16.mxu0 0
      %422 = vmatmul.mubr.bf16.gmra.mxu0 %v319
      %v423 = vpop.f32.mrf.mxu0
      %v424 = vadd.f32 0.0, %v423
      %v425 = vpop.f32.mrf.mxu0
      %v426 = vpop.f32.mrf.mxu0
      %v427 = vadd.f32 0.0, %v426
      %v428 = vpop.f32.mrf.mxu0
      %429 = vmatprep.mubr.bf16.mxu0 0
      %430 = vmatmul.mubr.bf16.gmra.mxu0 %v320
      %v431 = vpop.f32.mrf.mxu0
      %v432 = vadd.f32 0.0, %v431
      %v433 = vpop.f32.mrf.mxu0
      %v434 = vpop.f32.mrf.mxu0
      %v435 = vadd.f32 0.0, %v434
      %v436 = vpop.f32.mrf.mxu0
      %437 = vdwg.mxu0
      %v438 = vadd.f32 %v277, %v408
      %v439 = vadd.f32 %v278, %v411
      %v440 = vadd.f32 %v279, %v416
      %v441 = vadd.f32 %v280, %v419
      %v442 = vadd.f32 %v281, %v424
      %v443 = vadd.f32 %v282, %v427
      %v444 = vadd.f32 %v283, %v432
      %v445 = vadd.f32 %v284, %v435
      %446 = vst [vmem:[#allocation2] sm:$0xff] %v438
      %447 = vst [vmem:[#allocation2 + $0x8] sm:$0xff] %v439
      %448 = vst [vmem:[#allocation2 + $0x10] sm:$0xff] %v440
      %449 = vst [vmem:[#allocation2 + $0x18] sm:$0xff] %v441
      %450 = vst [vmem:[#allocation2 + $0x20] sm:$0xff] %v442
      %451 = vst [vmem:[#allocation2 + $0x28] sm:$0xff] %v443
      %452 = vst [vmem:[#allocation2 + $0x30] sm:$0xff] %v444
      %453 = vst [vmem:[#allocation2 + $0x38] sm:$0xff] %v445
      %s454 = scalar_lea.vmem %s235, 72
      %v455 = vld [vmem:[%s454] sm:$0xf]
      %v456 = vld [vmem:[%s454 + $0x8] sm:$0xf]
      %v457 = vld [vmem:[%s454 + $0x10] sm:$0xf]
      %v458 = vld [vmem:[%s454 + $0x18] sm:$0xf]
      %v459 = vld [vmem:[%s454 + $0x20] sm:$0xf]
      %v460 = vld [vmem:[%s454 + $0x28] sm:$0xf]
      %v461 = vld [vmem:[%s454 + $0x30] sm:$0xf]
      %v462 = vld [vmem:[%s454 + $0x38] sm:$0xf]
      %v463 = vld [vmem:[#allocation2] sm:$0xff]
      %v464 = vld [vmem:[#allocation2 + $0x8] sm:$0xff]
      %v465 = vld [vmem:[#allocation2 + $0x10] sm:$0xff]
      %v466 = vld [vmem:[#allocation2 + $0x18] sm:$0xff]
      %v467 = vld [vmem:[#allocation2 + $0x20] sm:$0xff]
      %v468 = vld [vmem:[#allocation2 + $0x28] sm:$0xff]
      %v469 = vld [vmem:[#allocation2 + $0x30] sm:$0xff]
      %v470 = vld [vmem:[#allocation2 + $0x38] sm:$0xff]
      %s471 = scalar_lea.vmem %s243, 64
      %v472 = vld [vmem:[%s471] sm:$0xf]
      %v473 = vld [vmem:[%s471 + $0x4] sm:$0xf]
      %v474 = vld [vmem:[%s471 + $0x8] sm:$0xf]
      %v475 = vld [vmem:[%s471 + $0xc] sm:$0xf]
      %v476 = vld [vmem:[%s471 + $0x10] sm:$0xf]
      %v477 = vld [vmem:[%s471 + $0x14] sm:$0xf]
      %v478 = vld [vmem:[%s471 + $0x18] sm:$0xf]
      %v479 = vld [vmem:[%s471 + $0x1c] sm:$0xf]
      %v480 = vld [vmem:[%s471 + $0x20] sm:$0xf]
      %v481 = vld [vmem:[%s471 + $0x24] sm:$0xf]
      %v482 = vld [vmem:[%s471 + $0x28] sm:$0xf]
      %v483 = vld [vmem:[%s471 + $0x2c] sm:$0xf]
      %v484 = vld [vmem:[%s471 + $0x30] sm:$0xf]
      %v485 = vld [vmem:[%s471 + $0x34] sm:$0xf]
      %v486 = vld [vmem:[%s471 + $0x38] sm:$0xf]
      %v487 = vld [vmem:[%s471 + $0x3c] sm:$0xf]
      %v496 = vunpack.c.l.b16 %v455
      %v497 = vunpack.c.l.b16 %v456
      %v498 = vunpack.c.l.b16 %v457
      %v499 = vunpack.c.l.b16 %v458
      %v500 = vunpack.c.l.b16 %v459
      %v501 = vunpack.c.l.b16 %v460
      %v502 = vunpack.c.l.b16 %v461
      %v503 = vunpack.c.l.b16 %v462
      %v504 = vpack.c.b16 %v497, %v496
      %v505 = vpack.c.b16 %v499, %v498
      %v506 = vpack.c.b16 %v501, %v500
      %v507 = vpack.c.b16 %v503, %v502
      %v528 = vunpack.c.l.b16 %v472
      %v529 = vunpack.c.l.b16 %v473
      %v530 = vunpack.c.l.b16 %v474
      %v531 = vunpack.c.l.b16 %v475
      %v532 = vunpack.c.l.b16 %v476
      %v533 = vunpack.c.l.b16 %v477
      %v534 = vunpack.c.l.b16 %v478
      %v535 = vunpack.c.l.b16 %v479
      %v536 = vunpack.c.l.b16 %v480
      %v537 = vunpack.c.l.b16 %v481
      %v538 = vunpack.c.l.b16 %v482
      %v539 = vunpack.c.l.b16 %v483
      %v540 = vunpack.c.l.b16 %v484
      %v541 = vunpack.c.l.b16 %v485
      %v542 = vunpack.c.l.b16 %v486
      %v543 = vunpack.c.l.b16 %v487
      %v544 = vpack.c.b16 %v529, %v528
      %v545 = vpack.c.b16 %v531, %v530
      %v546 = vpack.c.b16 %v533, %v532
      %v547 = vpack.c.b16 %v535, %v534
      %v548 = vpack.c.b16 %v537, %v536
      %v549 = vpack.c.b16 %v539, %v538
      %v550 = vpack.c.b16 %v541, %v540
      %v551 = vpack.c.b16 %v543, %v542
      %560 = vmatprep.subr.bf16.mxu0 0
      %561 = vmatpush1.bf16.msra.mxu0 %v551
      %562 = vmatprep.subr.bf16.mxu0 0
      %563 = vmatpush1.bf16.msra.mxu0 %v550
      %564 = vmatprep.subr.bf16.mxu0 0
      %565 = vmatpush1.bf16.msra.mxu0 %v549
      %566 = vmatprep.subr.bf16.mxu0 0
      %567 = vmatpush1.bf16.msra.mxu0 %v548
      %568 = vmatprep.subr.bf16.mxu0 0
      %569 = vmatpush1.bf16.msra.mxu0 %v547
      %570 = vmatprep.subr.bf16.mxu0 0
      %571 = vmatpush1.bf16.msra.mxu0 %v546
      %572 = vmatprep.subr.bf16.mxu0 0
      %573 = vmatpush1.bf16.msra.mxu0 %v545
      %574 = vmatprep.subr.bf16.mxu0 0
      %575 = vmatpush1.bf16.msra.mxu0 %v544
      %576 = vmatprep.subr.bf16.mxu0 0
      %577 = vmatpush2.bf16.msra.mxu0 0
      %578 = vmatprep.subr.bf16.mxu0 0
      %579 = vmatpush2.bf16.msra.mxu0 0
      %580 = vmatprep.subr.bf16.mxu0 0
      %581 = vmatpush2.bf16.msra.mxu0 0
      %582 = vmatprep.subr.bf16.mxu0 0
      %583 = vmatpush2.bf16.msra.mxu0 0
      %584 = vmatprep.subr.bf16.mxu0 0
      %585 = vmatpush2.bf16.msra.mxu0 0
      %586 = vmatprep.subr.bf16.mxu0 0
      %587 = vmatpush2.bf16.msra.mxu0 0
      %588 = vmatprep.subr.bf16.mxu0 0
      %589 = vmatpush2.bf16.msra.mxu0 0
      %590 = vmatprep.subr.bf16.mxu0 0
      %591 = vmatpush2.bf16.msra.mxu0 0
      %592 = vmatprep.mubr.bf16.mxu0 0
      %593 = vmatmul.mubr.bf16.gmra.mxu0 %v504
      %v594 = vpop.f32.mrf.mxu0
      %v595 = vadd.f32 0.0, %v594
      %v596 = vpop.f32.mrf.mxu0
      %v597 = vpop.f32.mrf.mxu0
      %v598 = vadd.f32 0.0, %v597
      %v599 = vpop.f32.mrf.mxu0
      %600 = vmatprep.mubr.bf16.mxu0 0
      %601 = vmatmul.mubr.bf16.gmra.mxu0 %v505
      %v602 = vpop.f32.mrf.mxu0
      %v603 = vadd.f32 0.0, %v602
      %v604 = vpop.f32.mrf.mxu0
      %v605 = vpop.f32.mrf.mxu0
      %v606 = vadd.f32 0.0, %v605
      %v607 = vpop.f32.mrf.mxu0
      %608 = vmatprep.mubr.bf16.mxu0 0
      %609 = vmatmul.mubr.bf16.gmra.mxu0 %v506
      %v610 = vpop.f32.mrf.mxu0
      %v611 = vadd.f32 0.0, %v610
      %v612 = vpop.f32.mrf.mxu0
      %v613 = vpop.f32.mrf.mxu0
      %v614 = vadd.f32 0.0, %v613
      %v615 = vpop.f32.mrf.mxu0
      %616 = vmatprep.mubr.bf16.mxu0 0
      %617 = vmatmul.mubr.bf16.gmra.mxu0 %v507
      %v618 = vpop.f32.mrf.mxu0
      %v619 = vadd.f32 0.0, %v618
      %v620 = vpop.f32.mrf.mxu0
      %v621 = vpop.f32.mrf.mxu0
      %v622 = vadd.f32 0.0, %v621
      %v623 = vpop.f32.mrf.mxu0
      %624 = vdwg.mxu0
      %v625 = vadd.f32 %v463, %v595
      %v626 = vadd.f32 %v464, %v598
      %v627 = vadd.f32 %v465, %v603
      %v628 = vadd.f32 %v466, %v606
      %v629 = vadd.f32 %v467, %v611
      %v630 = vadd.f32 %v468, %v614
      %v631 = vadd.f32 %v469, %v619
      %v632 = vadd.f32 %v470, %v622
      %633 = vst [vmem:[#allocation2] sm:$0xff] %v625
      %634 = vst [vmem:[#allocation2 + $0x8] sm:$0xff] %v626
      %635 = vst [vmem:[#allocation2 + $0x10] sm:$0xff] %v627
      %636 = vst [vmem:[#allocation2 + $0x18] sm:$0xff] %v628
      %637 = vst [vmem:[#allocation2 + $0x20] sm:$0xff] %v629
      %638 = vst [vmem:[#allocation2 + $0x28] sm:$0xff] %v630
      %639 = vst [vmem:[#allocation2 + $0x30] sm:$0xff] %v631
      %640 = vst [vmem:[#allocation2 + $0x38] sm:$0xff] %v632
      %v641 = vld [vmem:[%s235] sm:$0xf]
      %v642 = vld [vmem:[%s235 + $0x4] sm:$0x1]
      %v643 = vld [vmem:[%s235 + $0x8] sm:$0xf]
      %v644 = vld [vmem:[%s235 + $0xc] sm:$0x1]
      %v645 = vld [vmem:[%s235 + $0x10] sm:$0xf]
      %v646 = vld [vmem:[%s235 + $0x14] sm:$0x1]
      %v647 = vld [vmem:[%s235 + $0x18] sm:$0xf]
      %v648 = vld [vmem:[%s235 + $0x1c] sm:$0x1]
      %v649 = vld [vmem:[%s235 + $0x20] sm:$0xf]
      %v650 = vld [vmem:[%s235 + $0x24] sm:$0x1]
      %v651 = vld [vmem:[%s235 + $0x28] sm:$0xf]
      %v652 = vld [vmem:[%s235 + $0x2c] sm:$0x1]
      %v653 = vld [vmem:[%s235 + $0x30] sm:$0xf]
      %v654 = vld [vmem:[%s235 + $0x34] sm:$0x1]
      %v655 = vld [vmem:[%s235 + $0x38] sm:$0xf]
      %v656 = vld [vmem:[%s235 + $0x3c] sm:$0x1]
      %vm657 = vsmask.f32 3328
      %vm658 = vsmask.f32 7440
      %vm659 = vmor %vm657, %vm658
      %v661 = vshrl.u32 %v641, 16
      %v663 = vrot.slane %v661, 4
      %v664 = vshll.u32 %v641, 16
      %v666 = vrot.slane %v664, 5
      %v667 = vor.u32 %v663, %v666
      %v668 = vrot.slane %v667, 4
      %v670 = vshll.u32 %v642, 16
      %v672 = vrot.slane %v670, 5
      %v673 = vsel %vm659, %v668, %v672
      %v675 = vshrl.u32 %v643, 16
      %v677 = vrot.slane %v675, 4
      %v678 = vshll.u32 %v643, 16
      %v680 = vrot.slane %v678, 5
      %v681 = vor.u32 %v677, %v680
      %v682 = vrot.slane %v681, 4
      %v684 = vshll.u32 %v644, 16
      %v686 = vrot.slane %v684, 5
      %v687 = vsel %vm659, %v682, %v686
      %v689 = vshrl.u32 %v645, 16
      %v691 = vrot.slane %v689, 4
      %v692 = vshll.u32 %v645, 16
      %v694 = vrot.slane %v692, 5
      %v695 = vor.u32 %v691, %v694
      %v696 = vrot.slane %v695, 4
      %v698 = vshll.u32 %v646, 16
      %v700 = vrot.slane %v698, 5
      %v701 = vsel %vm659, %v696, %v700
      %v703 = vshrl.u32 %v647, 16
      %v705 = vrot.slane %v703, 4
      %v706 = vshll.u32 %v647, 16
      %v708 = vrot.slane %v706, 5
      %v709 = vor.u32 %v705, %v708
      %v710 = vrot.slane %v709, 4
      %v712 = vshll.u32 %v648, 16
      %v714 = vrot.slane %v712, 5
      %v715 = vsel %vm659, %v710, %v714
      %v717 = vshrl.u32 %v649, 16
      %v719 = vrot.slane %v717, 4
      %v720 = vshll.u32 %v649, 16
      %v722 = vrot.slane %v720, 5
      %v723 = vor.u32 %v719, %v722
      %v724 = vrot.slane %v723, 4
      %v726 = vshll.u32 %v650, 16
      %v728 = vrot.slane %v726, 5
      %v729 = vsel %vm659, %v724, %v728
      %v731 = vshrl.u32 %v651, 16
      %v733 = vrot.slane %v731, 4
      %v734 = vshll.u32 %v651, 16
      %v736 = vrot.slane %v734, 5
      %v737 = vor.u32 %v733, %v736
      %v738 = vrot.slane %v737, 4
      %v740 = vshll.u32 %v652, 16
      %v742 = vrot.slane %v740, 5
      %v743 = vsel %vm659, %v738, %v742
      %v745 = vshrl.u32 %v653, 16
      %v747 = vrot.slane %v745, 4
      %v748 = vshll.u32 %v653, 16
      %v750 = vrot.slane %v748, 5
      %v751 = vor.u32 %v747, %v750
      %v752 = vrot.slane %v751, 4
      %v754 = vshll.u32 %v654, 16
      %v756 = vrot.slane %v754, 5
      %v757 = vsel %vm659, %v752, %v756
      %v759 = vshrl.u32 %v655, 16
      %v761 = vrot.slane %v759, 4
      %v762 = vshll.u32 %v655, 16
      %v764 = vrot.slane %v762, 5
      %v765 = vor.u32 %v761, %v764
      %v766 = vrot.slane %v765, 4
      %v768 = vshll.u32 %v656, 16
      %v770 = vrot.slane %v768, 5
      %v771 = vsel %vm659, %v766, %v770
      %v772 = vld [vmem:[#allocation2] sm:$0xff]
      %v773 = vld [vmem:[#allocation2 + $0x8] sm:$0xff]
      %v774 = vld [vmem:[#allocation2 + $0x10] sm:$0xff]
      %v775 = vld [vmem:[#allocation2 + $0x18] sm:$0xff]
      %v776 = vld [vmem:[#allocation2 + $0x20] sm:$0xff]
      %v777 = vld [vmem:[#allocation2 + $0x28] sm:$0xff]
      %v778 = vld [vmem:[#allocation2 + $0x30] sm:$0xff]
      %v779 = vld [vmem:[#allocation2 + $0x38] sm:$0xff]
      %s780 = scalar_lea.vmem %s243, 128
      %v781 = vld [vmem:[%s780] sm:$0xf]
      %v782 = vld [vmem:[%s780 + $0x4] sm:$0xf]
      %v783 = vld [vmem:[%s780 + $0x8] sm:$0xf]
      %v784 = vld [vmem:[%s780 + $0xc] sm:$0xf]
      %v785 = vld [vmem:[%s780 + $0x10] sm:$0xf]
      %v786 = vld [vmem:[%s780 + $0x14] sm:$0xf]
      %v787 = vld [vmem:[%s780 + $0x18] sm:$0xf]
      %v788 = vld [vmem:[%s780 + $0x1c] sm:$0xf]
      %v789 = vld [vmem:[%s780 + $0x20] sm:$0xf]
      %v790 = vld [vmem:[%s780 + $0x24] sm:$0xf]
      %v791 = vld [vmem:[%s780 + $0x28] sm:$0xf]
      %v792 = vld [vmem:[%s780 + $0x2c] sm:$0xf]
      %v793 = vld [vmem:[%s780 + $0x30] sm:$0xf]
      %v794 = vld [vmem:[%s780 + $0x34] sm:$0xf]
      %v795 = vld [vmem:[%s780 + $0x38] sm:$0xf]
      %v796 = vld [vmem:[%s780 + $0x3c] sm:$0xf]
      %v797 = vunpack.c.l.b16 %v673
      %v798 = vunpack.c.l.b16 %v687
      %v799 = vunpack.c.l.b16 %v701
      %v800 = vunpack.c.l.b16 %v715
      %v801 = vunpack.c.l.b16 %v729
      %v802 = vunpack.c.l.b16 %v743
      %v803 = vunpack.c.l.b16 %v757
      %v804 = vunpack.c.l.b16 %v771
      %v805 = vpack.c.b16 %v798, %v797
      %v806 = vpack.c.b16 %v800, %v799
      %v807 = vpack.c.b16 %v802, %v801
      %v808 = vpack.c.b16 %v804, %v803
      %v829 = vunpack.c.l.b16 %v781
      %v830 = vunpack.c.l.b16 %v782
      %v831 = vunpack.c.l.b16 %v783
      %v832 = vunpack.c.l.b16 %v784
      %v833 = vunpack.c.l.b16 %v785
      %v834 = vunpack.c.l.b16 %v786
      %v835 = vunpack.c.l.b16 %v787
      %v836 = vunpack.c.l.b16 %v788
      %v837 = vunpack.c.l.b16 %v789
      %v838 = vunpack.c.l.b16 %v790
      %v839 = vunpack.c.l.b16 %v791
      %v840 = vunpack.c.l.b16 %v792
      %v841 = vunpack.c.l.b16 %v793
      %v842 = vunpack.c.l.b16 %v794
      %v843 = vunpack.c.l.b16 %v795
      %v844 = vunpack.c.l.b16 %v796
      %v845 = vpack.c.b16 %v830, %v829
      %v846 = vpack.c.b16 %v832, %v831
      %v847 = vpack.c.b16 %v834, %v833
      %v848 = vpack.c.b16 %v836, %v835
      %v849 = vpack.c.b16 %v838, %v837
      %v850 = vpack.c.b16 %v840, %v839
      %v851 = vpack.c.b16 %v842, %v841
      %v852 = vpack.c.b16 %v844, %v843
      %861 = vmatprep.subr.bf16.mxu0 0
      %862 = vmatpush1.bf16.msra.mxu0 %v852
      %863 = vmatprep.subr.bf16.mxu0 0
      %864 = vmatpush1.bf16.msra.mxu0 %v851
      %865 = vmatprep.subr.bf16.mxu0 0
      %866 = vmatpush1.bf16.msra.mxu0 %v850
      %867 = vmatprep.subr.bf16.mxu0 0
      %868 = vmatpush1.bf16.msra.mxu0 %v849
      %869 = vmatprep.subr.bf16.mxu0 0
      %870 = vmatpush1.bf16.msra.mxu0 %v848
      %871 = vmatprep.subr.bf16.mxu0 0
      %872 = vmatpush1.bf16.msra.mxu0 %v847
      %873 = vmatprep.subr.bf16.mxu0 0
      %874 = vmatpush1.bf16.msra.mxu0 %v846
      %875 = vmatprep.subr.bf16.mxu0 0
      %876 = vmatpush1.bf16.msra.mxu0 %v845
      %877 = vmatprep.subr.bf16.mxu0 0
      %878 = vmatpush2.bf16.msra.mxu0 0
      %879 = vmatprep.subr.bf16.mxu0 0
      %880 = vmatpush2.bf16.msra.mxu0 0
      %881 = vmatprep.subr.bf16.mxu0 0
      %882 = vmatpush2.bf16.msra.mxu0 0
      %883 = vmatprep.subr.bf16.mxu0 0
      %884 = vmatpush2.bf16.msra.mxu0 0
      %885 = vmatprep.subr.bf16.mxu0 0
      %886 = vmatpush2.bf16.msra.mxu0 0
      %887 = vmatprep.subr.bf16.mxu0 0
      %888 = vmatpush2.bf16.msra.mxu0 0
      %889 = vmatprep.subr.bf16.mxu0 0
      %890 = vmatpush2.bf16.msra.mxu0 0
      %891 = vmatprep.subr.bf16.mxu0 0
      %892 = vmatpush2.bf16.msra.mxu0 0
      %893 = vmatprep.mubr.bf16.mxu0 0
      %894 = vmatmul.mubr.bf16.gmra.mxu0 %v805
      %v895 = vpop.f32.mrf.mxu0
      %v896 = vadd.f32 0.0, %v895
      %v897 = vpop.f32.mrf.mxu0
      %v898 = vpop.f32.mrf.mxu0
      %v899 = vadd.f32 0.0, %v898
      %v900 = vpop.f32.mrf.mxu0
      %901 = vmatprep.mubr.bf16.mxu0 0
      %902 = vmatmul.mubr.bf16.gmra.mxu0 %v806
      %v903 = vpop.f32.mrf.mxu0
      %v904 = vadd.f32 0.0, %v903
      %v905 = vpop.f32.mrf.mxu0
      %v906 = vpop.f32.mrf.mxu0
      %v907 = vadd.f32 0.0, %v906
      %v908 = vpop.f32.mrf.mxu0
      %909 = vmatprep.mubr.bf16.mxu0 0
      %910 = vmatmul.mubr.bf16.gmra.mxu0 %v807
      %v911 = vpop.f32.mrf.mxu0
      %v912 = vadd.f32 0.0, %v911
      %v913 = vpop.f32.mrf.mxu0
      %v914 = vpop.f32.mrf.mxu0
      %v915 = vadd.f32 0.0, %v914
      %v916 = vpop.f32.mrf.mxu0
      %917 = vmatprep.mubr.bf16.mxu0 0
      %918 = vmatmul.mubr.bf16.gmra.mxu0 %v808
      %v919 = vpop.f32.mrf.mxu0
      %v920 = vadd.f32 0.0, %v919
      %v921 = vpop.f32.mrf.mxu0
      %v922 = vpop.f32.mrf.mxu0
      %v923 = vadd.f32 0.0, %v922
      %v924 = vpop.f32.mrf.mxu0
      %925 = vdwg.mxu0
      %v926 = vadd.f32 %v772, %v896
      %v927 = vadd.f32 %v773, %v899
      %v928 = vadd.f32 %v774, %v904
      %v929 = vadd.f32 %v775, %v907
      %v930 = vadd.f32 %v776, %v912
      %v931 = vadd.f32 %v777, %v915
      %v932 = vadd.f32 %v778, %v920
      %v933 = vadd.f32 %v779, %v923
      %934 = vst [vmem:[#allocation2] sm:$0xff] %v926
      %935 = vst [vmem:[#allocation2 + $0x8] sm:$0xff] %v927
      %936 = vst [vmem:[#allocation2 + $0x10] sm:$0xff] %v928
      %937 = vst [vmem:[#allocation2 + $0x18] sm:$0xff] %v929
      %938 = vst [vmem:[#allocation2 + $0x20] sm:$0xff] %v930
      %939 = vst [vmem:[#allocation2 + $0x28] sm:$0xff] %v931
      %940 = vst [vmem:[#allocation2 + $0x30] sm:$0xff] %v932
      %941 = vst [vmem:[#allocation2 + $0x38] sm:$0xff] %v933
      %s942 = scalar_lea.vmem %s235, 144
      %v943 = vld [vmem:[%s942] sm:$0xf]
      %v944 = vld [vmem:[%s942 + $0x8] sm:$0xf]
      %v945 = vld [vmem:[%s942 + $0x10] sm:$0xf]
      %v946 = vld [vmem:[%s942 + $0x18] sm:$0xf]
      %v947 = vld [vmem:[%s942 + $0x20] sm:$0xf]
      %v948 = vld [vmem:[%s942 + $0x28] sm:$0xf]
      %v949 = vld [vmem:[%s942 + $0x30] sm:$0xf]
      %v950 = vld [vmem:[%s942 + $0x38] sm:$0xf]
      %v951 = vld [vmem:[#allocation2] sm:$0xff]
      %v952 = vld [vmem:[#allocation2 + $0x8] sm:$0xff]
      %v953 = vld [vmem:[#allocation2 + $0x10] sm:$0xff]
      %v954 = vld [vmem:[#allocation2 + $0x18] sm:$0xff]
      %v955 = vld [vmem:[#allocation2 + $0x20] sm:$0xff]
      %v956 = vld [vmem:[#allocation2 + $0x28] sm:$0xff]
      %v957 = vld [vmem:[#allocation2 + $0x30] sm:$0xff]
      %v958 = vld [vmem:[#allocation2 + $0x38] sm:$0xff]
      %s959 = scalar_lea.vmem %s243, 192
      %v960 = vld [vmem:[%s959] sm:$0xf]
      %v961 = vld [vmem:[%s959 + $0x4] sm:$0xf]
      %v962 = vld [vmem:[%s959 + $0x8] sm:$0xf]
      %v963 = vld [vmem:[%s959 + $0xc] sm:$0xf]
      %v964 = vld [vmem:[%s959 + $0x10] sm:$0xf]
      %v965 = vld [vmem:[%s959 + $0x14] sm:$0xf]
      %v966 = vld [vmem:[%s959 + $0x18] sm:$0xf]
      %v967 = vld [vmem:[%s959 + $0x1c] sm:$0xf]
      %v968 = vld [vmem:[%s959 + $0x20] sm:$0xf]
      %v969 = vld [vmem:[%s959 + $0x24] sm:$0xf]
      %v970 = vld [vmem:[%s959 + $0x28] sm:$0xf]
      %v971 = vld [vmem:[%s959 + $0x2c] sm:$0xf]
      %v972 = vld [vmem:[%s959 + $0x30] sm:$0xf]
      %v973 = vld [vmem:[%s959 + $0x34] sm:$0xf]
      %v974 = vld [vmem:[%s959 + $0x38] sm:$0xf]
      %v975 = vld [vmem:[%s959 + $0x3c] sm:$0xf]
      %v984 = vunpack.c.l.b16 %v943
      %v985 = vunpack.c.l.b16 %v944
      %v986 = vunpack.c.l.b16 %v945
      %v987 = vunpack.c.l.b16 %v946
      %v988 = vunpack.c.l.b16 %v947
      %v989 = vunpack.c.l.b16 %v948
      %v990 = vunpack.c.l.b16 %v949
      %v991 = vunpack.c.l.b16 %v950
      %v992 = vpack.c.b16 %v985, %v984
      %v993 = vpack.c.b16 %v987, %v986
      %v994 = vpack.c.b16 %v989, %v988
      %v995 = vpack.c.b16 %v991, %v990
      %v1016 = vunpack.c.l.b16 %v960
      %v1017 = vunpack.c.l.b16 %v961
      %v1018 = vunpack.c.l.b16 %v962
      %v1019 = vunpack.c.l.b16 %v963
      %v1020 = vunpack.c.l.b16 %v964
      %v1021 = vunpack.c.l.b16 %v965
      %v1022 = vunpack.c.l.b16 %v966
      %v1023 = vunpack.c.l.b16 %v967
      %v1024 = vunpack.c.l.b16 %v968
      %v1025 = vunpack.c.l.b16 %v969
      %v1026 = vunpack.c.l.b16 %v970
      %v1027 = vunpack.c.l.b16 %v971
      %v1028 = vunpack.c.l.b16 %v972
      %v1029 = vunpack.c.l.b16 %v973
      %v1030 = vunpack.c.l.b16 %v974
      %v1031 = vunpack.c.l.b16 %v975
      %v1032 = vpack.c.b16 %v1017, %v1016
      %v1033 = vpack.c.b16 %v1019, %v1018
      %v1034 = vpack.c.b16 %v1021, %v1020
      %v1035 = vpack.c.b16 %v1023, %v1022
      %v1036 = vpack.c.b16 %v1025, %v1024
      %v1037 = vpack.c.b16 %v1027, %v1026
      %v1038 = vpack.c.b16 %v1029, %v1028
      %v1039 = vpack.c.b16 %v1031, %v1030
      %1048 = vmatprep.subr.bf16.mxu0 0
      %1049 = vmatpush1.bf16.msra.mxu0 %v1039
      %1050 = vmatprep.subr.bf16.mxu0 0
      %1051 = vmatpush1.bf16.msra.mxu0 %v1038
      %1052 = vmatprep.subr.bf16.mxu0 0
      %1053 = vmatpush1.bf16.msra.mxu0 %v1037
      %1054 = vmatprep.subr.bf16.mxu0 0
      %1055 = vmatpush1.bf16.msra.mxu0 %v1036
      %1056 = vmatprep.subr.bf16.mxu0 0
      %1057 = vmatpush1.bf16.msra.mxu0 %v1035
      %1058 = vmatprep.subr.bf16.mxu0 0
      %1059 = vmatpush1.bf16.msra.mxu0 %v1034
      %1060 = vmatprep.subr.bf16.mxu0 0
      %1061 = vmatpush1.bf16.msra.mxu0 %v1033
      %1062 = vmatprep.subr.bf16.mxu0 0
      %1063 = vmatpush1.bf16.msra.mxu0 %v1032
      %1064 = vmatprep.subr.bf16.mxu0 0
      %1065 = vmatpush2.bf16.msra.mxu0 0
      %1066 = vmatprep.subr.bf16.mxu0 0
      %1067 = vmatpush2.bf16.msra.mxu0 0
      %1068 = vmatprep.subr.bf16.mxu0 0
      %1069 = vmatpush2.bf16.msra.mxu0 0
      %1070 = vmatprep.subr.bf16.mxu0 0
      %1071 = vmatpush2.bf16.msra.mxu0 0
      %1072 = vmatprep.subr.bf16.mxu0 0
      %1073 = vmatpush2.bf16.msra.mxu0 0
      %1074 = vmatprep.subr.bf16.mxu0 0
      %1075 = vmatpush2.bf16.msra.mxu0 0
      %1076 = vmatprep.subr.bf16.mxu0 0
      %1077 = vmatpush2.bf16.msra.mxu0 0
      %1078 = vmatprep.subr.bf16.mxu0 0
      %1079 = vmatpush2.bf16.msra.mxu0 0
      %1080 = vmatprep.mubr.bf16.mxu0 0
      %1081 = vmatmul.mubr.bf16.gmra.mxu0 %v992
      %v1082 = vpop.f32.mrf.mxu0
      %v1083 = vadd.f32 0.0, %v1082
      %v1084 = vpop.f32.mrf.mxu0
      %v1085 = vpop.f32.mrf.mxu0
      %v1086 = vadd.f32 0.0, %v1085
      %v1087 = vpop.f32.mrf.mxu0
      %1088 = vmatprep.mubr.bf16.mxu0 0
      %1089 = vmatmul.mubr.bf16.gmra.mxu0 %v993
      %v1090 = vpop.f32.mrf.mxu0
      %v1091 = vadd.f32 0.0, %v1090
      %v1092 = vpop.f32.mrf.mxu0
      %v1093 = vpop.f32.mrf.mxu0
      %v1094 = vadd.f32 0.0, %v1093
      %v1095 = vpop.f32.mrf.mxu0
      %1096 = vmatprep.mubr.bf16.mxu0 0
      %1097 = vmatmul.mubr.bf16.gmra.mxu0 %v994
      %v1098 = vpop.f32.mrf.mxu0
      %v1099 = vadd.f32 0.0, %v1098
      %v1100 = vpop.f32.mrf.mxu0
      %v1101 = vpop.f32.mrf.mxu0
      %v1102 = vadd.f32 0.0, %v1101
      %v1103 = vpop.f32.mrf.mxu0
      %1104 = vmatprep.mubr.bf16.mxu0 0
      %1105 = vmatmul.mubr.bf16.gmra.mxu0 %v995
      %v1106 = vpop.f32.mrf.mxu0
      %v1107 = vadd.f32 0.0, %v1106
      %v1108 = vpop.f32.mrf.mxu0
      %v1109 = vpop.f32.mrf.mxu0
      %v1110 = vadd.f32 0.0, %v1109
      %v1111 = vpop.f32.mrf.mxu0
      %1112 = vdwg.mxu0
      %v1113 = vadd.f32 %v951, %v1083
      %v1114 = vadd.f32 %v952, %v1086
      %v1115 = vadd.f32 %v953, %v1091
      %v1116 = vadd.f32 %v954, %v1094
      %v1117 = vadd.f32 %v955, %v1099
      %v1118 = vadd.f32 %v956, %v1102
      %v1119 = vadd.f32 %v957, %v1107
      %v1120 = vadd.f32 %v958, %v1110
      %1121 = vst [vmem:[#allocation2] sm:$0xff] %v1113
      %1122 = vst [vmem:[#allocation2 + $0x8] sm:$0xff] %v1114
      %1123 = vst [vmem:[#allocation2 + $0x10] sm:$0xff] %v1115
      %1124 = vst [vmem:[#allocation2 + $0x18] sm:$0xff] %v1116
      %1125 = vst [vmem:[#allocation2 + $0x20] sm:$0xff] %v1117
      %1126 = vst [vmem:[#allocation2 + $0x28] sm:$0xff] %v1118
      %1127 = vst [vmem:[#allocation2 + $0x30] sm:$0xff] %v1119
      %1128 = vst [vmem:[#allocation2 + $0x38] sm:$0xff] %v1120
      %s1129 = scalar_lea.vmem %s235, 216
      %v1130 = vld [vmem:[%s1129] sm:$0xf]
      %v1131 = vld [vmem:[%s1129 + $0x8] sm:$0xf]
      %v1132 = vld [vmem:[%s1129 + $0x10] sm:$0xf]
      %v1133 = vld [vmem:[%s1129 + $0x18] sm:$0xf]
      %v1134 = vld [vmem:[%s1129 + $0x20] sm:$0xf]
      %v1135 = vld [vmem:[%s1129 + $0x28] sm:$0xf]
      %v1136 = vld [vmem:[%s1129 + $0x30] sm:$0xf]
      %v1137 = vld [vmem:[%s1129 + $0x38] sm:$0xf]
      %v1138 = vld [vmem:[#allocation2] sm:$0xff]
      %v1139 = vld [vmem:[#allocation2 + $0x8] sm:$0xff]
      %v1140 = vld [vmem:[#allocation2 + $0x10] sm:$0xff]
      %v1141 = vld [vmem:[#allocation2 + $0x18] sm:$0xff]
      %v1142 = vld [vmem:[#allocation2 + $0x20] sm:$0xff]
      %v1143 = vld [vmem:[#allocation2 + $0x28] sm:$0xff]
      %v1144 = vld [vmem:[#allocation2 + $0x30] sm:$0xff]
      %v1145 = vld [vmem:[#allocation2 + $0x38] sm:$0xff]
      %s1146 = scalar_lea.vmem %s243, 256
      %v1147 = vld [vmem:[%s1146] sm:$0xf]
      %v1148 = vld [vmem:[%s1146 + $0x4] sm:$0xf]
      %v1149 = vld [vmem:[%s1146 + $0x8] sm:$0xf]
      %v1150 = vld [vmem:[%s1146 + $0xc] sm:$0xf]
      %v1151 = vld [vmem:[%s1146 + $0x10] sm:$0xf]
      %v1152 = vld [vmem:[%s1146 + $0x14] sm:$0xf]
      %v1153 = vld [vmem:[%s1146 + $0x18] sm:$0xf]
      %v1154 = vld [vmem:[%s1146 + $0x1c] sm:$0xf]
      %v1155 = vld [vmem:[%s1146 + $0x20] sm:$0xf]
      %v1156 = vld [vmem:[%s1146 + $0x24] sm:$0xf]
      %v1157 = vld [vmem:[%s1146 + $0x28] sm:$0xf]
      %v1158 = vld [vmem:[%s1146 + $0x2c] sm:$0xf]
      %v1159 = vld [vmem:[%s1146 + $0x30] sm:$0xf]
      %v1160 = vld [vmem:[%s1146 + $0x34] sm:$0xf]
      %v1161 = vld [vmem:[%s1146 + $0x38] sm:$0xf]
      %v1162 = vld [vmem:[%s1146 + $0x3c] sm:$0xf]
      %v1171 = vunpack.c.l.b16 %v1130
      %v1172 = vunpack.c.l.b16 %v1131
      %v1173 = vunpack.c.l.b16 %v1132
      %v1174 = vunpack.c.l.b16 %v1133
      %v1175 = vunpack.c.l.b16 %v1134
      %v1176 = vunpack.c.l.b16 %v1135
      %v1177 = vunpack.c.l.b16 %v1136
      %v1178 = vunpack.c.l.b16 %v1137
      %v1179 = vpack.c.b16 %v1172, %v1171
      %v1180 = vpack.c.b16 %v1174, %v1173
      %v1181 = vpack.c.b16 %v1176, %v1175
      %v1182 = vpack.c.b16 %v1178, %v1177
      %v1203 = vunpack.c.l.b16 %v1147
      %v1204 = vunpack.c.l.b16 %v1148
      %v1205 = vunpack.c.l.b16 %v1149
      %v1206 = vunpack.c.l.b16 %v1150
      %v1207 = vunpack.c.l.b16 %v1151
      %v1208 = vunpack.c.l.b16 %v1152
      %v1209 = vunpack.c.l.b16 %v1153
      %v1210 = vunpack.c.l.b16 %v1154
      %v1211 = vunpack.c.l.b16 %v1155
      %v1212 = vunpack.c.l.b16 %v1156
      %v1213 = vunpack.c.l.b16 %v1157
      %v1214 = vunpack.c.l.b16 %v1158
      %v1215 = vunpack.c.l.b16 %v1159
      %v1216 = vunpack.c.l.b16 %v1160
      %v1217 = vunpack.c.l.b16 %v1161
      %v1218 = vunpack.c.l.b16 %v1162
      %v1219 = vpack.c.b16 %v1204, %v1203
      %v1220 = vpack.c.b16 %v1206, %v1205
      %v1221 = vpack.c.b16 %v1208, %v1207
      %v1222 = vpack.c.b16 %v1210, %v1209
      %v1223 = vpack.c.b16 %v1212, %v1211
      %v1224 = vpack.c.b16 %v1214, %v1213
      %v1225 = vpack.c.b16 %v1216, %v1215
      %v1226 = vpack.c.b16 %v1218, %v1217
      %1235 = vmatprep.subr.bf16.mxu0 0
      %1236 = vmatpush1.bf16.msra.mxu0 %v1226
      %1237 = vmatprep.subr.bf16.mxu0 0
      %1238 = vmatpush1.bf16.msra.mxu0 %v1225
      %1239 = vmatprep.subr.bf16.mxu0 0
      %1240 = vmatpush1.bf16.msra.mxu0 %v1224
      %1241 = vmatprep.subr.bf16.mxu0 0
      %1242 = vmatpush1.bf16.msra.mxu0 %v1223
      %1243 = vmatprep.subr.bf16.mxu0 0
      %1244 = vmatpush1.bf16.msra.mxu0 %v1222
      %1245 = vmatprep.subr.bf16.mxu0 0
      %1246 = vmatpush1.bf16.msra.mxu0 %v1221
      %1247 = vmatprep.subr.bf16.mxu0 0
      %1248 = vmatpush1.bf16.msra.mxu0 %v1220
      %1249 = vmatprep.subr.bf16.mxu0 0
      %1250 = vmatpush1.bf16.msra.mxu0 %v1219
      %1251 = vmatprep.subr.bf16.mxu0 0
      %1252 = vmatpush2.bf16.msra.mxu0 0
      %1253 = vmatprep.subr.bf16.mxu0 0
      %1254 = vmatpush2.bf16.msra.mxu0 0
      %1255 = vmatprep.subr.bf16.mxu0 0
      %1256 = vmatpush2.bf16.msra.mxu0 0
      %1257 = vmatprep.subr.bf16.mxu0 0
      %1258 = vmatpush2.bf16.msra.mxu0 0
      %1259 = vmatprep.subr.bf16.mxu0 0
      %1260 = vmatpush2.bf16.msra.mxu0 0
      %1261 = vmatprep.subr.bf16.mxu0 0
      %1262 = vmatpush2.bf16.msra.mxu0 0
      %1263 = vmatprep.subr.bf16.mxu0 0
      %1264 = vmatpush2.bf16.msra.mxu0 0
      %1265 = vmatprep.subr.bf16.mxu0 0
      %1266 = vmatpush2.bf16.msra.mxu0 0
      %1267 = vmatprep.mubr.bf16.mxu0 0
      %1268 = vmatmul.mubr.bf16.gmra.mxu0 %v1179
      %v1269 = vpop.f32.mrf.mxu0
      %v1270 = vadd.f32 0.0, %v1269
      %v1271 = vpop.f32.mrf.mxu0
      %v1272 = vpop.f32.mrf.mxu0
      %v1273 = vadd.f32 0.0, %v1272
      %v1274 = vpop.f32.mrf.mxu0
      %1275 = vmatprep.mubr.bf16.mxu0 0
      %1276 = vmatmul.mubr.bf16.gmra.mxu0 %v1180
      %v1277 = vpop.f32.mrf.mxu0
      %v1278 = vadd.f32 0.0, %v1277
      %v1279 = vpop.f32.mrf.mxu0
      %v1280 = vpop.f32.mrf.mxu0
      %v1281 = vadd.f32 0.0, %v1280
      %v1282 = vpop.f32.mrf.mxu0
      %1283 = vmatprep.mubr.bf16.mxu0 0
      %1284 = vmatmul.mubr.bf16.gmra.mxu0 %v1181
      %v1285 = vpop.f32.mrf.mxu0
      %v1286 = vadd.f32 0.0, %v1285
      %v1287 = vpop.f32.mrf.mxu0
      %v1288 = vpop.f32.mrf.mxu0
      %v1289 = vadd.f32 0.0, %v1288
      %v1290 = vpop.f32.mrf.mxu0
      %1291 = vmatprep.mubr.bf16.mxu0 0
      %1292 = vmatmul.mubr.bf16.gmra.mxu0 %v1182
      %v1293 = vpop.f32.mrf.mxu0
      %v1294 = vadd.f32 0.0, %v1293
      %v1295 = vpop.f32.mrf.mxu0
      %v1296 = vpop.f32.mrf.mxu0
      %v1297 = vadd.f32 0.0, %v1296
      %v1298 = vpop.f32.mrf.mxu0
      %1299 = vdwg.mxu0
      %v1300 = vadd.f32 %v1138, %v1270
      %v1301 = vadd.f32 %v1139, %v1273
      %v1302 = vadd.f32 %v1140, %v1278
      %v1303 = vadd.f32 %v1141, %v1281
      %v1304 = vadd.f32 %v1142, %v1286
      %v1305 = vadd.f32 %v1143, %v1289
      %v1306 = vadd.f32 %v1144, %v1294
      %v1307 = vadd.f32 %v1145, %v1297
      %1308 = vst [vmem:[#allocation2] sm:$0xff] %v1300
      %1309 = vst [vmem:[#allocation2 + $0x8] sm:$0xff] %v1301
      %1310 = vst [vmem:[#allocation2 + $0x10] sm:$0xff] %v1302
      %1311 = vst [vmem:[#allocation2 + $0x18] sm:$0xff] %v1303
      %1312 = vst [vmem:[#allocation2 + $0x20] sm:$0xff] %v1304
      %1313 = vst [vmem:[#allocation2 + $0x28] sm:$0xff] %v1305
      %1314 = vst [vmem:[#allocation2 + $0x30] sm:$0xff] %v1306
      %1315 = vst [vmem:[#allocation2 + $0x38] sm:$0xff] %v1307
      %v1316 = vld [vmem:[%s942] sm:$0xf]
      %v1317 = vld [vmem:[%s942 + $0x4] sm:$0x1]
      %v1318 = vld [vmem:[%s942 + $0x8] sm:$0xf]
      %v1319 = vld [vmem:[%s942 + $0xc] sm:$0x1]
      %v1320 = vld [vmem:[%s942 + $0x10] sm:$0xf]
      %v1321 = vld [vmem:[%s942 + $0x14] sm:$0x1]
      %v1322 = vld [vmem:[%s942 + $0x18] sm:$0xf]
      %v1323 = vld [vmem:[%s942 + $0x1c] sm:$0x1]
      %v1324 = vld [vmem:[%s942 + $0x20] sm:$0xf]
      %v1325 = vld [vmem:[%s942 + $0x24] sm:$0x1]
      %v1326 = vld [vmem:[%s942 + $0x28] sm:$0xf]
      %v1327 = vld [vmem:[%s942 + $0x2c] sm:$0x1]
      %v1328 = vld [vmem:[%s942 + $0x30] sm:$0xf]
      %v1329 = vld [vmem:[%s942 + $0x34] sm:$0x1]
      %v1330 = vld [vmem:[%s942 + $0x38] sm:$0xf]
      %v1331 = vld [vmem:[%s942 + $0x3c] sm:$0x1]
      %v1333 = vshrl.u32 %v1316, 16
      %v1335 = vrot.slane %v1333, 4
      %v1336 = vshll.u32 %v1316, 16
      %v1338 = vrot.slane %v1336, 5
      %v1339 = vor.u32 %v1335, %v1338
      %v1340 = vrot.slane %v1339, 4
      %v1342 = vshll.u32 %v1317, 16
      %v1344 = vrot.slane %v1342, 5
      %v1345 = vsel %vm659, %v1340, %v1344
      %v1347 = vshrl.u32 %v1318, 16
      %v1349 = vrot.slane %v1347, 4
      %v1350 = vshll.u32 %v1318, 16
      %v1352 = vrot.slane %v1350, 5
      %v1353 = vor.u32 %v1349, %v1352
      %v1354 = vrot.slane %v1353, 4
      %v1356 = vshll.u32 %v1319, 16
      %v1358 = vrot.slane %v1356, 5
      %v1359 = vsel %vm659, %v1354, %v1358
      %v1361 = vshrl.u32 %v1320, 16
      %v1363 = vrot.slane %v1361, 4
      %v1364 = vshll.u32 %v1320, 16
      %v1366 = vrot.slane %v1364, 5
      %v1367 = vor.u32 %v1363, %v1366
      %v1368 = vrot.slane %v1367, 4
      %v1370 = vshll.u32 %v1321, 16
      %v1372 = vrot.slane %v1370, 5
      %v1373 = vsel %vm659, %v1368, %v1372
      %v1375 = vshrl.u32 %v1322, 16
      %v1377 = vrot.slane %v1375, 4
      %v1378 = vshll.u32 %v1322, 16
      %v1380 = vrot.slane %v1378, 5
      %v1381 = vor.u32 %v1377, %v1380
      %v1382 = vrot.slane %v1381, 4
      %v1384 = vshll.u32 %v1323, 16
      %v1386 = vrot.slane %v1384, 5
      %v1387 = vsel %vm659, %v1382, %v1386
      %v1389 = vshrl.u32 %v1324, 16
      %v1391 = vrot.slane %v1389, 4
      %v1392 = vshll.u32 %v1324, 16
      %v1394 = vrot.slane %v1392, 5
      %v1395 = vor.u32 %v1391, %v1394
      %v1396 = vrot.slane %v1395, 4
      %v1398 = vshll.u32 %v1325, 16
      %v1400 = vrot.slane %v1398, 5
      %v1401 = vsel %vm659, %v1396, %v1400
      %v1403 = vshrl.u32 %v1326, 16
      %v1405 = vrot.slane %v1403, 4
      %v1406 = vshll.u32 %v1326, 16
      %v1408 = vrot.slane %v1406, 5
      %v1409 = vor.u32 %v1405, %v1408
      %v1410 = vrot.slane %v1409, 4
      %v1412 = vshll.u32 %v1327, 16
      %v1414 = vrot.slane %v1412, 5
      %v1415 = vsel %vm659, %v1410, %v1414
      %v1417 = vshrl.u32 %v1328, 16
      %v1419 = vrot.slane %v1417, 4
      %v1420 = vshll.u32 %v1328, 16
      %v1422 = vrot.slane %v1420, 5
      %v1423 = vor.u32 %v1419, %v1422
      %v1424 = vrot.slane %v1423, 4
      %v1426 = vshll.u32 %v1329, 16
      %v1428 = vrot.slane %v1426, 5
      %v1429 = vsel %vm659, %v1424, %v1428
      %v1431 = vshrl.u32 %v1330, 16
      %v1433 = vrot.slane %v1431, 4
      %v1434 = vshll.u32 %v1330, 16
      %v1436 = vrot.slane %v1434, 5
      %v1437 = vor.u32 %v1433, %v1436
      %v1438 = vrot.slane %v1437, 4
      %v1440 = vshll.u32 %v1331, 16
      %v1442 = vrot.slane %v1440, 5
      %v1443 = vsel %vm659, %v1438, %v1442
      %v1444 = vld [vmem:[#allocation2] sm:$0xff]
      %v1445 = vld [vmem:[#allocation2 + $0x8] sm:$0xff]
      %v1446 = vld [vmem:[#allocation2 + $0x10] sm:$0xff]
      %v1447 = vld [vmem:[#allocation2 + $0x18] sm:$0xff]
      %v1448 = vld [vmem:[#allocation2 + $0x20] sm:$0xff]
      %v1449 = vld [vmem:[#allocation2 + $0x28] sm:$0xff]
      %v1450 = vld [vmem:[#allocation2 + $0x30] sm:$0xff]
      %v1451 = vld [vmem:[#allocation2 + $0x38] sm:$0xff]
      %s1452 = scalar_lea.vmem %s243, 320
      %v1453 = vld [vmem:[%s1452] sm:$0xf]
      %v1454 = vld [vmem:[%s1452 + $0x4] sm:$0xf]
      %v1455 = vld [vmem:[%s1452 + $0x8] sm:$0xf]
      %v1456 = vld [vmem:[%s1452 + $0xc] sm:$0xf]
      %v1457 = vld [vmem:[%s1452 + $0x10] sm:$0xf]
      %v1458 = vld [vmem:[%s1452 + $0x14] sm:$0xf]
      %v1459 = vld [vmem:[%s1452 + $0x18] sm:$0xf]
      %v1460 = vld [vmem:[%s1452 + $0x1c] sm:$0xf]
      %v1461 = vld [vmem:[%s1452 + $0x20] sm:$0xf]
      %v1462 = vld [vmem:[%s1452 + $0x24] sm:$0xf]
      %v1463 = vld [vmem:[%s1452 + $0x28] sm:$0xf]
      %v1464 = vld [vmem:[%s1452 + $0x2c] sm:$0xf]
      %v1465 = vld [vmem:[%s1452 + $0x30] sm:$0xf]
      %v1466 = vld [vmem:[%s1452 + $0x34] sm:$0xf]
      %v1467 = vld [vmem:[%s1452 + $0x38] sm:$0xf]
      %v1468 = vld [vmem:[%s1452 + $0x3c] sm:$0xf]
      %v1469 = vunpack.c.l.b16 %v1345
      %v1470 = vunpack.c.l.b16 %v1359
      %v1471 = vunpack.c.l.b16 %v1373
      %v1472 = vunpack.c.l.b16 %v1387
      %v1473 = vunpack.c.l.b16 %v1401
      %v1474 = vunpack.c.l.b16 %v1415
      %v1475 = vunpack.c.l.b16 %v1429
      %v1476 = vunpack.c.l.b16 %v1443
      %v1477 = vpack.c.b16 %v1470, %v1469
      %v1478 = vpack.c.b16 %v1472, %v1471
      %v1479 = vpack.c.b16 %v1474, %v1473
      %v1480 = vpack.c.b16 %v1476, %v1475
      %v1501 = vunpack.c.l.b16 %v1453
      %v1502 = vunpack.c.l.b16 %v1454
      %v1503 = vunpack.c.l.b16 %v1455
      %v1504 = vunpack.c.l.b16 %v1456
      %v1505 = vunpack.c.l.b16 %v1457
      %v1506 = vunpack.c.l.b16 %v1458
      %v1507 = vunpack.c.l.b16 %v1459
      %v1508 = vunpack.c.l.b16 %v1460
      %v1509 = vunpack.c.l.b16 %v1461
      %v1510 = vunpack.c.l.b16 %v1462
      %v1511 = vunpack.c.l.b16 %v1463
      %v1512 = vunpack.c.l.b16 %v1464
      %v1513 = vunpack.c.l.b16 %v1465
      %v1514 = vunpack.c.l.b16 %v1466
      %v1515 = vunpack.c.l.b16 %v1467
      %v1516 = vunpack.c.l.b16 %v1468
      %v1517 = vpack.c.b16 %v1502, %v1501
      %v1518 = vpack.c.b16 %v1504, %v1503
      %v1519 = vpack.c.b16 %v1506, %v1505
      %v1520 = vpack.c.b16 %v1508, %v1507
      %v1521 = vpack.c.b16 %v1510, %v1509
      %v1522 = vpack.c.b16 %v1512, %v1511
      %v1523 = vpack.c.b16 %v1514, %v1513
      %v1524 = vpack.c.b16 %v1516, %v1515
      %1533 = vmatprep.subr.bf16.mxu0 0
      %1534 = vmatpush1.bf16.msra.mxu0 %v1524
      %1535 = vmatprep.subr.bf16.mxu0 0
      %1536 = vmatpush1.bf16.msra.mxu0 %v1523
      %1537 = vmatprep.subr.bf16.mxu0 0
      %1538 = vmatpush1.bf16.msra.mxu0 %v1522
      %1539 = vmatprep.subr.bf16.mxu0 0
      %1540 = vmatpush1.bf16.msra.mxu0 %v1521
      %1541 = vmatprep.subr.bf16.mxu0 0
      %1542 = vmatpush1.bf16.msra.mxu0 %v1520
      %1543 = vmatprep.subr.bf16.mxu0 0
      %1544 = vmatpush1.bf16.msra.mxu0 %v1519
      %1545 = vmatprep.subr.bf16.mxu0 0
      %1546 = vmatpush1.bf16.msra.mxu0 %v1518
      %1547 = vmatprep.subr.bf16.mxu0 0
      %1548 = vmatpush1.bf16.msra.mxu0 %v1517
      %1549 = vmatprep.subr.bf16.mxu0 0
      %1550 = vmatpush2.bf16.msra.mxu0 0
      %1551 = vmatprep.subr.bf16.mxu0 0
      %1552 = vmatpush2.bf16.msra.mxu0 0
      %1553 = vmatprep.subr.bf16.mxu0 0
      %1554 = vmatpush2.bf16.msra.mxu0 0
      %1555 = vmatprep.subr.bf16.mxu0 0
      %1556 = vmatpush2.bf16.msra.mxu0 0
      %1557 = vmatprep.subr.bf16.mxu0 0
      %1558 = vmatpush2.bf16.msra.mxu0 0
      %1559 = vmatprep.subr.bf16.mxu0 0
      %1560 = vmatpush2.bf16.msra.mxu0 0
      %1561 = vmatprep.subr.bf16.mxu0 0
      %1562 = vmatpush2.bf16.msra.mxu0 0
      %1563 = vmatprep.subr.bf16.mxu0 0
      %1564 = vmatpush2.bf16.msra.mxu0 0
      %1565 = vmatprep.mubr.bf16.mxu0 0
      %1566 = vmatmul.mubr.bf16.gmra.mxu0 %v1477
      %v1567 = vpop.f32.mrf.mxu0
      %v1568 = vadd.f32 0.0, %v1567
      %v1569 = vpop.f32.mrf.mxu0
      %v1570 = vpop.f32.mrf.mxu0
      %v1571 = vadd.f32 0.0, %v1570
      %v1572 = vpop.f32.mrf.mxu0
      %1573 = vmatprep.mubr.bf16.mxu0 0
      %1574 = vmatmul.mubr.bf16.gmra.mxu0 %v1478
      %v1575 = vpop.f32.mrf.mxu0
      %v1576 = vadd.f32 0.0, %v1575
      %v1577 = vpop.f32.mrf.mxu0
      %v1578 = vpop.f32.mrf.mxu0
      %v1579 = vadd.f32 0.0, %v1578
      %v1580 = vpop.f32.mrf.mxu0
      %1581 = vmatprep.mubr.bf16.mxu0 0
      %1582 = vmatmul.mubr.bf16.gmra.mxu0 %v1479
      %v1583 = vpop.f32.mrf.mxu0
      %v1584 = vadd.f32 0.0, %v1583
      %v1585 = vpop.f32.mrf.mxu0
      %v1586 = vpop.f32.mrf.mxu0
      %v1587 = vadd.f32 0.0, %v1586
      %v1588 = vpop.f32.mrf.mxu0
      %1589 = vmatprep.mubr.bf16.mxu0 0
      %1590 = vmatmul.mubr.bf16.gmra.mxu0 %v1480
      %v1591 = vpop.f32.mrf.mxu0
      %v1592 = vadd.f32 0.0, %v1591
      %v1593 = vpop.f32.mrf.mxu0
      %v1594 = vpop.f32.mrf.mxu0
      %v1595 = vadd.f32 0.0, %v1594
      %v1596 = vpop.f32.mrf.mxu0
      %1597 = vdwg.mxu0
      %v1598 = vadd.f32 %v1444, %v1568
      %v1599 = vadd.f32 %v1445, %v1571
      %v1600 = vadd.f32 %v1446, %v1576
      %v1601 = vadd.f32 %v1447, %v1579
      %v1602 = vadd.f32 %v1448, %v1584
      %v1603 = vadd.f32 %v1449, %v1587
      %v1604 = vadd.f32 %v1450, %v1592
      %v1605 = vadd.f32 %v1451, %v1595
      %1606 = vst [vmem:[#allocation2] sm:$0xff] %v1598
      %1607 = vst [vmem:[#allocation2 + $0x8] sm:$0xff] %v1599
      %1608 = vst [vmem:[#allocation2 + $0x10] sm:$0xff] %v1600
      %1609 = vst [vmem:[#allocation2 + $0x18] sm:$0xff] %v1601
      %1610 = vst [vmem:[#allocation2 + $0x20] sm:$0xff] %v1602
      %1611 = vst [vmem:[#allocation2 + $0x28] sm:$0xff] %v1603
      %1612 = vst [vmem:[#allocation2 + $0x30] sm:$0xff] %v1604
      %1613 = vst [vmem:[#allocation2 + $0x38] sm:$0xff] %v1605
      %s1614 = scalar_lea.vmem %s235, 8
      %v1615 = vld [vmem:[%s1614] sm:$0xf]
      %v1616 = vld [vmem:[%s1614 + $0x8] sm:$0xf]
      %v1617 = vld [vmem:[%s1614 + $0x10] sm:$0xf]
      %v1618 = vld [vmem:[%s1614 + $0x18] sm:$0xf]
      %v1619 = vld [vmem:[%s1614 + $0x20] sm:$0xf]
      %v1620 = vld [vmem:[%s1614 + $0x28] sm:$0xf]
      %v1621 = vld [vmem:[%s1614 + $0x30] sm:$0xf]
      %v1622 = vld [vmem:[%s1614 + $0x38] sm:$0xf]
      %v1623 = vld [vmem:[#allocation2] sm:$0xff]
      %v1624 = vld [vmem:[#allocation2 + $0x8] sm:$0xff]
      %v1625 = vld [vmem:[#allocation2 + $0x10] sm:$0xff]
      %v1626 = vld [vmem:[#allocation2 + $0x18] sm:$0xff]
      %v1627 = vld [vmem:[#allocation2 + $0x20] sm:$0xff]
      %v1628 = vld [vmem:[#allocation2 + $0x28] sm:$0xff]
      %v1629 = vld [vmem:[#allocation2 + $0x30] sm:$0xff]
      %v1630 = vld [vmem:[#allocation2 + $0x38] sm:$0xff]
      %s1631 = scalar_lea.vmem %s243, 384
      %v1632 = vld [vmem:[%s1631] sm:$0xf]
      %v1633 = vld [vmem:[%s1631 + $0x4] sm:$0xf]
      %v1634 = vld [vmem:[%s1631 + $0x8] sm:$0xf]
      %v1635 = vld [vmem:[%s1631 + $0xc] sm:$0xf]
      %v1636 = vld [vmem:[%s1631 + $0x10] sm:$0xf]
      %v1637 = vld [vmem:[%s1631 + $0x14] sm:$0xf]
      %v1638 = vld [vmem:[%s1631 + $0x18] sm:$0xf]
      %v1639 = vld [vmem:[%s1631 + $0x1c] sm:$0xf]
      %v1640 = vld [vmem:[%s1631 + $0x20] sm:$0xf]
      %v1641 = vld [vmem:[%s1631 + $0x24] sm:$0xf]
      %v1642 = vld [vmem:[%s1631 + $0x28] sm:$0xf]
      %v1643 = vld [vmem:[%s1631 + $0x2c] sm:$0xf]
      %v1644 = vld [vmem:[%s1631 + $0x30] sm:$0xf]
      %v1645 = vld [vmem:[%s1631 + $0x34] sm:$0xf]
      %v1646 = vld [vmem:[%s1631 + $0x38] sm:$0xf]
      %v1647 = vld [vmem:[%s1631 + $0x3c] sm:$0xf]
      %v1656 = vunpack.c.l.b16 %v1615
      %v1657 = vunpack.c.l.b16 %v1616
      %v1658 = vunpack.c.l.b16 %v1617
      %v1659 = vunpack.c.l.b16 %v1618
      %v1660 = vunpack.c.l.b16 %v1619
      %v1661 = vunpack.c.l.b16 %v1620
      %v1662 = vunpack.c.l.b16 %v1621
      %v1663 = vunpack.c.l.b16 %v1622
      %v1664 = vpack.c.b16 %v1657, %v1656
      %v1665 = vpack.c.b16 %v1659, %v1658
      %v1666 = vpack.c.b16 %v1661, %v1660
      %v1667 = vpack.c.b16 %v1663, %v1662
      %v1688 = vunpack.c.l.b16 %v1632
      %v1689 = vunpack.c.l.b16 %v1633
      %v1690 = vunpack.c.l.b16 %v1634
      %v1691 = vunpack.c.l.b16 %v1635
      %v1692 = vunpack.c.l.b16 %v1636
      %v1693 = vunpack.c.l.b16 %v1637
      %v1694 = vunpack.c.l.b16 %v1638
      %v1695 = vunpack.c.l.b16 %v1639
      %v1696 = vunpack.c.l.b16 %v1640
      %v1697 = vunpack.c.l.b16 %v1641
      %v1698 = vunpack.c.l.b16 %v1642
      %v1699 = vunpack.c.l.b16 %v1643
      %v1700 = vunpack.c.l.b16 %v1644
      %v1701 = vunpack.c.l.b16 %v1645
      %v1702 = vunpack.c.l.b16 %v1646
      %v1703 = vunpack.c.l.b16 %v1647
      %v1704 = vpack.c.b16 %v1689, %v1688
      %v1705 = vpack.c.b16 %v1691, %v1690
      %v1706 = vpack.c.b16 %v1693, %v1692
      %v1707 = vpack.c.b16 %v1695, %v1694
      %v1708 = vpack.c.b16 %v1697, %v1696
      %v1709 = vpack.c.b16 %v1699, %v1698
      %v1710 = vpack.c.b16 %v1701, %v1700
      %v1711 = vpack.c.b16 %v1703, %v1702
      %1720 = vmatprep.subr.bf16.mxu0 0
      %1721 = vmatpush1.bf16.msra.mxu0 %v1711
      %1722 = vmatprep.subr.bf16.mxu0 0
      %1723 = vmatpush1.bf16.msra.mxu0 %v1710
      %1724 = vmatprep.subr.bf16.mxu0 0
      %1725 = vmatpush1.bf16.msra.mxu0 %v1709
      %1726 = vmatprep.subr.bf16.mxu0 0
      %1727 = vmatpush1.bf16.msra.mxu0 %v1708
      %1728 = vmatprep.subr.bf16.mxu0 0
      %1729 = vmatpush1.bf16.msra.mxu0 %v1707
      %1730 = vmatprep.subr.bf16.mxu0 0
      %1731 = vmatpush1.bf16.msra.mxu0 %v1706
      %1732 = vmatprep.subr.bf16.mxu0 0
      %1733 = vmatpush1.bf16.msra.mxu0 %v1705
      %1734 = vmatprep.subr.bf16.mxu0 0
      %1735 = vmatpush1.bf16.msra.mxu0 %v1704
      %1736 = vmatprep.subr.bf16.mxu0 0
      %1737 = vmatpush2.bf16.msra.mxu0 0
      %1738 = vmatprep.subr.bf16.mxu0 0
      %1739 = vmatpush2.bf16.msra.mxu0 0
      %1740 = vmatprep.subr.bf16.mxu0 0
      %1741 = vmatpush2.bf16.msra.mxu0 0
      %1742 = vmatprep.subr.bf16.mxu0 0
      %1743 = vmatpush2.bf16.msra.mxu0 0
      %1744 = vmatprep.subr.bf16.mxu0 0
      %1745 = vmatpush2.bf16.msra.mxu0 0
      %1746 = vmatprep.subr.bf16.mxu0 0
      %1747 = vmatpush2.bf16.msra.mxu0 0
      %1748 = vmatprep.subr.bf16.mxu0 0
      %1749 = vmatpush2.bf16.msra.mxu0 0
      %1750 = vmatprep.subr.bf16.mxu0 0
      %1751 = vmatpush2.bf16.msra.mxu0 0
      %1752 = vmatprep.mubr.bf16.mxu0 0
      %1753 = vmatmul.mubr.bf16.gmra.mxu0 %v1664
      %v1754 = vpop.f32.mrf.mxu0
      %v1755 = vadd.f32 0.0, %v1754
      %v1756 = vpop.f32.mrf.mxu0
      %v1757 = vpop.f32.mrf.mxu0
      %v1758 = vadd.f32 0.0, %v1757
      %v1759 = vpop.f32.mrf.mxu0
      %1760 = vmatprep.mubr.bf16.mxu0 0
      %1761 = vmatmul.mubr.bf16.gmra.mxu0 %v1665
      %v1762 = vpop.f32.mrf.mxu0
      %v1763 = vadd.f32 0.0, %v1762
      %v1764 = vpop.f32.mrf.mxu0
      %v1765 = vpop.f32.mrf.mxu0
      %v1766 = vadd.f32 0.0, %v1765
      %v1767 = vpop.f32.mrf.mxu0
      %1768 = vmatprep.mubr.bf16.mxu0 0
      %1769 = vmatmul.mubr.bf16.gmra.mxu0 %v1666
      %v1770 = vpop.f32.mrf.mxu0
      %v1771 = vadd.f32 0.0, %v1770
      %v1772 = vpop.f32.mrf.mxu0
      %v1773 = vpop.f32.mrf.mxu0
      %v1774 = vadd.f32 0.0, %v1773
      %v1775 = vpop.f32.mrf.mxu0
      %1776 = vmatprep.mubr.bf16.mxu0 0
      %1777 = vmatmul.mubr.bf16.gmra.mxu0 %v1667
      %v1778 = vpop.f32.mrf.mxu0
      %v1779 = vadd.f32 0.0, %v1778
      %v1780 = vpop.f32.mrf.mxu0
      %v1781 = vpop.f32.mrf.mxu0
      %v1782 = vadd.f32 0.0, %v1781
      %v1783 = vpop.f32.mrf.mxu0
      %1784 = vdwg.mxu0
      %v1785 = vadd.f32 %v1623, %v1755
      %v1786 = vadd.f32 %v1624, %v1758
      %v1787 = vadd.f32 %v1625, %v1763
      %v1788 = vadd.f32 %v1626, %v1766
      %v1789 = vadd.f32 %v1627, %v1771
      %v1790 = vadd.f32 %v1628, %v1774
      %v1791 = vadd.f32 %v1629, %v1779
      %v1792 = vadd.f32 %v1630, %v1782
      %1793 = vst [vmem:[#allocation2] sm:$0xff] %v1785
      %1794 = vst [vmem:[#allocation2 + $0x8] sm:$0xff] %v1786
      %1795 = vst [vmem:[#allocation2 + $0x10] sm:$0xff] %v1787
      %1796 = vst [vmem:[#allocation2 + $0x18] sm:$0xff] %v1788
      %1797 = vst [vmem:[#allocation2 + $0x20] sm:$0xff] %v1789
      %1798 = vst [vmem:[#allocation2 + $0x28] sm:$0xff] %v1790
      %1799 = vst [vmem:[#allocation2 + $0x30] sm:$0xff] %v1791
      %1800 = vst [vmem:[#allocation2 + $0x38] sm:$0xff] %v1792
      %s1801 = scalar_lea.vmem %s235, 80
      %v1802 = vld [vmem:[%s1801] sm:$0xf]
      %v1803 = vld [vmem:[%s1801 + $0x8] sm:$0xf]
      %v1804 = vld [vmem:[%s1801 + $0x10] sm:$0xf]
      %v1805 = vld [vmem:[%s1801 + $0x18] sm:$0xf]
      %v1806 = vld [vmem:[%s1801 + $0x20] sm:$0xf]
      %v1807 = vld [vmem:[%s1801 + $0x28] sm:$0xf]
      %v1808 = vld [vmem:[%s1801 + $0x30] sm:$0xf]
      %v1809 = vld [vmem:[%s1801 + $0x38] sm:$0xf]
      %v1810 = vld [vmem:[#allocation2] sm:$0xff]
      %v1811 = vld [vmem:[#allocation2 + $0x8] sm:$0xff]
      %v1812 = vld [vmem:[#allocation2 + $0x10] sm:$0xff]
      %v1813 = vld [vmem:[#allocation2 + $0x18] sm:$0xff]
      %v1814 = vld [vmem:[#allocation2 + $0x20] sm:$0xff]
      %v1815 = vld [vmem:[#allocation2 + $0x28] sm:$0xff]
      %v1816 = vld [vmem:[#allocation2 + $0x30] sm:$0xff]
      %v1817 = vld [vmem:[#allocation2 + $0x38] sm:$0xff]
      %s1818 = scalar_lea.vmem %s243, 448
      %v1819 = vld [vmem:[%s1818] sm:$0xf]
      %v1820 = vld [vmem:[%s1818 + $0x4] sm:$0xf]
      %v1821 = vld [vmem:[%s1818 + $0x8] sm:$0xf]
      %v1822 = vld [vmem:[%s1818 + $0xc] sm:$0xf]
      %v1823 = vld [vmem:[%s1818 + $0x10] sm:$0xf]
      %v1824 = vld [vmem:[%s1818 + $0x14] sm:$0xf]
      %v1825 = vld [vmem:[%s1818 + $0x18] sm:$0xf]
      %v1826 = vld [vmem:[%s1818 + $0x1c] sm:$0xf]
      %v1827 = vld [vmem:[%s1818 + $0x20] sm:$0xf]
      %v1828 = vld [vmem:[%s1818 + $0x24] sm:$0xf]
      %v1829 = vld [vmem:[%s1818 + $0x28] sm:$0xf]
      %v1830 = vld [vmem:[%s1818 + $0x2c] sm:$0xf]
      %v1831 = vld [vmem:[%s1818 + $0x30] sm:$0xf]
      %v1832 = vld [vmem:[%s1818 + $0x34] sm:$0xf]
      %v1833 = vld [vmem:[%s1818 + $0x38] sm:$0xf]
      %v1834 = vld [vmem:[%s1818 + $0x3c] sm:$0xf]
      %v1843 = vunpack.c.l.b16 %v1802
      %v1844 = vunpack.c.l.b16 %v1803
      %v1845 = vunpack.c.l.b16 %v1804
      %v1846 = vunpack.c.l.b16 %v1805
      %v1847 = vunpack.c.l.b16 %v1806
      %v1848 = vunpack.c.l.b16 %v1807
      %v1849 = vunpack.c.l.b16 %v1808
      %v1850 = vunpack.c.l.b16 %v1809
      %v1851 = vpack.c.b16 %v1844, %v1843
      %v1852 = vpack.c.b16 %v1846, %v1845
      %v1853 = vpack.c.b16 %v1848, %v1847
      %v1854 = vpack.c.b16 %v1850, %v1849
      %v1875 = vunpack.c.l.b16 %v1819
      %v1876 = vunpack.c.l.b16 %v1820
      %v1877 = vunpack.c.l.b16 %v1821
      %v1878 = vunpack.c.l.b16 %v1822
      %v1879 = vunpack.c.l.b16 %v1823
      %v1880 = vunpack.c.l.b16 %v1824
      %v1881 = vunpack.c.l.b16 %v1825
      %v1882 = vunpack.c.l.b16 %v1826
      %v1883 = vunpack.c.l.b16 %v1827
      %v1884 = vunpack.c.l.b16 %v1828
      %v1885 = vunpack.c.l.b16 %v1829
      %v1886 = vunpack.c.l.b16 %v1830
      %v1887 = vunpack.c.l.b16 %v1831
      %v1888 = vunpack.c.l.b16 %v1832
      %v1889 = vunpack.c.l.b16 %v1833
      %v1890 = vunpack.c.l.b16 %v1834
      %v1891 = vpack.c.b16 %v1876, %v1875
      %v1892 = vpack.c.b16 %v1878, %v1877
      %v1893 = vpack.c.b16 %v1880, %v1879
      %v1894 = vpack.c.b16 %v1882, %v1881
      %v1895 = vpack.c.b16 %v1884, %v1883
      %v1896 = vpack.c.b16 %v1886, %v1885
      %v1897 = vpack.c.b16 %v1888, %v1887
      %v1898 = vpack.c.b16 %v1890, %v1889
      %1907 = vmatprep.subr.bf16.mxu0 0
      %1908 = vmatpush1.bf16.msra.mxu0 %v1898
      %1909 = vmatprep.subr.bf16.mxu0 0
      %1910 = vmatpush1.bf16.msra.mxu0 %v1897
      %1911 = vmatprep.subr.bf16.mxu0 0
      %1912 = vmatpush1.bf16.msra.mxu0 %v1896
      %1913 = vmatprep.subr.bf16.mxu0 0
      %1914 = vmatpush1.bf16.msra.mxu0 %v1895
      %1915 = vmatprep.subr.bf16.mxu0 0
      %1916 = vmatpush1.bf16.msra.mxu0 %v1894
      %1917 = vmatprep.subr.bf16.mxu0 0
      %1918 = vmatpush1.bf16.msra.mxu0 %v1893
      %1919 = vmatprep.subr.bf16.mxu0 0
      %1920 = vmatpush1.bf16.msra.mxu0 %v1892
      %1921 = vmatprep.subr.bf16.mxu0 0
      %1922 = vmatpush1.bf16.msra.mxu0 %v1891
      %1923 = vmatprep.subr.bf16.mxu0 0
      %1924 = vmatpush2.bf16.msra.mxu0 0
      %1925 = vmatprep.subr.bf16.mxu0 0
      %1926 = vmatpush2.bf16.msra.mxu0 0
      %1927 = vmatprep.subr.bf16.mxu0 0
      %1928 = vmatpush2.bf16.msra.mxu0 0
      %1929 = vmatprep.subr.bf16.mxu0 0
      %1930 = vmatpush2.bf16.msra.mxu0 0
      %1931 = vmatprep.subr.bf16.mxu0 0
      %1932 = vmatpush2.bf16.msra.mxu0 0
      %1933 = vmatprep.subr.bf16.mxu0 0
      %1934 = vmatpush2.bf16.msra.mxu0 0
      %1935 = vmatprep.subr.bf16.mxu0 0
      %1936 = vmatpush2.bf16.msra.mxu0 0
      %1937 = vmatprep.subr.bf16.mxu0 0
      %1938 = vmatpush2.bf16.msra.mxu0 0
      %1939 = vmatprep.mubr.bf16.mxu0 0
      %1940 = vmatmul.mubr.bf16.gmra.mxu0 %v1851
      %v1941 = vpop.f32.mrf.mxu0
      %v1942 = vadd.f32 0.0, %v1941
      %v1943 = vpop.f32.mrf.mxu0
      %v1944 = vpop.f32.mrf.mxu0
      %v1945 = vadd.f32 0.0, %v1944
      %v1946 = vpop.f32.mrf.mxu0
      %1947 = vmatprep.mubr.bf16.mxu0 0
      %1948 = vmatmul.mubr.bf16.gmra.mxu0 %v1852
      %v1949 = vpop.f32.mrf.mxu0
      %v1950 = vadd.f32 0.0, %v1949
      %v1951 = vpop.f32.mrf.mxu0
      %v1952 = vpop.f32.mrf.mxu0
      %v1953 = vadd.f32 0.0, %v1952
      %v1954 = vpop.f32.mrf.mxu0
      %1955 = vmatprep.mubr.bf16.mxu0 0
      %1956 = vmatmul.mubr.bf16.gmra.mxu0 %v1853
      %v1957 = vpop.f32.mrf.mxu0
      %v1958 = vadd.f32 0.0, %v1957
      %v1959 = vpop.f32.mrf.mxu0
      %v1960 = vpop.f32.mrf.mxu0
      %v1961 = vadd.f32 0.0, %v1960
      %v1962 = vpop.f32.mrf.mxu0
      %1963 = vmatprep.mubr.bf16.mxu0 0
      %1964 = vmatmul.mubr.bf16.gmra.mxu0 %v1854
      %v1965 = vpop.f32.mrf.mxu0
      %v1966 = vadd.f32 0.0, %v1965
      %v1967 = vpop.f32.mrf.mxu0
      %v1968 = vpop.f32.mrf.mxu0
      %v1969 = vadd.f32 0.0, %v1968
      %v1970 = vpop.f32.mrf.mxu0
      %1971 = vdwg.mxu0
      %v1972 = vadd.f32 %v1810, %v1942
      %v1973 = vadd.f32 %v1811, %v1945
      %v1974 = vadd.f32 %v1812, %v1950
      %v1975 = vadd.f32 %v1813, %v1953
      %v1976 = vadd.f32 %v1814, %v1958
      %v1977 = vadd.f32 %v1815, %v1961
      %v1978 = vadd.f32 %v1816, %v1966
      %v1979 = vadd.f32 %v1817, %v1969
      %1980 = vst [vmem:[#allocation2] sm:$0xff] %v1972
      %1981 = vst [vmem:[#allocation2 + $0x8] sm:$0xff] %v1973
      %1982 = vst [vmem:[#allocation2 + $0x10] sm:$0xff] %v1974
      %1983 = vst [vmem:[#allocation2 + $0x18] sm:$0xff] %v1975
      %1984 = vst [vmem:[#allocation2 + $0x20] sm:$0xff] %v1976
      %1985 = vst [vmem:[#allocation2 + $0x28] sm:$0xff] %v1977
      %1986 = vst [vmem:[#allocation2 + $0x30] sm:$0xff] %v1978
      %1987 = vst [vmem:[#allocation2 + $0x38] sm:$0xff] %v1979
      %v1988 = vld [vmem:[%s1614] sm:$0xf]
      %v1989 = vld [vmem:[%s1614 + $0x4] sm:$0x1]
      %v1990 = vld [vmem:[%s1614 + $0x8] sm:$0xf]
      %v1991 = vld [vmem:[%s1614 + $0xc] sm:$0x1]
      %v1992 = vld [vmem:[%s1614 + $0x10] sm:$0xf]
      %v1993 = vld [vmem:[%s1614 + $0x14] sm:$0x1]
      %v1994 = vld [vmem:[%s1614 + $0x18] sm:$0xf]
      %v1995 = vld [vmem:[%s1614 + $0x1c] sm:$0x1]
      %v1996 = vld [vmem:[%s1614 + $0x20] sm:$0xf]
      %v1997 = vld [vmem:[%s1614 + $0x24] sm:$0x1]
      %v1998 = vld [vmem:[%s1614 + $0x28] sm:$0xf]
      %v1999 = vld [vmem:[%s1614 + $0x2c] sm:$0x1]
      %v2000 = vld [vmem:[%s1614 + $0x30] sm:$0xf]
      %v2001 = vld [vmem:[%s1614 + $0x34] sm:$0x1]
      %v2002 = vld [vmem:[%s1614 + $0x38] sm:$0xf]
      %v2003 = vld [vmem:[%s1614 + $0x3c] sm:$0x1]
      %v2005 = vshrl.u32 %v1988, 16
      %v2007 = vrot.slane %v2005, 4
      %v2008 = vshll.u32 %v1988, 16
      %v2010 = vrot.slane %v2008, 5
      %v2011 = vor.u32 %v2007, %v2010
      %v2012 = vrot.slane %v2011, 4
      %v2014 = vshll.u32 %v1989, 16
      %v2016 = vrot.slane %v2014, 5
      %v2017 = vsel %vm659, %v2012, %v2016
      %v2019 = vshrl.u32 %v1990, 16
      %v2021 = vrot.slane %v2019, 4
      %v2022 = vshll.u32 %v1990, 16
      %v2024 = vrot.slane %v2022, 5
      %v2025 = vor.u32 %v2021, %v2024
      %v2026 = vrot.slane %v2025, 4
      %v2028 = vshll.u32 %v1991, 16
      %v2030 = vrot.slane %v2028, 5
      %v2031 = vsel %vm659, %v2026, %v2030
      %v2033 = vshrl.u32 %v1992, 16
      %v2035 = vrot.slane %v2033, 4
      %v2036 = vshll.u32 %v1992, 16
      %v2038 = vrot.slane %v2036, 5
      %v2039 = vor.u32 %v2035, %v2038
      %v2040 = vrot.slane %v2039, 4
      %v2042 = vshll.u32 %v1993, 16
      %v2044 = vrot.slane %v2042, 5
      %v2045 = vsel %vm659, %v2040, %v2044
      %v2047 = vshrl.u32 %v1994, 16
      %v2049 = vrot.slane %v2047, 4
      %v2050 = vshll.u32 %v1994, 16
      %v2052 = vrot.slane %v2050, 5
      %v2053 = vor.u32 %v2049, %v2052
      %v2054 = vrot.slane %v2053, 4
      %v2056 = vshll.u32 %v1995, 16
      %v2058 = vrot.slane %v2056, 5
      %v2059 = vsel %vm659, %v2054, %v2058
      %v2061 = vshrl.u32 %v1996, 16
      %v2063 = vrot.slane %v2061, 4
      %v2064 = vshll.u32 %v1996, 16
      %v2066 = vrot.slane %v2064, 5
      %v2067 = vor.u32 %v2063, %v2066
      %v2068 = vrot.slane %v2067, 4
      %v2070 = vshll.u32 %v1997, 16
      %v2072 = vrot.slane %v2070, 5
      %v2073 = vsel %vm659, %v2068, %v2072
      %v2075 = vshrl.u32 %v1998, 16
      %v2077 = vrot.slane %v2075, 4
      %v2078 = vshll.u32 %v1998, 16
      %v2080 = vrot.slane %v2078, 5
      %v2081 = vor.u32 %v2077, %v2080
      %v2082 = vrot.slane %v2081, 4
      %v2084 = vshll.u32 %v1999, 16
      %v2086 = vrot.slane %v2084, 5
      %v2087 = vsel %vm659, %v2082, %v2086
      %v2089 = vshrl.u32 %v2000, 16
      %v2091 = vrot.slane %v2089, 4
      %v2092 = vshll.u32 %v2000, 16
      %v2094 = vrot.slane %v2092, 5
      %v2095 = vor.u32 %v2091, %v2094
      %v2096 = vrot.slane %v2095, 4
      %v2098 = vshll.u32 %v2001, 16
      %v2100 = vrot.slane %v2098, 5
      %v2101 = vsel %vm659, %v2096, %v2100
      %v2103 = vshrl.u32 %v2002, 16
      %v2105 = vrot.slane %v2103, 4
      %v2106 = vshll.u32 %v2002, 16
      %v2108 = vrot.slane %v2106, 5
      %v2109 = vor.u32 %v2105, %v2108
      %v2110 = vrot.slane %v2109, 4
      %v2112 = vshll.u32 %v2003, 16
      %v2114 = vrot.slane %v2112, 5
      %v2115 = vsel %vm659, %v2110, %v2114
      %v2116 = vld [vmem:[#allocation2] sm:$0xff]
      %v2117 = vld [vmem:[#allocation2 + $0x8] sm:$0xff]
      %v2118 = vld [vmem:[#allocation2 + $0x10] sm:$0xff]
      %v2119 = vld [vmem:[#allocation2 + $0x18] sm:$0xff]
      %v2120 = vld [vmem:[#allocation2 + $0x20] sm:$0xff]
      %v2121 = vld [vmem:[#allocation2 + $0x28] sm:$0xff]
      %v2122 = vld [vmem:[#allocation2 + $0x30] sm:$0xff]
      %v2123 = vld [vmem:[#allocation2 + $0x38] sm:$0xff]
      %s2124 = scalar_lea.vmem %s243, 512
      %v2125 = vld [vmem:[%s2124] sm:$0xf]
      %v2126 = vld [vmem:[%s2124 + $0x4] sm:$0xf]
      %v2127 = vld [vmem:[%s2124 + $0x8] sm:$0xf]
      %v2128 = vld [vmem:[%s2124 + $0xc] sm:$0xf]
      %v2129 = vld [vmem:[%s2124 + $0x10] sm:$0xf]
      %v2130 = vld [vmem:[%s2124 + $0x14] sm:$0xf]
      %v2131 = vld [vmem:[%s2124 + $0x18] sm:$0xf]
      %v2132 = vld [vmem:[%s2124 + $0x1c] sm:$0xf]
      %v2133 = vld [vmem:[%s2124 + $0x20] sm:$0xf]
      %v2134 = vld [vmem:[%s2124 + $0x24] sm:$0xf]
      %v2135 = vld [vmem:[%s2124 + $0x28] sm:$0xf]
      %v2136 = vld [vmem:[%s2124 + $0x2c] sm:$0xf]
      %v2137 = vld [vmem:[%s2124 + $0x30] sm:$0xf]
      %v2138 = vld [vmem:[%s2124 + $0x34] sm:$0xf]
      %v2139 = vld [vmem:[%s2124 + $0x38] sm:$0xf]
      %v2140 = vld [vmem:[%s2124 + $0x3c] sm:$0xf]
      %v2141 = vunpack.c.l.b16 %v2017
      %v2142 = vunpack.c.l.b16 %v2031
      %v2143 = vunpack.c.l.b16 %v2045
      %v2144 = vunpack.c.l.b16 %v2059
      %v2145 = vunpack.c.l.b16 %v2073
      %v2146 = vunpack.c.l.b16 %v2087
      %v2147 = vunpack.c.l.b16 %v2101
      %v2148 = vunpack.c.l.b16 %v2115
      %v2149 = vpack.c.b16 %v2142, %v2141
      %v2150 = vpack.c.b16 %v2144, %v2143
      %v2151 = vpack.c.b16 %v2146, %v2145
      %v2152 = vpack.c.b16 %v2148, %v2147
      %v2173 = vunpack.c.l.b16 %v2125
      %v2174 = vunpack.c.l.b16 %v2126
      %v2175 = vunpack.c.l.b16 %v2127
      %v2176 = vunpack.c.l.b16 %v2128
      %v2177 = vunpack.c.l.b16 %v2129
      %v2178 = vunpack.c.l.b16 %v2130
      %v2179 = vunpack.c.l.b16 %v2131
      %v2180 = vunpack.c.l.b16 %v2132
      %v2181 = vunpack.c.l.b16 %v2133
      %v2182 = vunpack.c.l.b16 %v2134
      %v2183 = vunpack.c.l.b16 %v2135
      %v2184 = vunpack.c.l.b16 %v2136
      %v2185 = vunpack.c.l.b16 %v2137
      %v2186 = vunpack.c.l.b16 %v2138
      %v2187 = vunpack.c.l.b16 %v2139
      %v2188 = vunpack.c.l.b16 %v2140
      %v2189 = vpack.c.b16 %v2174, %v2173
      %v2190 = vpack.c.b16 %v2176, %v2175
      %v2191 = vpack.c.b16 %v2178, %v2177
      %v2192 = vpack.c.b16 %v2180, %v2179
      %v2193 = vpack.c.b16 %v2182, %v2181
      %v2194 = vpack.c.b16 %v2184, %v2183
      %v2195 = vpack.c.b16 %v2186, %v2185
      %v2196 = vpack.c.b16 %v2188, %v2187
      %2205 = vmatprep.subr.bf16.mxu0 0
      %2206 = vmatpush1.bf16.msra.mxu0 %v2196
      %2207 = vmatprep.subr.bf16.mxu0 0
      %2208 = vmatpush1.bf16.msra.mxu0 %v2195
      %2209 = vmatprep.subr.bf16.mxu0 0
      %2210 = vmatpush1.bf16.msra.mxu0 %v2194
      %2211 = vmatprep.subr.bf16.mxu0 0
      %2212 = vmatpush1.bf16.msra.mxu0 %v2193
      %2213 = vmatprep.subr.bf16.mxu0 0
      %2214 = vmatpush1.bf16.msra.mxu0 %v2192
      %2215 = vmatprep.subr.bf16.mxu0 0
      %2216 = vmatpush1.bf16.msra.mxu0 %v2191
      %2217 = vmatprep.subr.bf16.mxu0 0
      %2218 = vmatpush1.bf16.msra.mxu0 %v2190
      %2219 = vmatprep.subr.bf16.mxu0 0
      %2220 = vmatpush1.bf16.msra.mxu0 %v2189
      %2221 = vmatprep.subr.bf16.mxu0 0
      %2222 = vmatpush2.bf16.msra.mxu0 0
      %2223 = vmatprep.subr.bf16.mxu0 0
      %2224 = vmatpush2.bf16.msra.mxu0 0
      %2225 = vmatprep.subr.bf16.mxu0 0
      %2226 = vmatpush2.bf16.msra.mxu0 0
      %2227 = vmatprep.subr.bf16.mxu0 0
      %2228 = vmatpush2.bf16.msra.mxu0 0
      %2229 = vmatprep.subr.bf16.mxu0 0
      %2230 = vmatpush2.bf16.msra.mxu0 0
      %2231 = vmatprep.subr.bf16.mxu0 0
      %2232 = vmatpush2.bf16.msra.mxu0 0
      %2233 = vmatprep.subr.bf16.mxu0 0
      %2234 = vmatpush2.bf16.msra.mxu0 0
      %2235 = vmatprep.subr.bf16.mxu0 0
      %2236 = vmatpush2.bf16.msra.mxu0 0
      %2237 = vmatprep.mubr.bf16.mxu0 0
      %2238 = vmatmul.mubr.bf16.gmra.mxu0 %v2149
      %v2239 = vpop.f32.mrf.mxu0
      %v2240 = vadd.f32 0.0, %v2239
      %v2241 = vpop.f32.mrf.mxu0
      %v2242 = vpop.f32.mrf.mxu0
      %v2243 = vadd.f32 0.0, %v2242
      %v2244 = vpop.f32.mrf.mxu0
      %2245 = vmatprep.mubr.bf16.mxu0 0
      %2246 = vmatmul.mubr.bf16.gmra.mxu0 %v2150
      %v2247 = vpop.f32.mrf.mxu0
      %v2248 = vadd.f32 0.0, %v2247
      %v2249 = vpop.f32.mrf.mxu0
      %v2250 = vpop.f32.mrf.mxu0
      %v2251 = vadd.f32 0.0, %v2250
      %v2252 = vpop.f32.mrf.mxu0
      %2253 = vmatprep.mubr.bf16.mxu0 0
      %2254 = vmatmul.mubr.bf16.gmra.mxu0 %v2151
      %v2255 = vpop.f32.mrf.mxu0
      %v2256 = vadd.f32 0.0, %v2255
      %v2257 = vpop.f32.mrf.mxu0
      %v2258 = vpop.f32.mrf.mxu0
      %v2259 = vadd.f32 0.0, %v2258
      %v2260 = vpop.f32.mrf.mxu0
      %2261 = vmatprep.mubr.bf16.mxu0 0
      %2262 = vmatmul.mubr.bf16.gmra.mxu0 %v2152
      %v2263 = vpop.f32.mrf.mxu0
      %v2264 = vadd.f32 0.0, %v2263
      %v2265 = vpop.f32.mrf.mxu0
      %v2266 = vpop.f32.mrf.mxu0
      %v2267 = vadd.f32 0.0, %v2266
      %v2268 = vpop.f32.mrf.mxu0
      %2269 = vdwg.mxu0
      %v2270 = vadd.f32 %v2116, %v2240
      %v2271 = vadd.f32 %v2117, %v2243
      %v2272 = vadd.f32 %v2118, %v2248
      %v2273 = vadd.f32 %v2119, %v2251
      %v2274 = vadd.f32 %v2120, %v2256
      %v2275 = vadd.f32 %v2121, %v2259
      %v2276 = vadd.f32 %v2122, %v2264
      %v2277 = vadd.f32 %v2123, %v2267
      %2278 = vst [vmem:[#allocation2] sm:$0xff] %v2270
      %2279 = vst [vmem:[#allocation2 + $0x8] sm:$0xff] %v2271
      %2280 = vst [vmem:[#allocation2 + $0x10] sm:$0xff] %v2272
      %2281 = vst [vmem:[#allocation2 + $0x18] sm:$0xff] %v2273
      %2282 = vst [vmem:[#allocation2 + $0x20] sm:$0xff] %v2274
      %2283 = vst [vmem:[#allocation2 + $0x28] sm:$0xff] %v2275
      %2284 = vst [vmem:[#allocation2 + $0x30] sm:$0xff] %v2276
      %2285 = vst [vmem:[#allocation2 + $0x38] sm:$0xff] %v2277
      // Predicated region
      $region37: #{basic_block_forward.3} parent=31 // pred_check
        %p2286 = pneg %p257
      $region38: #{basic_block_forward.3} parent=31 // pred_check_branch
        %2288 = sbr.rel (%p2286) target = $region40
      $region39: #{basic_block_forward.3} parent=31 // pred_region
        %v2289 = vld [vmem:[#allocation2] sm:$0xff]
        %v2290 = vld [vmem:[#allocation2 + $0x8] sm:$0xff]
        %v2291 = vld [vmem:[#allocation2 + $0x10] sm:$0xff]
        %v2292 = vld [vmem:[#allocation2 + $0x18] sm:$0xff]
        %v2293 = vld [vmem:[#allocation2 + $0x20] sm:$0xff]
        %v2294 = vld [vmem:[#allocation2 + $0x28] sm:$0xff]
        %v2295 = vld [vmem:[#allocation2 + $0x30] sm:$0xff]
        %v2296 = vld [vmem:[#allocation2 + $0x38] sm:$0xff]
        %v2297 = vld [vmem:[%s247] sm:$0x1]
        %v2299 = vlaneseq
        %v2300 = vshrl.u32 %v2299, 7
        %v2301 = vsub.s32 0, %v2300
        %v2302 = vrot.slane %v2297, %v2301
        %v2304 = vadd.f32 %v2289, %v2302
        %v2305 = vadd.f32 %v2290, %v2302
        %v2306 = vadd.f32 %v2291, %v2302
        %v2307 = vadd.f32 %v2292, %v2302
        %v2308 = vadd.f32 %v2293, %v2302
        %v2309 = vadd.f32 %v2294, %v2302
        %v2310 = vadd.f32 %v2295, %v2302
        %v2311 = vadd.f32 %v2296, %v2302
        %v2312 = vmax.f32 %v2304, 0.0
        %v2313 = vmax.f32 %v2305, 0.0
        %v2314 = vmax.f32 %v2306, 0.0
        %v2315 = vmax.f32 %v2307, 0.0
        %v2316 = vmax.f32 %v2308, 0.0
        %v2317 = vmax.f32 %v2309, 0.0
        %v2318 = vmax.f32 %v2310, 0.0
        %v2319 = vmax.f32 %v2311, 0.0
        %v2320 = vpack.c.bf16 %v2313, %v2312
        %v2321 = vpack.c.bf16 %v2315, %v2314
        %v2322 = vpack.c.bf16 %v2317, %v2316
        %v2323 = vpack.c.bf16 %v2319, %v2318
        %v2328 = vunpack.c.l.b16 %v2320
        %v2329 = vunpack.c.h.b16 %v2320
        %v2330 = vunpack.c.l.b16 %v2321
        %v2331 = vunpack.c.h.b16 %v2321
        %v2332 = vunpack.c.l.b16 %v2322
        %v2333 = vunpack.c.h.b16 %v2322
        %v2334 = vunpack.c.l.b16 %v2323
        %v2335 = vunpack.c.h.b16 %v2323
        %v2336 = vpack.c.b16 %v2328, %v2328
        %v2337 = vpack.c.b16 %v2329, %v2329
        %v2338 = vpack.c.b16 %v2330, %v2330
        %v2339 = vpack.c.b16 %v2331, %v2331
        %v2340 = vpack.c.b16 %v2332, %v2332
        %v2341 = vpack.c.b16 %v2333, %v2333
        %v2342 = vpack.c.b16 %v2334, %v2334
        %v2343 = vpack.c.b16 %v2335, %v2335
        %2352 = vst [vmem:[%s255] sm:$0xf] %v2336
        %2353 = vst [vmem:[%s255 + $0x4] sm:$0xf] %v2337
        %2354 = vst [vmem:[%s255 + $0x8] sm:$0xf] %v2338
        %2355 = vst [vmem:[%s255 + $0xc] sm:$0xf] %v2339
        %2356 = vst [vmem:[%s255 + $0x10] sm:$0xf] %v2340
        %2357 = vst [vmem:[%s255 + $0x14] sm:$0xf] %v2341
        %2358 = vst [vmem:[%s255 + $0x18] sm:$0xf] %v2342
        %2359 = vst [vmem:[%s255 + $0x1c] sm:$0xf] %v2343
      $region40: #{basic_block_forward.3} parent=31 // pred_fallthru
        _
      %p2360 = scmp.lt.s32.totalorder %s19, 1
      %s2361 = scalar_select %p2360, %s19, 1
      %p2362 = scmp.lt.s32.totalorder %s20, 0
      %s2363 = scalar_select %p2362, %s20, 0
      %s2364 = smul.addr %s2361, 8
      %s2365 = sadd.s32 %s2363, %s2364
      %s2366 = smul.addr %s2365, 4
      %s2367 = scalar_lea.vmem %s3, %s2366
      // Predicated region
      $region41: #{basic_block_forward.3} parent=31 // pred_check
        %p2368 = pneg %p135
      $region42: #{basic_block_forward.3} parent=31 // pred_check_branch
        %2370 = sbr.rel (%p2368) target = $region44
      $region43: #{basic_block_forward.3} parent=31 // pred_region
        _
      $region44: #{basic_block_forward.3} parent=31 // pred_fallthru
        _
    $region32: #{basic_block_forward.3} parent=5 // pred_fallthru
      _
    %p2371 = scmp.le.s32.totalorder 2, %s9
    // Predicated region
    $region45: #{basic_block_forward.3} parent=5 // pred_check
      %p2372 = pneg %p2371
    $region46: #{basic_block_forward.3} parent=5 // pred_check_branch
      %2374 = sbr.rel (%p2372) target = $region48
    $region47: #{basic_block_forward.3} parent=5 // pred_region
      %s2375 = ssub.s32 %s9, 2
      // Predicated region
      $region49: #{basic_block_forward.3} parent=47 // pred_check
        %p2376 = pneg %p141
      $region50: #{basic_block_forward.3} parent=47 // pred_check_branch
        %2378 = sbr.rel (%p2376) target = $region52
      $region51: #{basic_block_forward.3} parent=47 // pred_region
        %p2379 = scmp.lt.s32.totalorder %s22, 1
        %s2380 = scalar_select %p2379, %s22, 1
        %p2381 = scmp.lt.s32.totalorder %s23, 0
        %s2382 = scalar_select %p2381, %s23, 0
        %s2383 = smul.addr %s2380, 8
        %s2384 = sadd.s32 %s2382, %s2383
        %s2385 = smul.addr %s2384, 4
        %s2386 = scalar_lea.vmem %s3, %s2385
      $region52: #{basic_block_forward.3} parent=47 // pred_fallthru
        _
    $region48: #{basic_block_forward.3} parent=5 // pred_fallthru
      _
  $region6: #{basic_block_forward.3} parent=0 // loop_footer
    %s13 = sadd.s32 1, %s9
  $region7: #{basic_block_forward.3} parent=0 // loop_footer_branch
    %8 = sbr.rel target = $region3
  $region8: #{basic_block_forward.3} parent=0 // loop_exit
    _

// kernel: basic_block_forward.5
$region0: #{basic_block_forward.5}
  #allocation0 [shape = 'u32[]', space=smem, size = 0x4, offset = 0x4, fixed_abs, tag = 'smem constant byte address 0x4 - core index']
  #allocation1 [shape = 'u32[144,128]{1,0:T(1,128)}', space=vmem, size = 0x12000, scoped, tag = 'internal scratch']
  #allocation2 [shape = 'f32[64,128]{1,0:T(8,128)}', space=vmem, size = 0x8000, scoped, tag = 'scratch operand']
  %s0 = inlined_call_operand.vmem [shape: bf16[2,1,10,10,128], index: 0, kind: input, shape index: {}]
  %s1 = inlined_call_operand.vmem [shape: bf16[3,3,128,128], index: 1, kind: input, shape index: {}]
  %s2 = inlined_call_operand.vmem [shape: f32[1,128], index: 2, kind: input, shape index: {}]
  %s3 = inlined_call_operand.vmem [shape: bf16[2,64,128], index: 3, kind: input, shape index: {}]
  %s4 = inlined_call_operand.vmem [shape: f32[2,64,128], index: 4, kind: output, shape index: {}]
  %s5 = sld [smem:[#allocation0]]
  $region57: #{basic_block_forward.5} parent=0
    _
  %s7 = ssub.s32 1, %s5
  %s8 = scalar_select 0, %s7, %s5
  loop: start=0, step=1, limit=4
  $region2: #{basic_block_forward.5} parent=0 // loop_pre_header
    _
  $region3: #{basic_block_forward.5} parent=0 // loop_header
    %s10 = sphi 0, %s14
    %p11 = scmp.ge.s32.totalorder %s10, 4
    %s17 = sphi 0, %s36
    %s18 = sphi 0, %s32
    %s19 = sphi 0, %s28
    %s20 = sphi 0, %s17
    %s21 = sphi 0, %s18
    %s22 = sphi 0, %s19
    %s23 = sphi 0, %s20
    %s24 = sphi 0, %s21
    %s25 = sphi 0, %s22
    %s41 = sphi 0, %s43
    %s44 = sphi 0, %s41
    %s45 = sphi 0, %s44
    %s61 = sphi 0, %s45
    %s69 = sphi 0, %s71
    %s72 = sphi 0, %s69
    %s73 = sphi 0, %s72
    %s89 = sphi 0, %s73
    %s95 = sphi 0, %s97
    %s98 = sphi 0, %s95
    %s99 = sphi 0, %s98
    %s115 = sphi 0, %s99
    %s123 = sphi 0, %s125
    %s126 = sphi 0, %s123
    %s127 = sphi 0, %s126
    %s143 = sphi 0, %s127
    %s151 = sphi 0, %s153
    %s154 = sphi 0, %s151
    %s155 = sphi 0, %s154
    %s171 = sphi 0, %s155
  $region4: #{basic_block_forward.5} parent=0 // loop_header_branch
    %13 = sbr.rel (%p11) target = $region8
  $region5: #{basic_block_forward.5} parent=0 // loop_body
    %s15 = ssub.s32 %s10, 1
    %s16 = ssub.s32 %s10, 2
    %s26 = sadd.s32 1, %s19
    %p27 = scmp.ge.s32.totalorder %s26, 1
    %s28 = scalar_select %p27, 0, %s26
    %s29 = sadd.s32 1, %s18
    %s30 = scalar_select %p27, %s29, %s18
    %p31 = scmp.ge.s32.totalorder %s30, 1
    %s32 = scalar_select %p31, 0, %s30
    %s33 = sadd.s32 1, %s17
    %s34 = scalar_select %p31, %s33, %s17
    %p35 = scmp.ge.s32.totalorder %s34, 2
    %s36 = scalar_select %p35, 0, %s34
    %s37 = ssub.s32 %s17, %s36
    %s38 = ssub.s32 %s19, %s28
    %s39 = sor.u32 %s37, %s38
    %p40 = scmp.eq.s32.totalorder %s39, 0
    %s42 = sadd.s32 %s41, 1
    %s43 = scalar_select %p40, %s41, %s42
    %p46 = pneg %p40
    %p47 = scmp.eq.s32.totalorder %s10, 1
    %p48 = por %p46, %p47
    %p49 = scmp.ne.s32.totalorder %s41, %s44
    %p50 = scmp.eq.s32.totalorder %s10, 0
    %p51 = por %p49, %p50
    %p52 = scmp.ne.s32.totalorder %s41, %s44
    %p53 = scmp.eq.s32.totalorder %s15, 1
    %p54 = por %p52, %p53
    %p55 = scmp.ne.s32.totalorder %s44, %s45
    %p56 = scmp.eq.s32.totalorder %s15, 0
    %p57 = por %p55, %p56
    %p58 = scmp.ne.s32.totalorder %s44, %s45
    %p59 = scmp.eq.s32.totalorder %s16, 1
    %p60 = por %p58, %p59
    %p62 = scmp.ne.s32.totalorder %s45, %s61
    %p63 = scmp.eq.s32.totalorder %s16, 0
    %p64 = por %p62, %p63
    %s65 = ssub.s32 %s19, %s28
    %s66 = ssub.s32 %s18, %s32
    %s67 = sor.u32 %s65, %s66
    %p68 = scmp.eq.s32.totalorder %s67, 0
    %s70 = sadd.s32 %s69, 1
    %s71 = scalar_select %p68, %s69, %s70
    %p74 = pneg %p68
    %p75 = scmp.eq.s32.totalorder %s10, 1
    %p76 = por %p74, %p75
    %p77 = scmp.ne.s32.totalorder %s69, %s72
    %p78 = scmp.eq.s32.totalorder %s10, 0
    %p79 = por %p77, %p78
    %p80 = scmp.ne.s32.totalorder %s69, %s72
    %p81 = scmp.eq.s32.totalorder %s15, 1
    %p82 = por %p80, %p81
    %p83 = scmp.ne.s32.totalorder %s72, %s73
    %p84 = scmp.eq.s32.totalorder %s15, 0
    %p85 = por %p83, %p84
    %p86 = scmp.ne.s32.totalorder %s72, %s73
    %p87 = scmp.eq.s32.totalorder %s16, 1
    %p88 = por %p86, %p87
    %p90 = scmp.ne.s32.totalorder %s73, %s89
    %p91 = scmp.eq.s32.totalorder %s16, 0
    %p92 = por %p90, %p91
    %s93 = ssub.s32 %s18, %s32
    %p94 = scmp.eq.s32.totalorder %s93, 0
    %s96 = sadd.s32 %s95, 1
    %s97 = scalar_select %p94, %s95, %s96
    %p100 = pneg %p94
    %p101 = scmp.eq.s32.totalorder %s10, 1
    %p102 = por %p100, %p101
    %p103 = scmp.ne.s32.totalorder %s95, %s98
    %p104 = scmp.eq.s32.totalorder %s10, 0
    %p105 = por %p103, %p104
    %p106 = scmp.ne.s32.totalorder %s95, %s98
    %p107 = scmp.eq.s32.totalorder %s15, 1
    %p108 = por %p106, %p107
    %p109 = scmp.ne.s32.totalorder %s98, %s99
    %p110 = scmp.eq.s32.totalorder %s15, 0
    %p111 = por %p109, %p110
    %p112 = scmp.ne.s32.totalorder %s98, %s99
    %p113 = scmp.eq.s32.totalorder %s16, 1
    %p114 = por %p112, %p113
    %p116 = scmp.ne.s32.totalorder %s99, %s115
    %p117 = scmp.eq.s32.totalorder %s16, 0
    %p118 = por %p116, %p117
    %s119 = ssub.s32 %s17, %s36
    %s120 = ssub.s32 %s18, %s32
    %s121 = sor.u32 %s119, %s120
    %p122 = scmp.eq.s32.totalorder %s121, 0
    %s124 = sadd.s32 %s123, 1
    %s125 = scalar_select %p122, %s123, %s124
    %p128 = pneg %p122
    %p129 = scmp.eq.s32.totalorder %s10, 1
    %p130 = por %p128, %p129
    %p131 = scmp.ne.s32.totalorder %s123, %s126
    %p132 = scmp.eq.s32.totalorder %s10, 0
    %p133 = por %p131, %p132
    %p134 = scmp.ne.s32.totalorder %s123, %s126
    %p135 = scmp.eq.s32.totalorder %s15, 1
    %p136 = por %p134, %p135
    %p137 = scmp.ne.s32.totalorder %s126, %s127
    %p138 = scmp.eq.s32.totalorder %s15, 0
    %p139 = por %p137, %p138
    %p140 = scmp.ne.s32.totalorder %s126, %s127
    %p141 = scmp.eq.s32.totalorder %s16, 1
    %p142 = por %p140, %p141
    %p144 = scmp.ne.s32.totalorder %s127, %s143
    %p145 = scmp.eq.s32.totalorder %s16, 0
    %p146 = por %p144, %p145
    %s147 = ssub.s32 %s17, %s36
    %s148 = ssub.s32 %s18, %s32
    %s149 = sor.u32 %s147, %s148
    %p150 = scmp.eq.s32.totalorder %s149, 0
    %s152 = sadd.s32 %s151, 1
    %s153 = scalar_select %p150, %s151, %s152
    %p156 = pneg %p150
    %p157 = scmp.eq.s32.totalorder %s10, 1
    %p158 = por %p156, %p157
    %p159 = scmp.ne.s32.totalorder %s151, %s154
    %p160 = scmp.eq.s32.totalorder %s10, 0
    %p161 = por %p159, %p160
    %p162 = scmp.ne.s32.totalorder %s151, %s154
    %p163 = scmp.eq.s32.totalorder %s15, 1
    %p164 = por %p162, %p163
    %p165 = scmp.ne.s32.totalorder %s154, %s155
    %p166 = scmp.eq.s32.totalorder %s15, 0
    %p167 = por %p165, %p166
    %p168 = scmp.ne.s32.totalorder %s154, %s155
    %p169 = scmp.eq.s32.totalorder %s16, 1
    %p170 = por %p168, %p169
    %p172 = scmp.ne.s32.totalorder %s155, %s171
    %p173 = scmp.eq.s32.totalorder %s16, 0
    %p174 = por %p172, %p173
    %p175 = scmp.le.s32.totalorder 1, %s10
    %p176 = scmp.lt.s32.totalorder %s10, 3
    %p177 = pnand %p175, %p176
    %p178 = pneg %p177
    // Predicated region
    $region9: #{basic_block_forward.5} parent=5 // pred_check
      _
    $region10: #{basic_block_forward.5} parent=5 // pred_check_branch
      %180 = sbr.rel (%p177) target = $region12
    $region11: #{basic_block_forward.5} parent=5 // pred_region
      %s181 = ssub.s32 %s10, 1
      // Predicated region
      $region13: #{basic_block_forward.5} parent=11 // pred_check
        %p182 = pneg %p85
      $region14: #{basic_block_forward.5} parent=11 // pred_check_branch
        %184 = sbr.rel (%p182) target = $region16
      $region15: #{basic_block_forward.5} parent=11 // pred_region
        %s185 = smul.u32 16, %s22
        %p186 = scmp.lt.s32.totalorder %s185, 15
        %s187 = scalar_select %p186, %s185, 15
        %p188 = scmp.lt.s32.totalorder %s21, 0
        %s189 = scalar_select %p188, %s21, 0
        %s190 = sadd.s32 %s189, %s187
        %s191 = smul.addr %s190, 4
        %s192 = scalar_lea.vmem %s1, %s191
        %s193 = smul.u32 16, %s22
      $region16: #{basic_block_forward.5} parent=11 // pred_fallthru
        _
      // Predicated region
      $region17: #{basic_block_forward.5} parent=11 // pred_check
        %p194 = pneg %p111
      $region18: #{basic_block_forward.5} parent=11 // pred_check_branch
        %196 = sbr.rel (%p194) target = $region20
      $region19: #{basic_block_forward.5} parent=11 // pred_region
        %p197 = scmp.lt.s32.totalorder %s21, 0
        %s198 = scalar_select %p197, %s21, 0
        %s199 = scalar_lea.vmem %s2, %s198
      $region20: #{basic_block_forward.5} parent=11 // pred_fallthru
        _
    $region12: #{basic_block_forward.5} parent=5 // pred_fallthru
      _
    %p200 = scmp.lt.s32.totalorder %s10, 2
    // Predicated region
    $region21: #{basic_block_forward.5} parent=5 // pred_check
      %p201 = pneg %p200
    $region22: #{basic_block_forward.5} parent=5 // pred_check_branch
      %203 = sbr.rel (%p201) target = $region24
    $region23: #{basic_block_forward.5} parent=5 // pred_region
      // Predicated region
      $region25: #{basic_block_forward.5} parent=23 // pred_check
        %p204 = pneg %p51
      $region26: #{basic_block_forward.5} parent=23 // pred_check_branch
        %206 = sbr.rel (%p204) target = $region28
      $region27: #{basic_block_forward.5} parent=23 // pred_region
        %p207 = scmp.lt.s32.totalorder %s17, 1
        %s208 = scalar_select %p207, %s17, 1
        %p209 = scmp.lt.s32.totalorder %s19, 0
        %s210 = scalar_select %p209, %s19, 0
        %s211 = smul.addr %s208, 20
        %s212 = sadd.s32 %s210, %s211
        %s213 = smul.addr %s212, 4
        %s214 = scalar_lea.vmem %s0, %s213
      $region28: #{basic_block_forward.5} parent=23 // pred_fallthru
        _
      // Predicated region
      $region29: #{basic_block_forward.5} parent=23 // pred_check
        %p215 = pneg %p133
      $region30: #{basic_block_forward.5} parent=23 // pred_check_branch
        %217 = sbr.rel (%p215) target = $region32
      $region31: #{basic_block_forward.5} parent=23 // pred_region
        %p218 = scmp.lt.s32.totalorder %s17, 1
        %s219 = scalar_select %p218, %s17, 1
        %p220 = scmp.lt.s32.totalorder %s18, 0
        %s221 = scalar_select %p220, %s18, 0
        %s222 = smul.addr %s219, 8
        %s223 = sadd.s32 %s221, %s222
        %s224 = smul.addr %s223, 4
        %s225 = scalar_lea.vmem %s3, %s224
      $region32: #{basic_block_forward.5} parent=23 // pred_fallthru
        _
    $region24: #{basic_block_forward.5} parent=5 // pred_fallthru
      _
    %p226 = scmp.le.s32.totalorder 1, %s10
    %p227 = scmp.lt.s32.totalorder %s10, 3
    %p228 = pnand %p226, %p227
    %p229 = pneg %p228
    // Predicated region
    $region33: #{basic_block_forward.5} parent=5 // pred_check
      _
    $region34: #{basic_block_forward.5} parent=5 // pred_check_branch
      %231 = sbr.rel (%p228) target = $region36
    $region35: #{basic_block_forward.5} parent=5 // pred_region
      %s232 = ssub.s32 %s10, 1
      %p233 = scmp.lt.s32.totalorder %s20, 1
      %s234 = scalar_select %p233, %s20, 1
      %p235 = scmp.lt.s32.totalorder %s22, 0
      %s236 = scalar_select %p235, %s22, 0
      %s237 = smul.addr %s234, 20
      %s238 = sadd.s32 %s236, %s237
      %s239 = smul.addr %s238, 4
      %s240 = scalar_lea.vmem %s0, %s239
      %p241 = pneg %p57
      %p242 = pneg %p54
      %s243 = smul.u32 16, %s22
      %p244 = scmp.lt.s32.totalorder %s243, 15
      %s245 = scalar_select %p244, %s243, 15
      %p246 = scmp.lt.s32.totalorder %s21, 0
      %s247 = scalar_select %p246, %s21, 0
      %s248 = sadd.s32 %s247, %s245
      %s249 = smul.addr %s248, 4
      %s250 = scalar_lea.vmem %s1, %s249
      %p251 = pneg %p85
      %p252 = pneg %p82
      %p253 = scmp.lt.s32.totalorder %s21, 0
      %s254 = scalar_select %p253, %s21, 0
      %s255 = scalar_lea.vmem %s2, %s254
      %p256 = pneg %p111
      %p257 = pneg %p108
      %p258 = scmp.lt.s32.totalorder %s20, 1
      %s259 = scalar_select %p258, %s20, 1
      %p260 = scmp.lt.s32.totalorder %s21, 0
      %s261 = scalar_select %p260, %s21, 0
      %s262 = smul.addr %s259, 8
      %s263 = sadd.s32 %s261, %s262
      %s264 = smul.addr %s263, 4
      %s265 = scalar_lea.vmem %s3, %s264
      %p266 = pneg %p139
      %p267 = pneg %p136
      %p268 = pneg %p167
      %p269 = pneg %p164
      %p270 = scmp.lt.s32.totalorder %s20, 1
      %s271 = scalar_select %p270, %s20, 1
      %p272 = scmp.lt.s32.totalorder %s21, 0
      %s273 = scalar_select %p272, %s21, 0
      %s274 = smul.addr %s271, 8
      %s275 = sadd.s32 %s273, %s274
      %s276 = smul.addr %s275, 8
      %s277 = scalar_lea.vmem %s4, %s276
      %p278 = scmp.lt.s32.totalorder %s20, 1
      %s279 = scalar_select %p278, %s20, 1
      %p280 = scmp.lt.s32.totalorder %s22, 0
      %s281 = scalar_select %p280, %s22, 0
      %s282 = smul.addr %s279, 20
      %s283 = sadd.s32 %s281, %s282
      %s284 = smul.addr %s283, 4
      %s285 = scalar_lea.vmem %s0, %s284
      %s286 = smul.u32 16, %s22
      %p287 = scmp.lt.s32.totalorder %s286, 15
      %s288 = scalar_select %p287, %s286, 15
      %p289 = scmp.lt.s32.totalorder %s21, 0
      %s290 = scalar_select %p289, %s21, 0
      %s291 = sadd.s32 %s290, %s288
      %s292 = smul.addr %s291, 4
      %s293 = scalar_lea.vmem %s1, %s292
      %s294 = smul.u32 16, %s22
      %p295 = scmp.lt.s32.totalorder %s21, 0
      %s296 = scalar_select %p295, %s21, 0
      %s297 = scalar_lea.vmem %s2, %s296
      %p298 = scmp.lt.s32.totalorder %s20, 1
      %s299 = scalar_select %p298, %s20, 1
      %p300 = scmp.lt.s32.totalorder %s21, 0
      %s301 = scalar_select %p300, %s21, 0
      %s302 = smul.addr %s299, 8
      %s303 = sadd.s32 %s301, %s302
      %s304 = smul.addr %s303, 4
      %s305 = scalar_lea.vmem %s3, %s304
      %p306 = scmp.lt.s32.totalorder %s20, 1
      %s307 = scalar_select %p306, %s20, 1
      %p308 = scmp.lt.s32.totalorder %s21, 0
      %s309 = scalar_select %p308, %s21, 0
      %s310 = smul.addr %s307, 8
      %s311 = sadd.s32 %s309, %s310
      %s312 = smul.addr %s311, 8
      %s313 = scalar_lea.vmem %s4, %s312
      %p315 = scmp.eq.s32.totalorder %s22, 0
      // Predicated region
      $region37: #{basic_block_forward.5} parent=35 // pred_check
        %p316 = pneg %p315
      $region38: #{basic_block_forward.5} parent=35 // pred_check_branch
        %318 = sbr.rel (%p316) target = $region40
      $region39: #{basic_block_forward.5} parent=35 // pred_region
        %319 = vst [vmem:[#allocation2] sm:$0xff] 0.0
        %320 = vst [vmem:[#allocation2 + $0x8] sm:$0xff] 0.0
        %321 = vst [vmem:[#allocation2 + $0x10] sm:$0xff] 0.0
        %322 = vst [vmem:[#allocation2 + $0x18] sm:$0xff] 0.0
        %323 = vst [vmem:[#allocation2 + $0x20] sm:$0xff] 0.0
        %324 = vst [vmem:[#allocation2 + $0x28] sm:$0xff] 0.0
        %325 = vst [vmem:[#allocation2 + $0x30] sm:$0xff] 0.0
        %326 = vst [vmem:[#allocation2 + $0x38] sm:$0xff] 0.0
      $region40: #{basic_block_forward.5} parent=35 // pred_fallthru
        _
      %v327 = vld [vmem:[%s285] sm:$0xf]
      %v328 = vld [vmem:[%s285 + $0x8] sm:$0xf]
      %v329 = vld [vmem:[%s285 + $0x10] sm:$0xf]
      %v330 = vld [vmem:[%s285 + $0x18] sm:$0xf]
      %v331 = vld [vmem:[%s285 + $0x20] sm:$0xf]
      %v332 = vld [vmem:[%s285 + $0x28] sm:$0xf]
      %v333 = vld [vmem:[%s285 + $0x30] sm:$0xf]
      %v334 = vld [vmem:[%s285 + $0x38] sm:$0xf]
      %v335 = vld [vmem:[#allocation2] sm:$0xff]
      %v336 = vld [vmem:[#allocation2 + $0x8] sm:$0xff]
      %v337 = vld [vmem:[#allocation2 + $0x10] sm:$0xff]
      %v338 = vld [vmem:[#allocation2 + $0x18] sm:$0xff]
      %v339 = vld [vmem:[#allocation2 + $0x20] sm:$0xff]
      %v340 = vld [vmem:[#allocation2 + $0x28] sm:$0xff]
      %v341 = vld [vmem:[#allocation2 + $0x30] sm:$0xff]
      %v342 = vld [vmem:[#allocation2 + $0x38] sm:$0xff]
      %v343 = vld [vmem:[%s293] sm:$0xf]
      %v344 = vld [vmem:[%s293 + $0x4] sm:$0xf]
      %v345 = vld [vmem:[%s293 + $0x8] sm:$0xf]
      %v346 = vld [vmem:[%s293 + $0xc] sm:$0xf]
      %v347 = vld [vmem:[%s293 + $0x10] sm:$0xf]
      %v348 = vld [vmem:[%s293 + $0x14] sm:$0xf]
      %v349 = vld [vmem:[%s293 + $0x18] sm:$0xf]
      %v350 = vld [vmem:[%s293 + $0x1c] sm:$0xf]
      %v351 = vld [vmem:[%s293 + $0x20] sm:$0xf]
      %v352 = vld [vmem:[%s293 + $0x24] sm:$0xf]
      %v353 = vld [vmem:[%s293 + $0x28] sm:$0xf]
      %v354 = vld [vmem:[%s293 + $0x2c] sm:$0xf]
      %v355 = vld [vmem:[%s293 + $0x30] sm:$0xf]
      %v356 = vld [vmem:[%s293 + $0x34] sm:$0xf]
      %v357 = vld [vmem:[%s293 + $0x38] sm:$0xf]
      %v358 = vld [vmem:[%s293 + $0x3c] sm:$0xf]
      %v367 = vunpack.c.l.b16 %v327
      %v368 = vunpack.c.l.b16 %v328
      %v369 = vunpack.c.l.b16 %v329
      %v370 = vunpack.c.l.b16 %v330
      %v371 = vunpack.c.l.b16 %v331
      %v372 = vunpack.c.l.b16 %v332
      %v373 = vunpack.c.l.b16 %v333
      %v374 = vunpack.c.l.b16 %v334
      %v375 = vpack.c.b16 %v368, %v367
      %v376 = vpack.c.b16 %v370, %v369
      %v377 = vpack.c.b16 %v372, %v371
      %v378 = vpack.c.b16 %v374, %v373
      %v399 = vunpack.c.l.b16 %v343
      %v400 = vunpack.c.l.b16 %v344
      %v401 = vunpack.c.l.b16 %v345
      %v402 = vunpack.c.l.b16 %v346
      %v403 = vunpack.c.l.b16 %v347
      %v404 = vunpack.c.l.b16 %v348
      %v405 = vunpack.c.l.b16 %v349
      %v406 = vunpack.c.l.b16 %v350
      %v407 = vunpack.c.l.b16 %v351
      %v408 = vunpack.c.l.b16 %v352
      %v409 = vunpack.c.l.b16 %v353
      %v410 = vunpack.c.l.b16 %v354
      %v411 = vunpack.c.l.b16 %v355
      %v412 = vunpack.c.l.b16 %v356
      %v413 = vunpack.c.l.b16 %v357
      %v414 = vunpack.c.l.b16 %v358
      %v415 = vpack.c.b16 %v400, %v399
      %v416 = vpack.c.b16 %v402, %v401
      %v417 = vpack.c.b16 %v404, %v403
      %v418 = vpack.c.b16 %v406, %v405
      %v419 = vpack.c.b16 %v408, %v407
      %v420 = vpack.c.b16 %v410, %v409
      %v421 = vpack.c.b16 %v412, %v411
      %v422 = vpack.c.b16 %v414, %v413
      %431 = vmatprep.subr.bf16.mxu0 0
      %432 = vmatpush1.bf16.msra.mxu0 %v422
      %433 = vmatprep.subr.bf16.mxu0 0
      %434 = vmatpush1.bf16.msra.mxu0 %v421
      %435 = vmatprep.subr.bf16.mxu0 0
      %436 = vmatpush1.bf16.msra.mxu0 %v420
      %437 = vmatprep.subr.bf16.mxu0 0
      %438 = vmatpush1.bf16.msra.mxu0 %v419
      %439 = vmatprep.subr.bf16.mxu0 0
      %440 = vmatpush1.bf16.msra.mxu0 %v418
      %441 = vmatprep.subr.bf16.mxu0 0
      %442 = vmatpush1.bf16.msra.mxu0 %v417
      %443 = vmatprep.subr.bf16.mxu0 0
      %444 = vmatpush1.bf16.msra.mxu0 %v416
      %445 = vmatprep.subr.bf16.mxu0 0
      %446 = vmatpush1.bf16.msra.mxu0 %v415
      %447 = vmatprep.subr.bf16.mxu0 0
      %448 = vmatpush2.bf16.msra.mxu0 0
      %449 = vmatprep.subr.bf16.mxu0 0
      %450 = vmatpush2.bf16.msra.mxu0 0
      %451 = vmatprep.subr.bf16.mxu0 0
      %452 = vmatpush2.bf16.msra.mxu0 0
      %453 = vmatprep.subr.bf16.mxu0 0
      %454 = vmatpush2.bf16.msra.mxu0 0
      %455 = vmatprep.subr.bf16.mxu0 0
      %456 = vmatpush2.bf16.msra.mxu0 0
      %457 = vmatprep.subr.bf16.mxu0 0
      %458 = vmatpush2.bf16.msra.mxu0 0
      %459 = vmatprep.subr.bf16.mxu0 0
      %460 = vmatpush2.bf16.msra.mxu0 0
      %461 = vmatprep.subr.bf16.mxu0 0
      %462 = vmatpush2.bf16.msra.mxu0 0
      %463 = vmatprep.mubr.bf16.mxu0 0
      %464 = vmatmul.mubr.bf16.gmra.mxu0 %v375
      %v465 = vpop.f32.mrf.mxu0
      %v466 = vadd.f32 0.0, %v465
      %v467 = vpop.f32.mrf.mxu0
      %v468 = vpop.f32.mrf.mxu0
      %v469 = vadd.f32 0.0, %v468
      %v470 = vpop.f32.mrf.mxu0
      %471 = vmatprep.mubr.bf16.mxu0 0
      %472 = vmatmul.mubr.bf16.gmra.mxu0 %v376
      %v473 = vpop.f32.mrf.mxu0
      %v474 = vadd.f32 0.0, %v473
      %v475 = vpop.f32.mrf.mxu0
      %v476 = vpop.f32.mrf.mxu0
      %v477 = vadd.f32 0.0, %v476
      %v478 = vpop.f32.mrf.mxu0
      %479 = vmatprep.mubr.bf16.mxu0 0
      %480 = vmatmul.mubr.bf16.gmra.mxu0 %v377
      %v481 = vpop.f32.mrf.mxu0
      %v482 = vadd.f32 0.0, %v481
      %v483 = vpop.f32.mrf.mxu0
      %v484 = vpop.f32.mrf.mxu0
      %v485 = vadd.f32 0.0, %v484
      %v486 = vpop.f32.mrf.mxu0
      %487 = vmatprep.mubr.bf16.mxu0 0
      %488 = vmatmul.mubr.bf16.gmra.mxu0 %v378
      %v489 = vpop.f32.mrf.mxu0
      %v490 = vadd.f32 0.0, %v489
      %v491 = vpop.f32.mrf.mxu0
      %v492 = vpop.f32.mrf.mxu0
      %v493 = vadd.f32 0.0, %v492
      %v494 = vpop.f32.mrf.mxu0
      %495 = vdwg.mxu0
      %v496 = vadd.f32 %v335, %v466
      %v497 = vadd.f32 %v336, %v469
      %v498 = vadd.f32 %v337, %v474
      %v499 = vadd.f32 %v338, %v477
      %v500 = vadd.f32 %v339, %v482
      %v501 = vadd.f32 %v340, %v485
      %v502 = vadd.f32 %v341, %v490
      %v503 = vadd.f32 %v342, %v493
      %504 = vst [vmem:[#allocation2] sm:$0xff] %v496
      %505 = vst [vmem:[#allocation2 + $0x8] sm:$0xff] %v497
      %506 = vst [vmem:[#allocation2 + $0x10] sm:$0xff] %v498
      %507 = vst [vmem:[#allocation2 + $0x18] sm:$0xff] %v499
      %508 = vst [vmem:[#allocation2 + $0x20] sm:$0xff] %v500
      %509 = vst [vmem:[#allocation2 + $0x28] sm:$0xff] %v501
      %510 = vst [vmem:[#allocation2 + $0x30] sm:$0xff] %v502
      %511 = vst [vmem:[#allocation2 + $0x38] sm:$0xff] %v503
      %v512 = vld [vmem:[%s285] sm:$0xf]
      %v513 = vld [vmem:[%s285 + $0x4] sm:$0x1]
      %v514 = vld [vmem:[%s285 + $0x8] sm:$0xf]
      %v515 = vld [vmem:[%s285 + $0xc] sm:$0x1]
      %v516 = vld [vmem:[%s285 + $0x10] sm:$0xf]
      %v517 = vld [vmem:[%s285 + $0x14] sm:$0x1]
      %v518 = vld [vmem:[%s285 + $0x18] sm:$0xf]
      %v519 = vld [vmem:[%s285 + $0x1c] sm:$0x1]
      %v520 = vld [vmem:[%s285 + $0x20] sm:$0xf]
      %v521 = vld [vmem:[%s285 + $0x24] sm:$0x1]
      %v522 = vld [vmem:[%s285 + $0x28] sm:$0xf]
      %v523 = vld [vmem:[%s285 + $0x2c] sm:$0x1]
      %v524 = vld [vmem:[%s285 + $0x30] sm:$0xf]
      %v525 = vld [vmem:[%s285 + $0x34] sm:$0x1]
      %v526 = vld [vmem:[%s285 + $0x38] sm:$0xf]
      %v527 = vld [vmem:[%s285 + $0x3c] sm:$0x1]
      %vm528 = vsmask.f32 3328
      %vm529 = vsmask.f32 7440
      %vm530 = vmor %vm528, %vm529
      %v532 = vshrl.u32 %v512, 16
      %v534 = vrot.slane %v532, 4
      %v535 = vshll.u32 %v512, 16
      %v537 = vrot.slane %v535, 5
      %v538 = vor.u32 %v534, %v537
      %v539 = vrot.slane %v538, 4
      %v541 = vshll.u32 %v513, 16
      %v543 = vrot.slane %v541, 5
      %v544 = vsel %vm530, %v539, %v543
      %v546 = vshrl.u32 %v514, 16
      %v548 = vrot.slane %v546, 4
      %v549 = vshll.u32 %v514, 16
      %v551 = vrot.slane %v549, 5
      %v552 = vor.u32 %v548, %v551
      %v553 = vrot.slane %v552, 4
      %v555 = vshll.u32 %v515, 16
      %v557 = vrot.slane %v555, 5
      %v558 = vsel %vm530, %v553, %v557
      %v560 = vshrl.u32 %v516, 16
      %v562 = vrot.slane %v560, 4
      %v563 = vshll.u32 %v516, 16
      %v565 = vrot.slane %v563, 5
      %v566 = vor.u32 %v562, %v565
      %v567 = vrot.slane %v566, 4
      %v569 = vshll.u32 %v517, 16
      %v571 = vrot.slane %v569, 5
      %v572 = vsel %vm530, %v567, %v571
      %v574 = vshrl.u32 %v518, 16
      %v576 = vrot.slane %v574, 4
      %v577 = vshll.u32 %v518, 16
      %v579 = vrot.slane %v577, 5
      %v580 = vor.u32 %v576, %v579
      %v581 = vrot.slane %v580, 4
      %v583 = vshll.u32 %v519, 16
      %v585 = vrot.slane %v583, 5
      %v586 = vsel %vm530, %v581, %v585
      %v588 = vshrl.u32 %v520, 16
      %v590 = vrot.slane %v588, 4
      %v591 = vshll.u32 %v520, 16
      %v593 = vrot.slane %v591, 5
      %v594 = vor.u32 %v590, %v593
      %v595 = vrot.slane %v594, 4
      %v597 = vshll.u32 %v521, 16
      %v599 = vrot.slane %v597, 5
      %v600 = vsel %vm530, %v595, %v599
      %v602 = vshrl.u32 %v522, 16
      %v604 = vrot.slane %v602, 4
      %v605 = vshll.u32 %v522, 16
      %v607 = vrot.slane %v605, 5
      %v608 = vor.u32 %v604, %v607
      %v609 = vrot.slane %v608, 4
      %v611 = vshll.u32 %v523, 16
      %v613 = vrot.slane %v611, 5
      %v614 = vsel %vm530, %v609, %v613
      %v616 = vshrl.u32 %v524, 16
      %v618 = vrot.slane %v616, 4
      %v619 = vshll.u32 %v524, 16
      %v621 = vrot.slane %v619, 5
      %v622 = vor.u32 %v618, %v621
      %v623 = vrot.slane %v622, 4
      %v625 = vshll.u32 %v525, 16
      %v627 = vrot.slane %v625, 5
      %v628 = vsel %vm530, %v623, %v627
      %v630 = vshrl.u32 %v526, 16
      %v632 = vrot.slane %v630, 4
      %v633 = vshll.u32 %v526, 16
      %v635 = vrot.slane %v633, 5
      %v636 = vor.u32 %v632, %v635
      %v637 = vrot.slane %v636, 4
      %v639 = vshll.u32 %v527, 16
      %v641 = vrot.slane %v639, 5
      %v642 = vsel %vm530, %v637, %v641
      %v643 = vld [vmem:[#allocation2] sm:$0xff]
      %v644 = vld [vmem:[#allocation2 + $0x8] sm:$0xff]
      %v645 = vld [vmem:[#allocation2 + $0x10] sm:$0xff]
      %v646 = vld [vmem:[#allocation2 + $0x18] sm:$0xff]
      %v647 = vld [vmem:[#allocation2 + $0x20] sm:$0xff]
      %v648 = vld [vmem:[#allocation2 + $0x28] sm:$0xff]
      %v649 = vld [vmem:[#allocation2 + $0x30] sm:$0xff]
      %v650 = vld [vmem:[#allocation2 + $0x38] sm:$0xff]
      %s651 = scalar_lea.vmem %s293, 64
      %v652 = vld [vmem:[%s651] sm:$0xf]
      %v653 = vld [vmem:[%s651 + $0x4] sm:$0xf]
      %v654 = vld [vmem:[%s651 + $0x8] sm:$0xf]
      %v655 = vld [vmem:[%s651 + $0xc] sm:$0xf]
      %v656 = vld [vmem:[%s651 + $0x10] sm:$0xf]
      %v657 = vld [vmem:[%s651 + $0x14] sm:$0xf]
      %v658 = vld [vmem:[%s651 + $0x18] sm:$0xf]
      %v659 = vld [vmem:[%s651 + $0x1c] sm:$0xf]
      %v660 = vld [vmem:[%s651 + $0x20] sm:$0xf]
      %v661 = vld [vmem:[%s651 + $0x24] sm:$0xf]
      %v662 = vld [vmem:[%s651 + $0x28] sm:$0xf]
      %v663 = vld [vmem:[%s651 + $0x2c] sm:$0xf]
      %v664 = vld [vmem:[%s651 + $0x30] sm:$0xf]
      %v665 = vld [vmem:[%s651 + $0x34] sm:$0xf]
      %v666 = vld [vmem:[%s651 + $0x38] sm:$0xf]
      %v667 = vld [vmem:[%s651 + $0x3c] sm:$0xf]
      %v668 = vunpack.c.l.b16 %v544
      %v669 = vunpack.c.l.b16 %v558
      %v670 = vunpack.c.l.b16 %v572
      %v671 = vunpack.c.l.b16 %v586
      %v672 = vunpack.c.l.b16 %v600
      %v673 = vunpack.c.l.b16 %v614
      %v674 = vunpack.c.l.b16 %v628
      %v675 = vunpack.c.l.b16 %v642
      %v676 = vpack.c.b16 %v669, %v668
      %v677 = vpack.c.b16 %v671, %v670
      %v678 = vpack.c.b16 %v673, %v672
      %v679 = vpack.c.b16 %v675, %v674
      %v700 = vunpack.c.l.b16 %v652
      %v701 = vunpack.c.l.b16 %v653
      %v702 = vunpack.c.l.b16 %v654
      %v703 = vunpack.c.l.b16 %v655
      %v704 = vunpack.c.l.b16 %v656
      %v705 = vunpack.c.l.b16 %v657
      %v706 = vunpack.c.l.b16 %v658
      %v707 = vunpack.c.l.b16 %v659
      %v708 = vunpack.c.l.b16 %v660
      %v709 = vunpack.c.l.b16 %v661
      %v710 = vunpack.c.l.b16 %v662
      %v711 = vunpack.c.l.b16 %v663
      %v712 = vunpack.c.l.b16 %v664
      %v713 = vunpack.c.l.b16 %v665
      %v714 = vunpack.c.l.b16 %v666
      %v715 = vunpack.c.l.b16 %v667
      %v716 = vpack.c.b16 %v701, %v700
      %v717 = vpack.c.b16 %v703, %v702
      %v718 = vpack.c.b16 %v705, %v704
      %v719 = vpack.c.b16 %v707, %v706
      %v720 = vpack.c.b16 %v709, %v708
      %v721 = vpack.c.b16 %v711, %v710
      %v722 = vpack.c.b16 %v713, %v712
      %v723 = vpack.c.b16 %v715, %v714
      %732 = vmatprep.subr.bf16.mxu0 0
      %733 = vmatpush1.bf16.msra.mxu0 %v723
      %734 = vmatprep.subr.bf16.mxu0 0
      %735 = vmatpush1.bf16.msra.mxu0 %v722
      %736 = vmatprep.subr.bf16.mxu0 0
      %737 = vmatpush1.bf16.msra.mxu0 %v721
      %738 = vmatprep.subr.bf16.mxu0 0
      %739 = vmatpush1.bf16.msra.mxu0 %v720
      %740 = vmatprep.subr.bf16.mxu0 0
      %741 = vmatpush1.bf16.msra.mxu0 %v719
      %742 = vmatprep.subr.bf16.mxu0 0
      %743 = vmatpush1.bf16.msra.mxu0 %v718
      %744 = vmatprep.subr.bf16.mxu0 0
      %745 = vmatpush1.bf16.msra.mxu0 %v717
      %746 = vmatprep.subr.bf16.mxu0 0
      %747 = vmatpush1.bf16.msra.mxu0 %v716
      %748 = vmatprep.subr.bf16.mxu0 0
      %749 = vmatpush2.bf16.msra.mxu0 0
      %750 = vmatprep.subr.bf16.mxu0 0
      %751 = vmatpush2.bf16.msra.mxu0 0
      %752 = vmatprep.subr.bf16.mxu0 0
      %753 = vmatpush2.bf16.msra.mxu0 0
      %754 = vmatprep.subr.bf16.mxu0 0
      %755 = vmatpush2.bf16.msra.mxu0 0
      %756 = vmatprep.subr.bf16.mxu0 0
      %757 = vmatpush2.bf16.msra.mxu0 0
      %758 = vmatprep.subr.bf16.mxu0 0
      %759 = vmatpush2.bf16.msra.mxu0 0
      %760 = vmatprep.subr.bf16.mxu0 0
      %761 = vmatpush2.bf16.msra.mxu0 0
      %762 = vmatprep.subr.bf16.mxu0 0
      %763 = vmatpush2.bf16.msra.mxu0 0
      %764 = vmatprep.mubr.bf16.mxu0 0
      %765 = vmatmul.mubr.bf16.gmra.mxu0 %v676
      %v766 = vpop.f32.mrf.mxu0
      %v767 = vadd.f32 0.0, %v766
      %v768 = vpop.f32.mrf.mxu0
      %v769 = vpop.f32.mrf.mxu0
      %v770 = vadd.f32 0.0, %v769
      %v771 = vpop.f32.mrf.mxu0
      %772 = vmatprep.mubr.bf16.mxu0 0
      %773 = vmatmul.mubr.bf16.gmra.mxu0 %v677
      %v774 = vpop.f32.mrf.mxu0
      %v775 = vadd.f32 0.0, %v774
      %v776 = vpop.f32.mrf.mxu0
      %v777 = vpop.f32.mrf.mxu0
      %v778 = vadd.f32 0.0, %v777
      %v779 = vpop.f32.mrf.mxu0
      %780 = vmatprep.mubr.bf16.mxu0 0
      %781 = vmatmul.mubr.bf16.gmra.mxu0 %v678
      %v782 = vpop.f32.mrf.mxu0
      %v783 = vadd.f32 0.0, %v782
      %v784 = vpop.f32.mrf.mxu0
      %v785 = vpop.f32.mrf.mxu0
      %v786 = vadd.f32 0.0, %v785
      %v787 = vpop.f32.mrf.mxu0
      %788 = vmatprep.mubr.bf16.mxu0 0
      %789 = vmatmul.mubr.bf16.gmra.mxu0 %v679
      %v790 = vpop.f32.mrf.mxu0
      %v791 = vadd.f32 0.0, %v790
      %v792 = vpop.f32.mrf.mxu0
      %v793 = vpop.f32.mrf.mxu0
      %v794 = vadd.f32 0.0, %v793
      %v795 = vpop.f32.mrf.mxu0
      %796 = vdwg.mxu0
      %v797 = vadd.f32 %v643, %v767
      %v798 = vadd.f32 %v644, %v770
      %v799 = vadd.f32 %v645, %v775
      %v800 = vadd.f32 %v646, %v778
      %v801 = vadd.f32 %v647, %v783
      %v802 = vadd.f32 %v648, %v786
      %v803 = vadd.f32 %v649, %v791
      %v804 = vadd.f32 %v650, %v794
      %805 = vst [vmem:[#allocation2] sm:$0xff] %v797
      %806 = vst [vmem:[#allocation2 + $0x8] sm:$0xff] %v798
      %807 = vst [vmem:[#allocation2 + $0x10] sm:$0xff] %v799
      %808 = vst [vmem:[#allocation2 + $0x18] sm:$0xff] %v800
      %809 = vst [vmem:[#allocation2 + $0x20] sm:$0xff] %v801
      %810 = vst [vmem:[#allocation2 + $0x28] sm:$0xff] %v802
      %811 = vst [vmem:[#allocation2 + $0x30] sm:$0xff] %v803
      %812 = vst [vmem:[#allocation2 + $0x38] sm:$0xff] %v804
      %v813 = vld [vmem:[%s285] sm:$0xe]
      %v814 = vld [vmem:[%s285 + $0x4] sm:$0x1]
      %v815 = vld [vmem:[%s285 + $0x8] sm:$0xe]
      %v816 = vld [vmem:[%s285 + $0xc] sm:$0x1]
      %v817 = vld [vmem:[%s285 + $0x10] sm:$0xe]
      %v818 = vld [vmem:[%s285 + $0x14] sm:$0x1]
      %v819 = vld [vmem:[%s285 + $0x18] sm:$0xe]
      %v820 = vld [vmem:[%s285 + $0x1c] sm:$0x1]
      %v821 = vld [vmem:[%s285 + $0x20] sm:$0xe]
      %v822 = vld [vmem:[%s285 + $0x24] sm:$0x1]
      %v823 = vld [vmem:[%s285 + $0x28] sm:$0xe]
      %v824 = vld [vmem:[%s285 + $0x2c] sm:$0x1]
      %v825 = vld [vmem:[%s285 + $0x30] sm:$0xe]
      %v826 = vld [vmem:[%s285 + $0x34] sm:$0x1]
      %v827 = vld [vmem:[%s285 + $0x38] sm:$0xe]
      %v828 = vld [vmem:[%s285 + $0x3c] sm:$0x1]
      %vm845 = vcmask 1042432
      %vm846 = vcmask 1046532
      %vm847 = vmor %vm845, %vm846
      %v848 = vrot.slane %v813, 5
      %v849 = vrot.slane %v848, 4
      %v850 = vrot.slane %v814, 5
      %v851 = vsel %vm847, %v849, %v850
      %v852 = vrot.slane %v815, 5
      %v853 = vrot.slane %v852, 4
      %v854 = vrot.slane %v816, 5
      %v855 = vsel %vm847, %v853, %v854
      %v856 = vrot.slane %v817, 5
      %v857 = vrot.slane %v856, 4
      %v858 = vrot.slane %v818, 5
      %v859 = vsel %vm847, %v857, %v858
      %v860 = vrot.slane %v819, 5
      %v861 = vrot.slane %v860, 4
      %v862 = vrot.slane %v820, 5
      %v863 = vsel %vm847, %v861, %v862
      %v864 = vrot.slane %v821, 5
      %v865 = vrot.slane %v864, 4
      %v866 = vrot.slane %v822, 5
      %v867 = vsel %vm847, %v865, %v866
      %v868 = vrot.slane %v823, 5
      %v869 = vrot.slane %v868, 4
      %v870 = vrot.slane %v824, 5
      %v871 = vsel %vm847, %v869, %v870
      %v872 = vrot.slane %v825, 5
      %v873 = vrot.slane %v872, 4
      %v874 = vrot.slane %v826, 5
      %v875 = vsel %vm847, %v873, %v874
      %v876 = vrot.slane %v827, 5
      %v877 = vrot.slane %v876, 4
      %v878 = vrot.slane %v828, 5
      %v879 = vsel %vm847, %v877, %v878
      %v880 = vld [vmem:[#allocation2] sm:$0xff]
      %v881 = vld [vmem:[#allocation2 + $0x8] sm:$0xff]
      %v882 = vld [vmem:[#allocation2 + $0x10] sm:$0xff]
      %v883 = vld [vmem:[#allocation2 + $0x18] sm:$0xff]
      %v884 = vld [vmem:[#allocation2 + $0x20] sm:$0xff]
      %v885 = vld [vmem:[#allocation2 + $0x28] sm:$0xff]
      %v886 = vld [vmem:[#allocation2 + $0x30] sm:$0xff]
      %v887 = vld [vmem:[#allocation2 + $0x38] sm:$0xff]
      %s888 = scalar_lea.vmem %s293, 128
      %v889 = vld [vmem:[%s888] sm:$0xf]
      %v890 = vld [vmem:[%s888 + $0x4] sm:$0xf]
      %v891 = vld [vmem:[%s888 + $0x8] sm:$0xf]
      %v892 = vld [vmem:[%s888 + $0xc] sm:$0xf]
      %v893 = vld [vmem:[%s888 + $0x10] sm:$0xf]
      %v894 = vld [vmem:[%s888 + $0x14] sm:$0xf]
      %v895 = vld [vmem:[%s888 + $0x18] sm:$0xf]
      %v896 = vld [vmem:[%s888 + $0x1c] sm:$0xf]
      %v897 = vld [vmem:[%s888 + $0x20] sm:$0xf]
      %v898 = vld [vmem:[%s888 + $0x24] sm:$0xf]
      %v899 = vld [vmem:[%s888 + $0x28] sm:$0xf]
      %v900 = vld [vmem:[%s888 + $0x2c] sm:$0xf]
      %v901 = vld [vmem:[%s888 + $0x30] sm:$0xf]
      %v902 = vld [vmem:[%s888 + $0x34] sm:$0xf]
      %v903 = vld [vmem:[%s888 + $0x38] sm:$0xf]
      %v904 = vld [vmem:[%s888 + $0x3c] sm:$0xf]
      %v905 = vunpack.c.l.b16 %v851
      %v906 = vunpack.c.l.b16 %v855
      %v907 = vunpack.c.l.b16 %v859
      %v908 = vunpack.c.l.b16 %v863
      %v909 = vunpack.c.l.b16 %v867
      %v910 = vunpack.c.l.b16 %v871
      %v911 = vunpack.c.l.b16 %v875
      %v912 = vunpack.c.l.b16 %v879
      %v913 = vpack.c.b16 %v906, %v905
      %v914 = vpack.c.b16 %v908, %v907
      %v915 = vpack.c.b16 %v910, %v909
      %v916 = vpack.c.b16 %v912, %v911
      %v937 = vunpack.c.l.b16 %v889
      %v938 = vunpack.c.l.b16 %v890
      %v939 = vunpack.c.l.b16 %v891
      %v940 = vunpack.c.l.b16 %v892
      %v941 = vunpack.c.l.b16 %v893
      %v942 = vunpack.c.l.b16 %v894
      %v943 = vunpack.c.l.b16 %v895
      %v944 = vunpack.c.l.b16 %v896
      %v945 = vunpack.c.l.b16 %v897
      %v946 = vunpack.c.l.b16 %v898
      %v947 = vunpack.c.l.b16 %v899
      %v948 = vunpack.c.l.b16 %v900
      %v949 = vunpack.c.l.b16 %v901
      %v950 = vunpack.c.l.b16 %v902
      %v951 = vunpack.c.l.b16 %v903
      %v952 = vunpack.c.l.b16 %v904
      %v953 = vpack.c.b16 %v938, %v937
      %v954 = vpack.c.b16 %v940, %v939
      %v955 = vpack.c.b16 %v942, %v941
      %v956 = vpack.c.b16 %v944, %v943
      %v957 = vpack.c.b16 %v946, %v945
      %v958 = vpack.c.b16 %v948, %v947
      %v959 = vpack.c.b16 %v950, %v949
      %v960 = vpack.c.b16 %v952, %v951
      %969 = vmatprep.subr.bf16.mxu0 0
      %970 = vmatpush1.bf16.msra.mxu0 %v960
      %971 = vmatprep.subr.bf16.mxu0 0
      %972 = vmatpush1.bf16.msra.mxu0 %v959
      %973 = vmatprep.subr.bf16.mxu0 0
      %974 = vmatpush1.bf16.msra.mxu0 %v958
      %975 = vmatprep.subr.bf16.mxu0 0
      %976 = vmatpush1.bf16.msra.mxu0 %v957
      %977 = vmatprep.subr.bf16.mxu0 0
      %978 = vmatpush1.bf16.msra.mxu0 %v956
      %979 = vmatprep.subr.bf16.mxu0 0
      %980 = vmatpush1.bf16.msra.mxu0 %v955
      %981 = vmatprep.subr.bf16.mxu0 0
      %982 = vmatpush1.bf16.msra.mxu0 %v954
      %983 = vmatprep.subr.bf16.mxu0 0
      %984 = vmatpush1.bf16.msra.mxu0 %v953
      %985 = vmatprep.subr.bf16.mxu0 0
      %986 = vmatpush2.bf16.msra.mxu0 0
      %987 = vmatprep.subr.bf16.mxu0 0
      %988 = vmatpush2.bf16.msra.mxu0 0
      %989 = vmatprep.subr.bf16.mxu0 0
      %990 = vmatpush2.bf16.msra.mxu0 0
      %991 = vmatprep.subr.bf16.mxu0 0
      %992 = vmatpush2.bf16.msra.mxu0 0
      %993 = vmatprep.subr.bf16.mxu0 0
      %994 = vmatpush2.bf16.msra.mxu0 0
      %995 = vmatprep.subr.bf16.mxu0 0
      %996 = vmatpush2.bf16.msra.mxu0 0
      %997 = vmatprep.subr.bf16.mxu0 0
      %998 = vmatpush2.bf16.msra.mxu0 0
      %999 = vmatprep.subr.bf16.mxu0 0
      %1000 = vmatpush2.bf16.msra.mxu0 0
      %1001 = vmatprep.mubr.bf16.mxu0 0
      %1002 = vmatmul.mubr.bf16.gmra.mxu0 %v913
      %v1003 = vpop.f32.mrf.mxu0
      %v1004 = vadd.f32 0.0, %v1003
      %v1005 = vpop.f32.mrf.mxu0
      %v1006 = vpop.f32.mrf.mxu0
      %v1007 = vadd.f32 0.0, %v1006
      %v1008 = vpop.f32.mrf.mxu0
      %1009 = vmatprep.mubr.bf16.mxu0 0
      %1010 = vmatmul.mubr.bf16.gmra.mxu0 %v914
      %v1011 = vpop.f32.mrf.mxu0
      %v1012 = vadd.f32 0.0, %v1011
      %v1013 = vpop.f32.mrf.mxu0
      %v1014 = vpop.f32.mrf.mxu0
      %v1015 = vadd.f32 0.0, %v1014
      %v1016 = vpop.f32.mrf.mxu0
      %1017 = vmatprep.mubr.bf16.mxu0 0
      %1018 = vmatmul.mubr.bf16.gmra.mxu0 %v915
      %v1019 = vpop.f32.mrf.mxu0
      %v1020 = vadd.f32 0.0, %v1019
      %v1021 = vpop.f32.mrf.mxu0
      %v1022 = vpop.f32.mrf.mxu0
      %v1023 = vadd.f32 0.0, %v1022
      %v1024 = vpop.f32.mrf.mxu0
      %1025 = vmatprep.mubr.bf16.mxu0 0
      %1026 = vmatmul.mubr.bf16.gmra.mxu0 %v916
      %v1027 = vpop.f32.mrf.mxu0
      %v1028 = vadd.f32 0.0, %v1027
      %v1029 = vpop.f32.mrf.mxu0
      %v1030 = vpop.f32.mrf.mxu0
      %v1031 = vadd.f32 0.0, %v1030
      %v1032 = vpop.f32.mrf.mxu0
      %1033 = vdwg.mxu0
      %v1034 = vadd.f32 %v880, %v1004
      %v1035 = vadd.f32 %v881, %v1007
      %v1036 = vadd.f32 %v882, %v1012
      %v1037 = vadd.f32 %v883, %v1015
      %v1038 = vadd.f32 %v884, %v1020
      %v1039 = vadd.f32 %v885, %v1023
      %v1040 = vadd.f32 %v886, %v1028
      %v1041 = vadd.f32 %v887, %v1031
      %1042 = vst [vmem:[#allocation2] sm:$0xff] %v1034
      %1043 = vst [vmem:[#allocation2 + $0x8] sm:$0xff] %v1035
      %1044 = vst [vmem:[#allocation2 + $0x10] sm:$0xff] %v1036
      %1045 = vst [vmem:[#allocation2 + $0x18] sm:$0xff] %v1037
      %1046 = vst [vmem:[#allocation2 + $0x20] sm:$0xff] %v1038
      %1047 = vst [vmem:[#allocation2 + $0x28] sm:$0xff] %v1039
      %1048 = vst [vmem:[#allocation2 + $0x30] sm:$0xff] %v1040
      %1049 = vst [vmem:[#allocation2 + $0x38] sm:$0xff] %v1041
      %s1050 = scalar_lea.vmem %s285, 8
      %v1051 = vld [vmem:[%s1050] sm:$0xf]
      %v1052 = vld [vmem:[%s1050 + $0x8] sm:$0xf]
      %v1053 = vld [vmem:[%s1050 + $0x10] sm:$0xf]
      %v1054 = vld [vmem:[%s1050 + $0x18] sm:$0xf]
      %v1055 = vld [vmem:[%s1050 + $0x20] sm:$0xf]
      %v1056 = vld [vmem:[%s1050 + $0x28] sm:$0xf]
      %v1057 = vld [vmem:[%s1050 + $0x30] sm:$0xf]
      %v1058 = vld [vmem:[%s1050 + $0x38] sm:$0xf]
      %v1059 = vld [vmem:[#allocation2] sm:$0xff]
      %v1060 = vld [vmem:[#allocation2 + $0x8] sm:$0xff]
      %v1061 = vld [vmem:[#allocation2 + $0x10] sm:$0xff]
      %v1062 = vld [vmem:[#allocation2 + $0x18] sm:$0xff]
      %v1063 = vld [vmem:[#allocation2 + $0x20] sm:$0xff]
      %v1064 = vld [vmem:[#allocation2 + $0x28] sm:$0xff]
      %v1065 = vld [vmem:[#allocation2 + $0x30] sm:$0xff]
      %v1066 = vld [vmem:[#allocation2 + $0x38] sm:$0xff]
      %s1067 = scalar_lea.vmem %s293, 192
      %v1068 = vld [vmem:[%s1067] sm:$0xf]
      %v1069 = vld [vmem:[%s1067 + $0x4] sm:$0xf]
      %v1070 = vld [vmem:[%s1067 + $0x8] sm:$0xf]
      %v1071 = vld [vmem:[%s1067 + $0xc] sm:$0xf]
      %v1072 = vld [vmem:[%s1067 + $0x10] sm:$0xf]
      %v1073 = vld [vmem:[%s1067 + $0x14] sm:$0xf]
      %v1074 = vld [vmem:[%s1067 + $0x18] sm:$0xf]
      %v1075 = vld [vmem:[%s1067 + $0x1c] sm:$0xf]
      %v1076 = vld [vmem:[%s1067 + $0x20] sm:$0xf]
      %v1077 = vld [vmem:[%s1067 + $0x24] sm:$0xf]
      %v1078 = vld [vmem:[%s1067 + $0x28] sm:$0xf]
      %v1079 = vld [vmem:[%s1067 + $0x2c] sm:$0xf]
      %v1080 = vld [vmem:[%s1067 + $0x30] sm:$0xf]
      %v1081 = vld [vmem:[%s1067 + $0x34] sm:$0xf]
      %v1082 = vld [vmem:[%s1067 + $0x38] sm:$0xf]
      %v1083 = vld [vmem:[%s1067 + $0x3c] sm:$0xf]
      %v1092 = vunpack.c.l.b16 %v1051
      %v1093 = vunpack.c.l.b16 %v1052
      %v1094 = vunpack.c.l.b16 %v1053
      %v1095 = vunpack.c.l.b16 %v1054
      %v1096 = vunpack.c.l.b16 %v1055
      %v1097 = vunpack.c.l.b16 %v1056
      %v1098 = vunpack.c.l.b16 %v1057
      %v1099 = vunpack.c.l.b16 %v1058
      %v1100 = vpack.c.b16 %v1093, %v1092
      %v1101 = vpack.c.b16 %v1095, %v1094
      %v1102 = vpack.c.b16 %v1097, %v1096
      %v1103 = vpack.c.b16 %v1099, %v1098
      %v1124 = vunpack.c.l.b16 %v1068
      %v1125 = vunpack.c.l.b16 %v1069
      %v1126 = vunpack.c.l.b16 %v1070
      %v1127 = vunpack.c.l.b16 %v1071
      %v1128 = vunpack.c.l.b16 %v1072
      %v1129 = vunpack.c.l.b16 %v1073
      %v1130 = vunpack.c.l.b16 %v1074
      %v1131 = vunpack.c.l.b16 %v1075
      %v1132 = vunpack.c.l.b16 %v1076
      %v1133 = vunpack.c.l.b16 %v1077
      %v1134 = vunpack.c.l.b16 %v1078
      %v1135 = vunpack.c.l.b16 %v1079
      %v1136 = vunpack.c.l.b16 %v1080
      %v1137 = vunpack.c.l.b16 %v1081
      %v1138 = vunpack.c.l.b16 %v1082
      %v1139 = vunpack.c.l.b16 %v1083
      %v1140 = vpack.c.b16 %v1125, %v1124
      %v1141 = vpack.c.b16 %v1127, %v1126
      %v1142 = vpack.c.b16 %v1129, %v1128
      %v1143 = vpack.c.b16 %v1131, %v1130
      %v1144 = vpack.c.b16 %v1133, %v1132
      %v1145 = vpack.c.b16 %v1135, %v1134
      %v1146 = vpack.c.b16 %v1137, %v1136
      %v1147 = vpack.c.b16 %v1139, %v1138
      %1156 = vmatprep.subr.bf16.mxu0 0
      %1157 = vmatpush1.bf16.msra.mxu0 %v1147
      %1158 = vmatprep.subr.bf16.mxu0 0
      %1159 = vmatpush1.bf16.msra.mxu0 %v1146
      %1160 = vmatprep.subr.bf16.mxu0 0
      %1161 = vmatpush1.bf16.msra.mxu0 %v1145
      %1162 = vmatprep.subr.bf16.mxu0 0
      %1163 = vmatpush1.bf16.msra.mxu0 %v1144
      %1164 = vmatprep.subr.bf16.mxu0 0
      %1165 = vmatpush1.bf16.msra.mxu0 %v1143
      %1166 = vmatprep.subr.bf16.mxu0 0
      %1167 = vmatpush1.bf16.msra.mxu0 %v1142
      %1168 = vmatprep.subr.bf16.mxu0 0
      %1169 = vmatpush1.bf16.msra.mxu0 %v1141
      %1170 = vmatprep.subr.bf16.mxu0 0
      %1171 = vmatpush1.bf16.msra.mxu0 %v1140
      %1172 = vmatprep.subr.bf16.mxu0 0
      %1173 = vmatpush2.bf16.msra.mxu0 0
      %1174 = vmatprep.subr.bf16.mxu0 0
      %1175 = vmatpush2.bf16.msra.mxu0 0
      %1176 = vmatprep.subr.bf16.mxu0 0
      %1177 = vmatpush2.bf16.msra.mxu0 0
      %1178 = vmatprep.subr.bf16.mxu0 0
      %1179 = vmatpush2.bf16.msra.mxu0 0
      %1180 = vmatprep.subr.bf16.mxu0 0
      %1181 = vmatpush2.bf16.msra.mxu0 0
      %1182 = vmatprep.subr.bf16.mxu0 0
      %1183 = vmatpush2.bf16.msra.mxu0 0
      %1184 = vmatprep.subr.bf16.mxu0 0
      %1185 = vmatpush2.bf16.msra.mxu0 0
      %1186 = vmatprep.subr.bf16.mxu0 0
      %1187 = vmatpush2.bf16.msra.mxu0 0
      %1188 = vmatprep.mubr.bf16.mxu0 0
      %1189 = vmatmul.mubr.bf16.gmra.mxu0 %v1100
      %v1190 = vpop.f32.mrf.mxu0
      %v1191 = vadd.f32 0.0, %v1190
      %v1192 = vpop.f32.mrf.mxu0
      %v1193 = vpop.f32.mrf.mxu0
      %v1194 = vadd.f32 0.0, %v1193
      %v1195 = vpop.f32.mrf.mxu0
      %1196 = vmatprep.mubr.bf16.mxu0 0
      %1197 = vmatmul.mubr.bf16.gmra.mxu0 %v1101
      %v1198 = vpop.f32.mrf.mxu0
      %v1199 = vadd.f32 0.0, %v1198
      %v1200 = vpop.f32.mrf.mxu0
      %v1201 = vpop.f32.mrf.mxu0
      %v1202 = vadd.f32 0.0, %v1201
      %v1203 = vpop.f32.mrf.mxu0
      %1204 = vmatprep.mubr.bf16.mxu0 0
      %1205 = vmatmul.mubr.bf16.gmra.mxu0 %v1102
      %v1206 = vpop.f32.mrf.mxu0
      %v1207 = vadd.f32 0.0, %v1206
      %v1208 = vpop.f32.mrf.mxu0
      %v1209 = vpop.f32.mrf.mxu0
      %v1210 = vadd.f32 0.0, %v1209
      %v1211 = vpop.f32.mrf.mxu0
      %1212 = vmatprep.mubr.bf16.mxu0 0
      %1213 = vmatmul.mubr.bf16.gmra.mxu0 %v1103
      %v1214 = vpop.f32.mrf.mxu0
      %v1215 = vadd.f32 0.0, %v1214
      %v1216 = vpop.f32.mrf.mxu0
      %v1217 = vpop.f32.mrf.mxu0
      %v1218 = vadd.f32 0.0, %v1217
      %v1219 = vpop.f32.mrf.mxu0
      %1220 = vdwg.mxu0
      %v1221 = vadd.f32 %v1059, %v1191
      %v1222 = vadd.f32 %v1060, %v1194
      %v1223 = vadd.f32 %v1061, %v1199
      %v1224 = vadd.f32 %v1062, %v1202
      %v1225 = vadd.f32 %v1063, %v1207
      %v1226 = vadd.f32 %v1064, %v1210
      %v1227 = vadd.f32 %v1065, %v1215
      %v1228 = vadd.f32 %v1066, %v1218
      %1229 = vst [vmem:[#allocation2] sm:$0xff] %v1221
      %1230 = vst [vmem:[#allocation2 + $0x8] sm:$0xff] %v1222
      %1231 = vst [vmem:[#allocation2 + $0x10] sm:$0xff] %v1223
      %1232 = vst [vmem:[#allocation2 + $0x18] sm:$0xff] %v1224
      %1233 = vst [vmem:[#allocation2 + $0x20] sm:$0xff] %v1225
      %1234 = vst [vmem:[#allocation2 + $0x28] sm:$0xff] %v1226
      %1235 = vst [vmem:[#allocation2 + $0x30] sm:$0xff] %v1227
      %1236 = vst [vmem:[#allocation2 + $0x38] sm:$0xff] %v1228
      %v1237 = vld [vmem:[%s1050] sm:$0xf]
      %v1238 = vld [vmem:[%s1050 + $0x4] sm:$0x1]
      %v1239 = vld [vmem:[%s1050 + $0x8] sm:$0xf]
      %v1240 = vld [vmem:[%s1050 + $0xc] sm:$0x1]
      %v1241 = vld [vmem:[%s1050 + $0x10] sm:$0xf]
      %v1242 = vld [vmem:[%s1050 + $0x14] sm:$0x1]
      %v1243 = vld [vmem:[%s1050 + $0x18] sm:$0xf]
      %v1244 = vld [vmem:[%s1050 + $0x1c] sm:$0x1]
      %v1245 = vld [vmem:[%s1050 + $0x20] sm:$0xf]
      %v1246 = vld [vmem:[%s1050 + $0x24] sm:$0x1]
      %v1247 = vld [vmem:[%s1050 + $0x28] sm:$0xf]
      %v1248 = vld [vmem:[%s1050 + $0x2c] sm:$0x1]
      %v1249 = vld [vmem:[%s1050 + $0x30] sm:$0xf]
      %v1250 = vld [vmem:[%s1050 + $0x34] sm:$0x1]
      %v1251 = vld [vmem:[%s1050 + $0x38] sm:$0xf]
      %v1252 = vld [vmem:[%s1050 + $0x3c] sm:$0x1]
      %v1254 = vshrl.u32 %v1237, 16
      %v1256 = vrot.slane %v1254, 4
      %v1257 = vshll.u32 %v1237, 16
      %v1259 = vrot.slane %v1257, 5
      %v1260 = vor.u32 %v1256, %v1259
      %v1261 = vrot.slane %v1260, 4
      %v1263 = vshll.u32 %v1238, 16
      %v1265 = vrot.slane %v1263, 5
      %v1266 = vsel %vm530, %v1261, %v1265
      %v1268 = vshrl.u32 %v1239, 16
      %v1270 = vrot.slane %v1268, 4
      %v1271 = vshll.u32 %v1239, 16
      %v1273 = vrot.slane %v1271, 5
      %v1274 = vor.u32 %v1270, %v1273
      %v1275 = vrot.slane %v1274, 4
      %v1277 = vshll.u32 %v1240, 16
      %v1279 = vrot.slane %v1277, 5
      %v1280 = vsel %vm530, %v1275, %v1279
      %v1282 = vshrl.u32 %v1241, 16
      %v1284 = vrot.slane %v1282, 4
      %v1285 = vshll.u32 %v1241, 16
      %v1287 = vrot.slane %v1285, 5
      %v1288 = vor.u32 %v1284, %v1287
      %v1289 = vrot.slane %v1288, 4
      %v1291 = vshll.u32 %v1242, 16
      %v1293 = vrot.slane %v1291, 5
      %v1294 = vsel %vm530, %v1289, %v1293
      %v1296 = vshrl.u32 %v1243, 16
      %v1298 = vrot.slane %v1296, 4
      %v1299 = vshll.u32 %v1243, 16
      %v1301 = vrot.slane %v1299, 5
      %v1302 = vor.u32 %v1298, %v1301
      %v1303 = vrot.slane %v1302, 4
      %v1305 = vshll.u32 %v1244, 16
      %v1307 = vrot.slane %v1305, 5
      %v1308 = vsel %vm530, %v1303, %v1307
      %v1310 = vshrl.u32 %v1245, 16
      %v1312 = vrot.slane %v1310, 4
      %v1313 = vshll.u32 %v1245, 16
      %v1315 = vrot.slane %v1313, 5
      %v1316 = vor.u32 %v1312, %v1315
      %v1317 = vrot.slane %v1316, 4
      %v1319 = vshll.u32 %v1246, 16
      %v1321 = vrot.slane %v1319, 5
      %v1322 = vsel %vm530, %v1317, %v1321
      %v1324 = vshrl.u32 %v1247, 16
      %v1326 = vrot.slane %v1324, 4
      %v1327 = vshll.u32 %v1247, 16
      %v1329 = vrot.slane %v1327, 5
      %v1330 = vor.u32 %v1326, %v1329
      %v1331 = vrot.slane %v1330, 4
      %v1333 = vshll.u32 %v1248, 16
      %v1335 = vrot.slane %v1333, 5
      %v1336 = vsel %vm530, %v1331, %v1335
      %v1338 = vshrl.u32 %v1249, 16
      %v1340 = vrot.slane %v1338, 4
      %v1341 = vshll.u32 %v1249, 16
      %v1343 = vrot.slane %v1341, 5
      %v1344 = vor.u32 %v1340, %v1343
      %v1345 = vrot.slane %v1344, 4
      %v1347 = vshll.u32 %v1250, 16
      %v1349 = vrot.slane %v1347, 5
      %v1350 = vsel %vm530, %v1345, %v1349
      %v1352 = vshrl.u32 %v1251, 16
      %v1354 = vrot.slane %v1352, 4
      %v1355 = vshll.u32 %v1251, 16
      %v1357 = vrot.slane %v1355, 5
      %v1358 = vor.u32 %v1354, %v1357
      %v1359 = vrot.slane %v1358, 4
      %v1361 = vshll.u32 %v1252, 16
      %v1363 = vrot.slane %v1361, 5
      %v1364 = vsel %vm530, %v1359, %v1363
      %v1365 = vld [vmem:[#allocation2] sm:$0xff]
      %v1366 = vld [vmem:[#allocation2 + $0x8] sm:$0xff]
      %v1367 = vld [vmem:[#allocation2 + $0x10] sm:$0xff]
      %v1368 = vld [vmem:[#allocation2 + $0x18] sm:$0xff]
      %v1369 = vld [vmem:[#allocation2 + $0x20] sm:$0xff]
      %v1370 = vld [vmem:[#allocation2 + $0x28] sm:$0xff]
      %v1371 = vld [vmem:[#allocation2 + $0x30] sm:$0xff]
      %v1372 = vld [vmem:[#allocation2 + $0x38] sm:$0xff]
      %s1373 = scalar_lea.vmem %s293, 256
      %v1374 = vld [vmem:[%s1373] sm:$0xf]
      %v1375 = vld [vmem:[%s1373 + $0x4] sm:$0xf]
      %v1376 = vld [vmem:[%s1373 + $0x8] sm:$0xf]
      %v1377 = vld [vmem:[%s1373 + $0xc] sm:$0xf]
      %v1378 = vld [vmem:[%s1373 + $0x10] sm:$0xf]
      %v1379 = vld [vmem:[%s1373 + $0x14] sm:$0xf]
      %v1380 = vld [vmem:[%s1373 + $0x18] sm:$0xf]
      %v1381 = vld [vmem:[%s1373 + $0x1c] sm:$0xf]
      %v1382 = vld [vmem:[%s1373 + $0x20] sm:$0xf]
      %v1383 = vld [vmem:[%s1373 + $0x24] sm:$0xf]
      %v1384 = vld [vmem:[%s1373 + $0x28] sm:$0xf]
      %v1385 = vld [vmem:[%s1373 + $0x2c] sm:$0xf]
      %v1386 = vld [vmem:[%s1373 + $0x30] sm:$0xf]
      %v1387 = vld [vmem:[%s1373 + $0x34] sm:$0xf]
      %v1388 = vld [vmem:[%s1373 + $0x38] sm:$0xf]
      %v1389 = vld [vmem:[%s1373 + $0x3c] sm:$0xf]
      %v1390 = vunpack.c.l.b16 %v1266
      %v1391 = vunpack.c.l.b16 %v1280
      %v1392 = vunpack.c.l.b16 %v1294
      %v1393 = vunpack.c.l.b16 %v1308
      %v1394 = vunpack.c.l.b16 %v1322
      %v1395 = vunpack.c.l.b16 %v1336
      %v1396 = vunpack.c.l.b16 %v1350
      %v1397 = vunpack.c.l.b16 %v1364
      %v1398 = vpack.c.b16 %v1391, %v1390
      %v1399 = vpack.c.b16 %v1393, %v1392
      %v1400 = vpack.c.b16 %v1395, %v1394
      %v1401 = vpack.c.b16 %v1397, %v1396
      %v1422 = vunpack.c.l.b16 %v1374
      %v1423 = vunpack.c.l.b16 %v1375
      %v1424 = vunpack.c.l.b16 %v1376
      %v1425 = vunpack.c.l.b16 %v1377
      %v1426 = vunpack.c.l.b16 %v1378
      %v1427 = vunpack.c.l.b16 %v1379
      %v1428 = vunpack.c.l.b16 %v1380
      %v1429 = vunpack.c.l.b16 %v1381
      %v1430 = vunpack.c.l.b16 %v1382
      %v1431 = vunpack.c.l.b16 %v1383
      %v1432 = vunpack.c.l.b16 %v1384
      %v1433 = vunpack.c.l.b16 %v1385
      %v1434 = vunpack.c.l.b16 %v1386
      %v1435 = vunpack.c.l.b16 %v1387
      %v1436 = vunpack.c.l.b16 %v1388
      %v1437 = vunpack.c.l.b16 %v1389
      %v1438 = vpack.c.b16 %v1423, %v1422
      %v1439 = vpack.c.b16 %v1425, %v1424
      %v1440 = vpack.c.b16 %v1427, %v1426
      %v1441 = vpack.c.b16 %v1429, %v1428
      %v1442 = vpack.c.b16 %v1431, %v1430
      %v1443 = vpack.c.b16 %v1433, %v1432
      %v1444 = vpack.c.b16 %v1435, %v1434
      %v1445 = vpack.c.b16 %v1437, %v1436
      %1454 = vmatprep.subr.bf16.mxu0 0
      %1455 = vmatpush1.bf16.msra.mxu0 %v1445
      %1456 = vmatprep.subr.bf16.mxu0 0
      %1457 = vmatpush1.bf16.msra.mxu0 %v1444
      %1458 = vmatprep.subr.bf16.mxu0 0
      %1459 = vmatpush1.bf16.msra.mxu0 %v1443
      %1460 = vmatprep.subr.bf16.mxu0 0
      %1461 = vmatpush1.bf16.msra.mxu0 %v1442
      %1462 = vmatprep.subr.bf16.mxu0 0
      %1463 = vmatpush1.bf16.msra.mxu0 %v1441
      %1464 = vmatprep.subr.bf16.mxu0 0
      %1465 = vmatpush1.bf16.msra.mxu0 %v1440
      %1466 = vmatprep.subr.bf16.mxu0 0
      %1467 = vmatpush1.bf16.msra.mxu0 %v1439
      %1468 = vmatprep.subr.bf16.mxu0 0
      %1469 = vmatpush1.bf16.msra.mxu0 %v1438
      %1470 = vmatprep.subr.bf16.mxu0 0
      %1471 = vmatpush2.bf16.msra.mxu0 0
      %1472 = vmatprep.subr.bf16.mxu0 0
      %1473 = vmatpush2.bf16.msra.mxu0 0
      %1474 = vmatprep.subr.bf16.mxu0 0
      %1475 = vmatpush2.bf16.msra.mxu0 0
      %1476 = vmatprep.subr.bf16.mxu0 0
      %1477 = vmatpush2.bf16.msra.mxu0 0
      %1478 = vmatprep.subr.bf16.mxu0 0
      %1479 = vmatpush2.bf16.msra.mxu0 0
      %1480 = vmatprep.subr.bf16.mxu0 0
      %1481 = vmatpush2.bf16.msra.mxu0 0
      %1482 = vmatprep.subr.bf16.mxu0 0
      %1483 = vmatpush2.bf16.msra.mxu0 0
      %1484 = vmatprep.subr.bf16.mxu0 0
      %1485 = vmatpush2.bf16.msra.mxu0 0
      %1486 = vmatprep.mubr.bf16.mxu0 0
      %1487 = vmatmul.mubr.bf16.gmra.mxu0 %v1398
      %v1488 = vpop.f32.mrf.mxu0
      %v1489 = vadd.f32 0.0, %v1488
      %v1490 = vpop.f32.mrf.mxu0
      %v1491 = vpop.f32.mrf.mxu0
      %v1492 = vadd.f32 0.0, %v1491
      %v1493 = vpop.f32.mrf.mxu0
      %1494 = vmatprep.mubr.bf16.mxu0 0
      %1495 = vmatmul.mubr.bf16.gmra.mxu0 %v1399
      %v1496 = vpop.f32.mrf.mxu0
      %v1497 = vadd.f32 0.0, %v1496
      %v1498 = vpop.f32.mrf.mxu0
      %v1499 = vpop.f32.mrf.mxu0
      %v1500 = vadd.f32 0.0, %v1499
      %v1501 = vpop.f32.mrf.mxu0
      %1502 = vmatprep.mubr.bf16.mxu0 0
      %1503 = vmatmul.mubr.bf16.gmra.mxu0 %v1400
      %v1504 = vpop.f32.mrf.mxu0
      %v1505 = vadd.f32 0.0, %v1504
      %v1506 = vpop.f32.mrf.mxu0
      %v1507 = vpop.f32.mrf.mxu0
      %v1508 = vadd.f32 0.0, %v1507
      %v1509 = vpop.f32.mrf.mxu0
      %1510 = vmatprep.mubr.bf16.mxu0 0
      %1511 = vmatmul.mubr.bf16.gmra.mxu0 %v1401
      %v1512 = vpop.f32.mrf.mxu0
      %v1513 = vadd.f32 0.0, %v1512
      %v1514 = vpop.f32.mrf.mxu0
      %v1515 = vpop.f32.mrf.mxu0
      %v1516 = vadd.f32 0.0, %v1515
      %v1517 = vpop.f32.mrf.mxu0
      %1518 = vdwg.mxu0
      %v1519 = vadd.f32 %v1365, %v1489
      %v1520 = vadd.f32 %v1366, %v1492
      %v1521 = vadd.f32 %v1367, %v1497
      %v1522 = vadd.f32 %v1368, %v1500
      %v1523 = vadd.f32 %v1369, %v1505
      %v1524 = vadd.f32 %v1370, %v1508
      %v1525 = vadd.f32 %v1371, %v1513
      %v1526 = vadd.f32 %v1372, %v1516
      %1527 = vst [vmem:[#allocation2] sm:$0xff] %v1519
      %1528 = vst [vmem:[#allocation2 + $0x8] sm:$0xff] %v1520
      %1529 = vst [vmem:[#allocation2 + $0x10] sm:$0xff] %v1521
      %1530 = vst [vmem:[#allocation2 + $0x18] sm:$0xff] %v1522
      %1531 = vst [vmem:[#allocation2 + $0x20] sm:$0xff] %v1523
      %1532 = vst [vmem:[#allocation2 + $0x28] sm:$0xff] %v1524
      %1533 = vst [vmem:[#allocation2 + $0x30] sm:$0xff] %v1525
      %1534 = vst [vmem:[#allocation2 + $0x38] sm:$0xff] %v1526
      %v1535 = vld [vmem:[%s1050] sm:$0xe]
      %v1536 = vld [vmem:[%s1050 + $0x4] sm:$0x1]
      %v1537 = vld [vmem:[%s1050 + $0x8] sm:$0xe]
      %v1538 = vld [vmem:[%s1050 + $0xc] sm:$0x1]
      %v1539 = vld [vmem:[%s1050 + $0x10] sm:$0xe]
      %v1540 = vld [vmem:[%s1050 + $0x14] sm:$0x1]
      %v1541 = vld [vmem:[%s1050 + $0x18] sm:$0xe]
      %v1542 = vld [vmem:[%s1050 + $0x1c] sm:$0x1]
      %v1543 = vld [vmem:[%s1050 + $0x20] sm:$0xe]
      %v1544 = vld [vmem:[%s1050 + $0x24] sm:$0x1]
      %v1545 = vld [vmem:[%s1050 + $0x28] sm:$0xe]
      %v1546 = vld [vmem:[%s1050 + $0x2c] sm:$0x1]
      %v1547 = vld [vmem:[%s1050 + $0x30] sm:$0xe]
      %v1548 = vld [vmem:[%s1050 + $0x34] sm:$0x1]
      %v1549 = vld [vmem:[%s1050 + $0x38] sm:$0xe]
      %v1550 = vld [vmem:[%s1050 + $0x3c] sm:$0x1]
      %v1567 = vrot.slane %v1535, 5
      %v1568 = vrot.slane %v1567, 4
      %v1569 = vrot.slane %v1536, 5
      %v1570 = vsel %vm847, %v1568, %v1569
      %v1571 = vrot.slane %v1537, 5
      %v1572 = vrot.slane %v1571, 4
      %v1573 = vrot.slane %v1538, 5
      %v1574 = vsel %vm847, %v1572, %v1573
      %v1575 = vrot.slane %v1539, 5
      %v1576 = vrot.slane %v1575, 4
      %v1577 = vrot.slane %v1540, 5
      %v1578 = vsel %vm847, %v1576, %v1577
      %v1579 = vrot.slane %v1541, 5
      %v1580 = vrot.slane %v1579, 4
      %v1581 = vrot.slane %v1542, 5
      %v1582 = vsel %vm847, %v1580, %v1581
      %v1583 = vrot.slane %v1543, 5
      %v1584 = vrot.slane %v1583, 4
      %v1585 = vrot.slane %v1544, 5
      %v1586 = vsel %vm847, %v1584, %v1585
      %v1587 = vrot.slane %v1545, 5
      %v1588 = vrot.slane %v1587, 4
      %v1589 = vrot.slane %v1546, 5
      %v1590 = vsel %vm847, %v1588, %v1589
      %v1591 = vrot.slane %v1547, 5
      %v1592 = vrot.slane %v1591, 4
      %v1593 = vrot.slane %v1548, 5
      %v1594 = vsel %vm847, %v1592, %v1593
      %v1595 = vrot.slane %v1549, 5
      %v1596 = vrot.slane %v1595, 4
      %v1597 = vrot.slane %v1550, 5
      %v1598 = vsel %vm847, %v1596, %v1597
      %v1599 = vld [vmem:[#allocation2] sm:$0xff]
      %v1600 = vld [vmem:[#allocation2 + $0x8] sm:$0xff]
      %v1601 = vld [vmem:[#allocation2 + $0x10] sm:$0xff]
      %v1602 = vld [vmem:[#allocation2 + $0x18] sm:$0xff]
      %v1603 = vld [vmem:[#allocation2 + $0x20] sm:$0xff]
      %v1604 = vld [vmem:[#allocation2 + $0x28] sm:$0xff]
      %v1605 = vld [vmem:[#allocation2 + $0x30] sm:$0xff]
      %v1606 = vld [vmem:[#allocation2 + $0x38] sm:$0xff]
      %s1607 = scalar_lea.vmem %s293, 320
      %v1608 = vld [vmem:[%s1607] sm:$0xf]
      %v1609 = vld [vmem:[%s1607 + $0x4] sm:$0xf]
      %v1610 = vld [vmem:[%s1607 + $0x8] sm:$0xf]
      %v1611 = vld [vmem:[%s1607 + $0xc] sm:$0xf]
      %v1612 = vld [vmem:[%s1607 + $0x10] sm:$0xf]
      %v1613 = vld [vmem:[%s1607 + $0x14] sm:$0xf]
      %v1614 = vld [vmem:[%s1607 + $0x18] sm:$0xf]
      %v1615 = vld [vmem:[%s1607 + $0x1c] sm:$0xf]
      %v1616 = vld [vmem:[%s1607 + $0x20] sm:$0xf]
      %v1617 = vld [vmem:[%s1607 + $0x24] sm:$0xf]
      %v1618 = vld [vmem:[%s1607 + $0x28] sm:$0xf]
      %v1619 = vld [vmem:[%s1607 + $0x2c] sm:$0xf]
      %v1620 = vld [vmem:[%s1607 + $0x30] sm:$0xf]
      %v1621 = vld [vmem:[%s1607 + $0x34] sm:$0xf]
      %v1622 = vld [vmem:[%s1607 + $0x38] sm:$0xf]
      %v1623 = vld [vmem:[%s1607 + $0x3c] sm:$0xf]
      %v1624 = vunpack.c.l.b16 %v1570
      %v1625 = vunpack.c.l.b16 %v1574
      %v1626 = vunpack.c.l.b16 %v1578
      %v1627 = vunpack.c.l.b16 %v1582
      %v1628 = vunpack.c.l.b16 %v1586
      %v1629 = vunpack.c.l.b16 %v1590
      %v1630 = vunpack.c.l.b16 %v1594
      %v1631 = vunpack.c.l.b16 %v1598
      %v1632 = vpack.c.b16 %v1625, %v1624
      %v1633 = vpack.c.b16 %v1627, %v1626
      %v1634 = vpack.c.b16 %v1629, %v1628
      %v1635 = vpack.c.b16 %v1631, %v1630
      %v1656 = vunpack.c.l.b16 %v1608
      %v1657 = vunpack.c.l.b16 %v1609
      %v1658 = vunpack.c.l.b16 %v1610
      %v1659 = vunpack.c.l.b16 %v1611
      %v1660 = vunpack.c.l.b16 %v1612
      %v1661 = vunpack.c.l.b16 %v1613
      %v1662 = vunpack.c.l.b16 %v1614
      %v1663 = vunpack.c.l.b16 %v1615
      %v1664 = vunpack.c.l.b16 %v1616
      %v1665 = vunpack.c.l.b16 %v1617
      %v1666 = vunpack.c.l.b16 %v1618
      %v1667 = vunpack.c.l.b16 %v1619
      %v1668 = vunpack.c.l.b16 %v1620
      %v1669 = vunpack.c.l.b16 %v1621
      %v1670 = vunpack.c.l.b16 %v1622
      %v1671 = vunpack.c.l.b16 %v1623
      %v1672 = vpack.c.b16 %v1657, %v1656
      %v1673 = vpack.c.b16 %v1659, %v1658
      %v1674 = vpack.c.b16 %v1661, %v1660
      %v1675 = vpack.c.b16 %v1663, %v1662
      %v1676 = vpack.c.b16 %v1665, %v1664
      %v1677 = vpack.c.b16 %v1667, %v1666
      %v1678 = vpack.c.b16 %v1669, %v1668
      %v1679 = vpack.c.b16 %v1671, %v1670
      %1688 = vmatprep.subr.bf16.mxu0 0
      %1689 = vmatpush1.bf16.msra.mxu0 %v1679
      %1690 = vmatprep.subr.bf16.mxu0 0
      %1691 = vmatpush1.bf16.msra.mxu0 %v1678
      %1692 = vmatprep.subr.bf16.mxu0 0
      %1693 = vmatpush1.bf16.msra.mxu0 %v1677
      %1694 = vmatprep.subr.bf16.mxu0 0
      %1695 = vmatpush1.bf16.msra.mxu0 %v1676
      %1696 = vmatprep.subr.bf16.mxu0 0
      %1697 = vmatpush1.bf16.msra.mxu0 %v1675
      %1698 = vmatprep.subr.bf16.mxu0 0
      %1699 = vmatpush1.bf16.msra.mxu0 %v1674
      %1700 = vmatprep.subr.bf16.mxu0 0
      %1701 = vmatpush1.bf16.msra.mxu0 %v1673
      %1702 = vmatprep.subr.bf16.mxu0 0
      %1703 = vmatpush1.bf16.msra.mxu0 %v1672
      %1704 = vmatprep.subr.bf16.mxu0 0
      %1705 = vmatpush2.bf16.msra.mxu0 0
      %1706 = vmatprep.subr.bf16.mxu0 0
      %1707 = vmatpush2.bf16.msra.mxu0 0
      %1708 = vmatprep.subr.bf16.mxu0 0
      %1709 = vmatpush2.bf16.msra.mxu0 0
      %1710 = vmatprep.subr.bf16.mxu0 0
      %1711 = vmatpush2.bf16.msra.mxu0 0
      %1712 = vmatprep.subr.bf16.mxu0 0
      %1713 = vmatpush2.bf16.msra.mxu0 0
      %1714 = vmatprep.subr.bf16.mxu0 0
      %1715 = vmatpush2.bf16.msra.mxu0 0
      %1716 = vmatprep.subr.bf16.mxu0 0
      %1717 = vmatpush2.bf16.msra.mxu0 0
      %1718 = vmatprep.subr.bf16.mxu0 0
      %1719 = vmatpush2.bf16.msra.mxu0 0
      %1720 = vmatprep.mubr.bf16.mxu0 0
      %1721 = vmatmul.mubr.bf16.gmra.mxu0 %v1632
      %v1722 = vpop.f32.mrf.mxu0
      %v1723 = vadd.f32 0.0, %v1722
      %v1724 = vpop.f32.mrf.mxu0
      %v1725 = vpop.f32.mrf.mxu0
      %v1726 = vadd.f32 0.0, %v1725
      %v1727 = vpop.f32.mrf.mxu0
      %1728 = vmatprep.mubr.bf16.mxu0 0
      %1729 = vmatmul.mubr.bf16.gmra.mxu0 %v1633
      %v1730 = vpop.f32.mrf.mxu0
      %v1731 = vadd.f32 0.0, %v1730
      %v1732 = vpop.f32.mrf.mxu0
      %v1733 = vpop.f32.mrf.mxu0
      %v1734 = vadd.f32 0.0, %v1733
      %v1735 = vpop.f32.mrf.mxu0
      %1736 = vmatprep.mubr.bf16.mxu0 0
      %1737 = vmatmul.mubr.bf16.gmra.mxu0 %v1634
      %v1738 = vpop.f32.mrf.mxu0
      %v1739 = vadd.f32 0.0, %v1738
      %v1740 = vpop.f32.mrf.mxu0
      %v1741 = vpop.f32.mrf.mxu0
      %v1742 = vadd.f32 0.0, %v1741
      %v1743 = vpop.f32.mrf.mxu0
      %1744 = vmatprep.mubr.bf16.mxu0 0
      %1745 = vmatmul.mubr.bf16.gmra.mxu0 %v1635
      %v1746 = vpop.f32.mrf.mxu0
      %v1747 = vadd.f32 0.0, %v1746
      %v1748 = vpop.f32.mrf.mxu0
      %v1749 = vpop.f32.mrf.mxu0
      %v1750 = vadd.f32 0.0, %v1749
      %v1751 = vpop.f32.mrf.mxu0
      %1752 = vdwg.mxu0
      %v1753 = vadd.f32 %v1599, %v1723
      %v1754 = vadd.f32 %v1600, %v1726
      %v1755 = vadd.f32 %v1601, %v1731
      %v1756 = vadd.f32 %v1602, %v1734
      %v1757 = vadd.f32 %v1603, %v1739
      %v1758 = vadd.f32 %v1604, %v1742
      %v1759 = vadd.f32 %v1605, %v1747
      %v1760 = vadd.f32 %v1606, %v1750
      %1761 = vst [vmem:[#allocation2] sm:$0xff] %v1753
      %1762 = vst [vmem:[#allocation2 + $0x8] sm:$0xff] %v1754
      %1763 = vst [vmem:[#allocation2 + $0x10] sm:$0xff] %v1755
      %1764 = vst [vmem:[#allocation2 + $0x18] sm:$0xff] %v1756
      %1765 = vst [vmem:[#allocation2 + $0x20] sm:$0xff] %v1757
      %1766 = vst [vmem:[#allocation2 + $0x28] sm:$0xff] %v1758
      %1767 = vst [vmem:[#allocation2 + $0x30] sm:$0xff] %v1759
      %1768 = vst [vmem:[#allocation2 + $0x38] sm:$0xff] %v1760
      %s1769 = scalar_lea.vmem %s285, 16
      %v1770 = vld [vmem:[%s1769] sm:$0xf]
      %v1771 = vld [vmem:[%s1769 + $0x8] sm:$0xf]
      %v1772 = vld [vmem:[%s1769 + $0x10] sm:$0xf]
      %v1773 = vld [vmem:[%s1769 + $0x18] sm:$0xf]
      %v1774 = vld [vmem:[%s1769 + $0x20] sm:$0xf]
      %v1775 = vld [vmem:[%s1769 + $0x28] sm:$0xf]
      %v1776 = vld [vmem:[%s1769 + $0x30] sm:$0xf]
      %v1777 = vld [vmem:[%s1769 + $0x38] sm:$0xf]
      %v1778 = vld [vmem:[#allocation2] sm:$0xff]
      %v1779 = vld [vmem:[#allocation2 + $0x8] sm:$0xff]
      %v1780 = vld [vmem:[#allocation2 + $0x10] sm:$0xff]
      %v1781 = vld [vmem:[#allocation2 + $0x18] sm:$0xff]
      %v1782 = vld [vmem:[#allocation2 + $0x20] sm:$0xff]
      %v1783 = vld [vmem:[#allocation2 + $0x28] sm:$0xff]
      %v1784 = vld [vmem:[#allocation2 + $0x30] sm:$0xff]
      %v1785 = vld [vmem:[#allocation2 + $0x38] sm:$0xff]
      %s1786 = scalar_lea.vmem %s293, 384
      %v1787 = vld [vmem:[%s1786] sm:$0xf]
      %v1788 = vld [vmem:[%s1786 + $0x4] sm:$0xf]
      %v1789 = vld [vmem:[%s1786 + $0x8] sm:$0xf]
      %v1790 = vld [vmem:[%s1786 + $0xc] sm:$0xf]
      %v1791 = vld [vmem:[%s1786 + $0x10] sm:$0xf]
      %v1792 = vld [vmem:[%s1786 + $0x14] sm:$0xf]
      %v1793 = vld [vmem:[%s1786 + $0x18] sm:$0xf]
      %v1794 = vld [vmem:[%s1786 + $0x1c] sm:$0xf]
      %v1795 = vld [vmem:[%s1786 + $0x20] sm:$0xf]
      %v1796 = vld [vmem:[%s1786 + $0x24] sm:$0xf]
      %v1797 = vld [vmem:[%s1786 + $0x28] sm:$0xf]
      %v1798 = vld [vmem:[%s1786 + $0x2c] sm:$0xf]
      %v1799 = vld [vmem:[%s1786 + $0x30] sm:$0xf]
      %v1800 = vld [vmem:[%s1786 + $0x34] sm:$0xf]
      %v1801 = vld [vmem:[%s1786 + $0x38] sm:$0xf]
      %v1802 = vld [vmem:[%s1786 + $0x3c] sm:$0xf]
      %v1811 = vunpack.c.l.b16 %v1770
      %v1812 = vunpack.c.l.b16 %v1771
      %v1813 = vunpack.c.l.b16 %v1772
      %v1814 = vunpack.c.l.b16 %v1773
      %v1815 = vunpack.c.l.b16 %v1774
      %v1816 = vunpack.c.l.b16 %v1775
      %v1817 = vunpack.c.l.b16 %v1776
      %v1818 = vunpack.c.l.b16 %v1777
      %v1819 = vpack.c.b16 %v1812, %v1811
      %v1820 = vpack.c.b16 %v1814, %v1813
      %v1821 = vpack.c.b16 %v1816, %v1815
      %v1822 = vpack.c.b16 %v1818, %v1817
      %v1843 = vunpack.c.l.b16 %v1787
      %v1844 = vunpack.c.l.b16 %v1788
      %v1845 = vunpack.c.l.b16 %v1789
      %v1846 = vunpack.c.l.b16 %v1790
      %v1847 = vunpack.c.l.b16 %v1791
      %v1848 = vunpack.c.l.b16 %v1792
      %v1849 = vunpack.c.l.b16 %v1793
      %v1850 = vunpack.c.l.b16 %v1794
      %v1851 = vunpack.c.l.b16 %v1795
      %v1852 = vunpack.c.l.b16 %v1796
      %v1853 = vunpack.c.l.b16 %v1797
      %v1854 = vunpack.c.l.b16 %v1798
      %v1855 = vunpack.c.l.b16 %v1799
      %v1856 = vunpack.c.l.b16 %v1800
      %v1857 = vunpack.c.l.b16 %v1801
      %v1858 = vunpack.c.l.b16 %v1802
      %v1859 = vpack.c.b16 %v1844, %v1843
      %v1860 = vpack.c.b16 %v1846, %v1845
      %v1861 = vpack.c.b16 %v1848, %v1847
      %v1862 = vpack.c.b16 %v1850, %v1849
      %v1863 = vpack.c.b16 %v1852, %v1851
      %v1864 = vpack.c.b16 %v1854, %v1853
      %v1865 = vpack.c.b16 %v1856, %v1855
      %v1866 = vpack.c.b16 %v1858, %v1857
      %1875 = vmatprep.subr.bf16.mxu0 0
      %1876 = vmatpush1.bf16.msra.mxu0 %v1866
      %1877 = vmatprep.subr.bf16.mxu0 0
      %1878 = vmatpush1.bf16.msra.mxu0 %v1865
      %1879 = vmatprep.subr.bf16.mxu0 0
      %1880 = vmatpush1.bf16.msra.mxu0 %v1864
      %1881 = vmatprep.subr.bf16.mxu0 0
      %1882 = vmatpush1.bf16.msra.mxu0 %v1863
      %1883 = vmatprep.subr.bf16.mxu0 0
      %1884 = vmatpush1.bf16.msra.mxu0 %v1862
      %1885 = vmatprep.subr.bf16.mxu0 0
      %1886 = vmatpush1.bf16.msra.mxu0 %v1861
      %1887 = vmatprep.subr.bf16.mxu0 0
      %1888 = vmatpush1.bf16.msra.mxu0 %v1860
      %1889 = vmatprep.subr.bf16.mxu0 0
      %1890 = vmatpush1.bf16.msra.mxu0 %v1859
      %1891 = vmatprep.subr.bf16.mxu0 0
      %1892 = vmatpush2.bf16.msra.mxu0 0
      %1893 = vmatprep.subr.bf16.mxu0 0
      %1894 = vmatpush2.bf16.msra.mxu0 0
      %1895 = vmatprep.subr.bf16.mxu0 0
      %1896 = vmatpush2.bf16.msra.mxu0 0
      %1897 = vmatprep.subr.bf16.mxu0 0
      %1898 = vmatpush2.bf16.msra.mxu0 0
      %1899 = vmatprep.subr.bf16.mxu0 0
      %1900 = vmatpush2.bf16.msra.mxu0 0
      %1901 = vmatprep.subr.bf16.mxu0 0
      %1902 = vmatpush2.bf16.msra.mxu0 0
      %1903 = vmatprep.subr.bf16.mxu0 0
      %1904 = vmatpush2.bf16.msra.mxu0 0
      %1905 = vmatprep.subr.bf16.mxu0 0
      %1906 = vmatpush2.bf16.msra.mxu0 0
      %1907 = vmatprep.mubr.bf16.mxu0 0
      %1908 = vmatmul.mubr.bf16.gmra.mxu0 %v1819
      %v1909 = vpop.f32.mrf.mxu0
      %v1910 = vadd.f32 0.0, %v1909
      %v1911 = vpop.f32.mrf.mxu0
      %v1912 = vpop.f32.mrf.mxu0
      %v1913 = vadd.f32 0.0, %v1912
      %v1914 = vpop.f32.mrf.mxu0
      %1915 = vmatprep.mubr.bf16.mxu0 0
      %1916 = vmatmul.mubr.bf16.gmra.mxu0 %v1820
      %v1917 = vpop.f32.mrf.mxu0
      %v1918 = vadd.f32 0.0, %v1917
      %v1919 = vpop.f32.mrf.mxu0
      %v1920 = vpop.f32.mrf.mxu0
      %v1921 = vadd.f32 0.0, %v1920
      %v1922 = vpop.f32.mrf.mxu0
      %1923 = vmatprep.mubr.bf16.mxu0 0
      %1924 = vmatmul.mubr.bf16.gmra.mxu0 %v1821
      %v1925 = vpop.f32.mrf.mxu0
      %v1926 = vadd.f32 0.0, %v1925
      %v1927 = vpop.f32.mrf.mxu0
      %v1928 = vpop.f32.mrf.mxu0
      %v1929 = vadd.f32 0.0, %v1928
      %v1930 = vpop.f32.mrf.mxu0
      %1931 = vmatprep.mubr.bf16.mxu0 0
      %1932 = vmatmul.mubr.bf16.gmra.mxu0 %v1822
      %v1933 = vpop.f32.mrf.mxu0
      %v1934 = vadd.f32 0.0, %v1933
      %v1935 = vpop.f32.mrf.mxu0
      %v1936 = vpop.f32.mrf.mxu0
      %v1937 = vadd.f32 0.0, %v1936
      %v1938 = vpop.f32.mrf.mxu0
      %1939 = vdwg.mxu0
      %v1940 = vadd.f32 %v1778, %v1910
      %v1941 = vadd.f32 %v1779, %v1913
      %v1942 = vadd.f32 %v1780, %v1918
      %v1943 = vadd.f32 %v1781, %v1921
      %v1944 = vadd.f32 %v1782, %v1926
      %v1945 = vadd.f32 %v1783, %v1929
      %v1946 = vadd.f32 %v1784, %v1934
      %v1947 = vadd.f32 %v1785, %v1937
      %1948 = vst [vmem:[#allocation2] sm:$0xff] %v1940
      %1949 = vst [vmem:[#allocation2 + $0x8] sm:$0xff] %v1941
      %1950 = vst [vmem:[#allocation2 + $0x10] sm:$0xff] %v1942
      %1951 = vst [vmem:[#allocation2 + $0x18] sm:$0xff] %v1943
      %1952 = vst [vmem:[#allocation2 + $0x20] sm:$0xff] %v1944
      %1953 = vst [vmem:[#allocation2 + $0x28] sm:$0xff] %v1945
      %1954 = vst [vmem:[#allocation2 + $0x30] sm:$0xff] %v1946
      %1955 = vst [vmem:[#allocation2 + $0x38] sm:$0xff] %v1947
      %v1956 = vld [vmem:[%s1769] sm:$0xf]
      %v1957 = vld [vmem:[%s1769 + $0x4] sm:$0x1]
      %v1958 = vld [vmem:[%s1769 + $0x8] sm:$0xf]
      %v1959 = vld [vmem:[%s1769 + $0xc] sm:$0x1]
      %v1960 = vld [vmem:[%s1769 + $0x10] sm:$0xf]
      %v1961 = vld [vmem:[%s1769 + $0x14] sm:$0x1]
      %v1962 = vld [vmem:[%s1769 + $0x18] sm:$0xf]
      %v1963 = vld [vmem:[%s1769 + $0x1c] sm:$0x1]
      %v1964 = vld [vmem:[%s1769 + $0x20] sm:$0xf]
      %v1965 = vld [vmem:[%s1769 + $0x24] sm:$0x1]
      %v1966 = vld [vmem:[%s1769 + $0x28] sm:$0xf]
      %v1967 = vld [vmem:[%s1769 + $0x2c] sm:$0x1]
      %v1968 = vld [vmem:[%s1769 + $0x30] sm:$0xf]
      %v1969 = vld [vmem:[%s1769 + $0x34] sm:$0x1]
      %v1970 = vld [vmem:[%s1769 + $0x38] sm:$0xf]
      %v1971 = vld [vmem:[%s1769 + $0x3c] sm:$0x1]
      %v1973 = vshrl.u32 %v1956, 16
      %v1975 = vrot.slane %v1973, 4
      %v1976 = vshll.u32 %v1956, 16
      %v1978 = vrot.slane %v1976, 5
      %v1979 = vor.u32 %v1975, %v1978
      %v1980 = vrot.slane %v1979, 4
      %v1982 = vshll.u32 %v1957, 16
      %v1984 = vrot.slane %v1982, 5
      %v1985 = vsel %vm530, %v1980, %v1984
      %v1987 = vshrl.u32 %v1958, 16
      %v1989 = vrot.slane %v1987, 4
      %v1990 = vshll.u32 %v1958, 16
      %v1992 = vrot.slane %v1990, 5
      %v1993 = vor.u32 %v1989, %v1992
      %v1994 = vrot.slane %v1993, 4
      %v1996 = vshll.u32 %v1959, 16
      %v1998 = vrot.slane %v1996, 5
      %v1999 = vsel %vm530, %v1994, %v1998
      %v2001 = vshrl.u32 %v1960, 16
      %v2003 = vrot.slane %v2001, 4
      %v2004 = vshll.u32 %v1960, 16
      %v2006 = vrot.slane %v2004, 5
      %v2007 = vor.u32 %v2003, %v2006
      %v2008 = vrot.slane %v2007, 4
      %v2010 = vshll.u32 %v1961, 16
      %v2012 = vrot.slane %v2010, 5
      %v2013 = vsel %vm530, %v2008, %v2012
      %v2015 = vshrl.u32 %v1962, 16
      %v2017 = vrot.slane %v2015, 4
      %v2018 = vshll.u32 %v1962, 16
      %v2020 = vrot.slane %v2018, 5
      %v2021 = vor.u32 %v2017, %v2020
      %v2022 = vrot.slane %v2021, 4
      %v2024 = vshll.u32 %v1963, 16
      %v2026 = vrot.slane %v2024, 5
      %v2027 = vsel %vm530, %v2022, %v2026
      %v2029 = vshrl.u32 %v1964, 16
      %v2031 = vrot.slane %v2029, 4
      %v2032 = vshll.u32 %v1964, 16
      %v2034 = vrot.slane %v2032, 5
      %v2035 = vor.u32 %v2031, %v2034
      %v2036 = vrot.slane %v2035, 4
      %v2038 = vshll.u32 %v1965, 16
      %v2040 = vrot.slane %v2038, 5
      %v2041 = vsel %vm530, %v2036, %v2040
      %v2043 = vshrl.u32 %v1966, 16
      %v2045 = vrot.slane %v2043, 4
      %v2046 = vshll.u32 %v1966, 16
      %v2048 = vrot.slane %v2046, 5
      %v2049 = vor.u32 %v2045, %v2048
      %v2050 = vrot.slane %v2049, 4
      %v2052 = vshll.u32 %v1967, 16
      %v2054 = vrot.slane %v2052, 5
      %v2055 = vsel %vm530, %v2050, %v2054
      %v2057 = vshrl.u32 %v1968, 16
      %v2059 = vrot.slane %v2057, 4
      %v2060 = vshll.u32 %v1968, 16
      %v2062 = vrot.slane %v2060, 5
      %v2063 = vor.u32 %v2059, %v2062
      %v2064 = vrot.slane %v2063, 4
      %v2066 = vshll.u32 %v1969, 16
      %v2068 = vrot.slane %v2066, 5
      %v2069 = vsel %vm530, %v2064, %v2068
      %v2071 = vshrl.u32 %v1970, 16
      %v2073 = vrot.slane %v2071, 4
      %v2074 = vshll.u32 %v1970, 16
      %v2076 = vrot.slane %v2074, 5
      %v2077 = vor.u32 %v2073, %v2076
      %v2078 = vrot.slane %v2077, 4
      %v2080 = vshll.u32 %v1971, 16
      %v2082 = vrot.slane %v2080, 5
      %v2083 = vsel %vm530, %v2078, %v2082
      %v2084 = vld [vmem:[#allocation2] sm:$0xff]
      %v2085 = vld [vmem:[#allocation2 + $0x8] sm:$0xff]
      %v2086 = vld [vmem:[#allocation2 + $0x10] sm:$0xff]
      %v2087 = vld [vmem:[#allocation2 + $0x18] sm:$0xff]
      %v2088 = vld [vmem:[#allocation2 + $0x20] sm:$0xff]
      %v2089 = vld [vmem:[#allocation2 + $0x28] sm:$0xff]
      %v2090 = vld [vmem:[#allocation2 + $0x30] sm:$0xff]
      %v2091 = vld [vmem:[#allocation2 + $0x38] sm:$0xff]
      %s2092 = scalar_lea.vmem %s293, 448
      %v2093 = vld [vmem:[%s2092] sm:$0xf]
      %v2094 = vld [vmem:[%s2092 + $0x4] sm:$0xf]
      %v2095 = vld [vmem:[%s2092 + $0x8] sm:$0xf]
      %v2096 = vld [vmem:[%s2092 + $0xc] sm:$0xf]
      %v2097 = vld [vmem:[%s2092 + $0x10] sm:$0xf]
      %v2098 = vld [vmem:[%s2092 + $0x14] sm:$0xf]
      %v2099 = vld [vmem:[%s2092 + $0x18] sm:$0xf]
      %v2100 = vld [vmem:[%s2092 + $0x1c] sm:$0xf]
      %v2101 = vld [vmem:[%s2092 + $0x20] sm:$0xf]
      %v2102 = vld [vmem:[%s2092 + $0x24] sm:$0xf]
      %v2103 = vld [vmem:[%s2092 + $0x28] sm:$0xf]
      %v2104 = vld [vmem:[%s2092 + $0x2c] sm:$0xf]
      %v2105 = vld [vmem:[%s2092 + $0x30] sm:$0xf]
      %v2106 = vld [vmem:[%s2092 + $0x34] sm:$0xf]
      %v2107 = vld [vmem:[%s2092 + $0x38] sm:$0xf]
      %v2108 = vld [vmem:[%s2092 + $0x3c] sm:$0xf]
      %v2109 = vunpack.c.l.b16 %v1985
      %v2110 = vunpack.c.l.b16 %v1999
      %v2111 = vunpack.c.l.b16 %v2013
      %v2112 = vunpack.c.l.b16 %v2027
      %v2113 = vunpack.c.l.b16 %v2041
      %v2114 = vunpack.c.l.b16 %v2055
      %v2115 = vunpack.c.l.b16 %v2069
      %v2116 = vunpack.c.l.b16 %v2083
      %v2117 = vpack.c.b16 %v2110, %v2109
      %v2118 = vpack.c.b16 %v2112, %v2111
      %v2119 = vpack.c.b16 %v2114, %v2113
      %v2120 = vpack.c.b16 %v2116, %v2115
      %v2141 = vunpack.c.l.b16 %v2093
      %v2142 = vunpack.c.l.b16 %v2094
      %v2143 = vunpack.c.l.b16 %v2095
      %v2144 = vunpack.c.l.b16 %v2096
      %v2145 = vunpack.c.l.b16 %v2097
      %v2146 = vunpack.c.l.b16 %v2098
      %v2147 = vunpack.c.l.b16 %v2099
      %v2148 = vunpack.c.l.b16 %v2100
      %v2149 = vunpack.c.l.b16 %v2101
      %v2150 = vunpack.c.l.b16 %v2102
      %v2151 = vunpack.c.l.b16 %v2103
      %v2152 = vunpack.c.l.b16 %v2104
      %v2153 = vunpack.c.l.b16 %v2105
      %v2154 = vunpack.c.l.b16 %v2106
      %v2155 = vunpack.c.l.b16 %v2107
      %v2156 = vunpack.c.l.b16 %v2108
      %v2157 = vpack.c.b16 %v2142, %v2141
      %v2158 = vpack.c.b16 %v2144, %v2143
      %v2159 = vpack.c.b16 %v2146, %v2145
      %v2160 = vpack.c.b16 %v2148, %v2147
      %v2161 = vpack.c.b16 %v2150, %v2149
      %v2162 = vpack.c.b16 %v2152, %v2151
      %v2163 = vpack.c.b16 %v2154, %v2153
      %v2164 = vpack.c.b16 %v2156, %v2155
      %2173 = vmatprep.subr.bf16.mxu0 0
      %2174 = vmatpush1.bf16.msra.mxu0 %v2164
      %2175 = vmatprep.subr.bf16.mxu0 0
      %2176 = vmatpush1.bf16.msra.mxu0 %v2163
      %2177 = vmatprep.subr.bf16.mxu0 0
      %2178 = vmatpush1.bf16.msra.mxu0 %v2162
      %2179 = vmatprep.subr.bf16.mxu0 0
      %2180 = vmatpush1.bf16.msra.mxu0 %v2161
      %2181 = vmatprep.subr.bf16.mxu0 0
      %2182 = vmatpush1.bf16.msra.mxu0 %v2160
      %2183 = vmatprep.subr.bf16.mxu0 0
      %2184 = vmatpush1.bf16.msra.mxu0 %v2159
      %2185 = vmatprep.subr.bf16.mxu0 0
      %2186 = vmatpush1.bf16.msra.mxu0 %v2158
      %2187 = vmatprep.subr.bf16.mxu0 0
      %2188 = vmatpush1.bf16.msra.mxu0 %v2157
      %2189 = vmatprep.subr.bf16.mxu0 0
      %2190 = vmatpush2.bf16.msra.mxu0 0
      %2191 = vmatprep.subr.bf16.mxu0 0
      %2192 = vmatpush2.bf16.msra.mxu0 0
      %2193 = vmatprep.subr.bf16.mxu0 0
      %2194 = vmatpush2.bf16.msra.mxu0 0
      %2195 = vmatprep.subr.bf16.mxu0 0
      %2196 = vmatpush2.bf16.msra.mxu0 0
      %2197 = vmatprep.subr.bf16.mxu0 0
      %2198 = vmatpush2.bf16.msra.mxu0 0
      %2199 = vmatprep.subr.bf16.mxu0 0
      %2200 = vmatpush2.bf16.msra.mxu0 0
      %2201 = vmatprep.subr.bf16.mxu0 0
      %2202 = vmatpush2.bf16.msra.mxu0 0
      %2203 = vmatprep.subr.bf16.mxu0 0
      %2204 = vmatpush2.bf16.msra.mxu0 0
      %2205 = vmatprep.mubr.bf16.mxu0 0
      %2206 = vmatmul.mubr.bf16.gmra.mxu0 %v2117
      %v2207 = vpop.f32.mrf.mxu0
      %v2208 = vadd.f32 0.0, %v2207
      %v2209 = vpop.f32.mrf.mxu0
      %v2210 = vpop.f32.mrf.mxu0
      %v2211 = vadd.f32 0.0, %v2210
      %v2212 = vpop.f32.mrf.mxu0
      %2213 = vmatprep.mubr.bf16.mxu0 0
      %2214 = vmatmul.mubr.bf16.gmra.mxu0 %v2118
      %v2215 = vpop.f32.mrf.mxu0
      %v2216 = vadd.f32 0.0, %v2215
      %v2217 = vpop.f32.mrf.mxu0
      %v2218 = vpop.f32.mrf.mxu0
      %v2219 = vadd.f32 0.0, %v2218
      %v2220 = vpop.f32.mrf.mxu0
      %2221 = vmatprep.mubr.bf16.mxu0 0
      %2222 = vmatmul.mubr.bf16.gmra.mxu0 %v2119
      %v2223 = vpop.f32.mrf.mxu0
      %v2224 = vadd.f32 0.0, %v2223
      %v2225 = vpop.f32.mrf.mxu0
      %v2226 = vpop.f32.mrf.mxu0
      %v2227 = vadd.f32 0.0, %v2226
      %v2228 = vpop.f32.mrf.mxu0
      %2229 = vmatprep.mubr.bf16.mxu0 0
      %2230 = vmatmul.mubr.bf16.gmra.mxu0 %v2120
      %v2231 = vpop.f32.mrf.mxu0
      %v2232 = vadd.f32 0.0, %v2231
      %v2233 = vpop.f32.mrf.mxu0
      %v2234 = vpop.f32.mrf.mxu0
      %v2235 = vadd.f32 0.0, %v2234
      %v2236 = vpop.f32.mrf.mxu0
      %2237 = vdwg.mxu0
      %v2238 = vadd.f32 %v2084, %v2208
      %v2239 = vadd.f32 %v2085, %v2211
      %v2240 = vadd.f32 %v2086, %v2216
      %v2241 = vadd.f32 %v2087, %v2219
      %v2242 = vadd.f32 %v2088, %v2224
      %v2243 = vadd.f32 %v2089, %v2227
      %v2244 = vadd.f32 %v2090, %v2232
      %v2245 = vadd.f32 %v2091, %v2235
      %2246 = vst [vmem:[#allocation2] sm:$0xff] %v2238
      %2247 = vst [vmem:[#allocation2 + $0x8] sm:$0xff] %v2239
      %2248 = vst [vmem:[#allocation2 + $0x10] sm:$0xff] %v2240
      %2249 = vst [vmem:[#allocation2 + $0x18] sm:$0xff] %v2241
      %2250 = vst [vmem:[#allocation2 + $0x20] sm:$0xff] %v2242
      %2251 = vst [vmem:[#allocation2 + $0x28] sm:$0xff] %v2243
      %2252 = vst [vmem:[#allocation2 + $0x30] sm:$0xff] %v2244
      %2253 = vst [vmem:[#allocation2 + $0x38] sm:$0xff] %v2245
      %v2254 = vld [vmem:[%s1769] sm:$0xe]
      %v2255 = vld [vmem:[%s1769 + $0x4] sm:$0x1]
      %v2256 = vld [vmem:[%s1769 + $0x8] sm:$0xe]
      %v2257 = vld [vmem:[%s1769 + $0xc] sm:$0x1]
      %v2258 = vld [vmem:[%s1769 + $0x10] sm:$0xe]
      %v2259 = vld [vmem:[%s1769 + $0x14] sm:$0x1]
      %v2260 = vld [vmem:[%s1769 + $0x18] sm:$0xe]
      %v2261 = vld [vmem:[%s1769 + $0x1c] sm:$0x1]
      %v2262 = vld [vmem:[%s1769 + $0x20] sm:$0xe]
      %v2263 = vld [vmem:[%s1769 + $0x24] sm:$0x1]
      %v2264 = vld [vmem:[%s1769 + $0x28] sm:$0xe]
      %v2265 = vld [vmem:[%s1769 + $0x2c] sm:$0x1]
      %v2266 = vld [vmem:[%s1769 + $0x30] sm:$0xe]
      %v2267 = vld [vmem:[%s1769 + $0x34] sm:$0x1]
      %v2268 = vld [vmem:[%s1769 + $0x38] sm:$0xe]
      %v2269 = vld [vmem:[%s1769 + $0x3c] sm:$0x1]
      %v2286 = vrot.slane %v2254, 5
      %v2287 = vrot.slane %v2286, 4
      %v2288 = vrot.slane %v2255, 5
      %v2289 = vsel %vm847, %v2287, %v2288
      %v2290 = vrot.slane %v2256, 5
      %v2291 = vrot.slane %v2290, 4
      %v2292 = vrot.slane %v2257, 5
      %v2293 = vsel %vm847, %v2291, %v2292
      %v2294 = vrot.slane %v2258, 5
      %v2295 = vrot.slane %v2294, 4
      %v2296 = vrot.slane %v2259, 5
      %v2297 = vsel %vm847, %v2295, %v2296
      %v2298 = vrot.slane %v2260, 5
      %v2299 = vrot.slane %v2298, 4
      %v2300 = vrot.slane %v2261, 5
      %v2301 = vsel %vm847, %v2299, %v2300
      %v2302 = vrot.slane %v2262, 5
      %v2303 = vrot.slane %v2302, 4
      %v2304 = vrot.slane %v2263, 5
      %v2305 = vsel %vm847, %v2303, %v2304
      %v2306 = vrot.slane %v2264, 5
      %v2307 = vrot.slane %v2306, 4
      %v2308 = vrot.slane %v2265, 5
      %v2309 = vsel %vm847, %v2307, %v2308
      %v2310 = vrot.slane %v2266, 5
      %v2311 = vrot.slane %v2310, 4
      %v2312 = vrot.slane %v2267, 5
      %v2313 = vsel %vm847, %v2311, %v2312
      %v2314 = vrot.slane %v2268, 5
      %v2315 = vrot.slane %v2314, 4
      %v2316 = vrot.slane %v2269, 5
      %v2317 = vsel %vm847, %v2315, %v2316
      %v2318 = vld [vmem:[#allocation2] sm:$0xff]
      %v2319 = vld [vmem:[#allocation2 + $0x8] sm:$0xff]
      %v2320 = vld [vmem:[#allocation2 + $0x10] sm:$0xff]
      %v2321 = vld [vmem:[#allocation2 + $0x18] sm:$0xff]
      %v2322 = vld [vmem:[#allocation2 + $0x20] sm:$0xff]
      %v2323 = vld [vmem:[#allocation2 + $0x28] sm:$0xff]
      %v2324 = vld [vmem:[#allocation2 + $0x30] sm:$0xff]
      %v2325 = vld [vmem:[#allocation2 + $0x38] sm:$0xff]
      %s2326 = scalar_lea.vmem %s293, 512
      %v2327 = vld [vmem:[%s2326] sm:$0xf]
      %v2328 = vld [vmem:[%s2326 + $0x4] sm:$0xf]
      %v2329 = vld [vmem:[%s2326 + $0x8] sm:$0xf]
      %v2330 = vld [vmem:[%s2326 + $0xc] sm:$0xf]
      %v2331 = vld [vmem:[%s2326 + $0x10] sm:$0xf]
      %v2332 = vld [vmem:[%s2326 + $0x14] sm:$0xf]
      %v2333 = vld [vmem:[%s2326 + $0x18] sm:$0xf]
      %v2334 = vld [vmem:[%s2326 + $0x1c] sm:$0xf]
      %v2335 = vld [vmem:[%s2326 + $0x20] sm:$0xf]
      %v2336 = vld [vmem:[%s2326 + $0x24] sm:$0xf]
      %v2337 = vld [vmem:[%s2326 + $0x28] sm:$0xf]
      %v2338 = vld [vmem:[%s2326 + $0x2c] sm:$0xf]
      %v2339 = vld [vmem:[%s2326 + $0x30] sm:$0xf]
      %v2340 = vld [vmem:[%s2326 + $0x34] sm:$0xf]
      %v2341 = vld [vmem:[%s2326 + $0x38] sm:$0xf]
      %v2342 = vld [vmem:[%s2326 + $0x3c] sm:$0xf]
      %v2343 = vunpack.c.l.b16 %v2289
      %v2344 = vunpack.c.l.b16 %v2293
      %v2345 = vunpack.c.l.b16 %v2297
      %v2346 = vunpack.c.l.b16 %v2301
      %v2347 = vunpack.c.l.b16 %v2305
      %v2348 = vunpack.c.l.b16 %v2309
      %v2349 = vunpack.c.l.b16 %v2313
      %v2350 = vunpack.c.l.b16 %v2317
      %v2351 = vpack.c.b16 %v2344, %v2343
      %v2352 = vpack.c.b16 %v2346, %v2345
      %v2353 = vpack.c.b16 %v2348, %v2347
      %v2354 = vpack.c.b16 %v2350, %v2349
      %v2375 = vunpack.c.l.b16 %v2327
      %v2376 = vunpack.c.l.b16 %v2328
      %v2377 = vunpack.c.l.b16 %v2329
      %v2378 = vunpack.c.l.b16 %v2330
      %v2379 = vunpack.c.l.b16 %v2331
      %v2380 = vunpack.c.l.b16 %v2332
      %v2381 = vunpack.c.l.b16 %v2333
      %v2382 = vunpack.c.l.b16 %v2334
      %v2383 = vunpack.c.l.b16 %v2335
      %v2384 = vunpack.c.l.b16 %v2336
      %v2385 = vunpack.c.l.b16 %v2337
      %v2386 = vunpack.c.l.b16 %v2338
      %v2387 = vunpack.c.l.b16 %v2339
      %v2388 = vunpack.c.l.b16 %v2340
      %v2389 = vunpack.c.l.b16 %v2341
      %v2390 = vunpack.c.l.b16 %v2342
      %v2391 = vpack.c.b16 %v2376, %v2375
      %v2392 = vpack.c.b16 %v2378, %v2377
      %v2393 = vpack.c.b16 %v2380, %v2379
      %v2394 = vpack.c.b16 %v2382, %v2381
      %v2395 = vpack.c.b16 %v2384, %v2383
      %v2396 = vpack.c.b16 %v2386, %v2385
      %v2397 = vpack.c.b16 %v2388, %v2387
      %v2398 = vpack.c.b16 %v2390, %v2389
      %2407 = vmatprep.subr.bf16.mxu0 0
      %2408 = vmatpush1.bf16.msra.mxu0 %v2398
      %2409 = vmatprep.subr.bf16.mxu0 0
      %2410 = vmatpush1.bf16.msra.mxu0 %v2397
      %2411 = vmatprep.subr.bf16.mxu0 0
      %2412 = vmatpush1.bf16.msra.mxu0 %v2396
      %2413 = vmatprep.subr.bf16.mxu0 0
      %2414 = vmatpush1.bf16.msra.mxu0 %v2395
      %2415 = vmatprep.subr.bf16.mxu0 0
      %2416 = vmatpush1.bf16.msra.mxu0 %v2394
      %2417 = vmatprep.subr.bf16.mxu0 0
      %2418 = vmatpush1.bf16.msra.mxu0 %v2393
      %2419 = vmatprep.subr.bf16.mxu0 0
      %2420 = vmatpush1.bf16.msra.mxu0 %v2392
      %2421 = vmatprep.subr.bf16.mxu0 0
      %2422 = vmatpush1.bf16.msra.mxu0 %v2391
      %2423 = vmatprep.subr.bf16.mxu0 0
      %2424 = vmatpush2.bf16.msra.mxu0 0
      %2425 = vmatprep.subr.bf16.mxu0 0
      %2426 = vmatpush2.bf16.msra.mxu0 0
      %2427 = vmatprep.subr.bf16.mxu0 0
      %2428 = vmatpush2.bf16.msra.mxu0 0
      %2429 = vmatprep.subr.bf16.mxu0 0
      %2430 = vmatpush2.bf16.msra.mxu0 0
      %2431 = vmatprep.subr.bf16.mxu0 0
      %2432 = vmatpush2.bf16.msra.mxu0 0
      %2433 = vmatprep.subr.bf16.mxu0 0
      %2434 = vmatpush2.bf16.msra.mxu0 0
      %2435 = vmatprep.subr.bf16.mxu0 0
      %2436 = vmatpush2.bf16.msra.mxu0 0
      %2437 = vmatprep.subr.bf16.mxu0 0
      %2438 = vmatpush2.bf16.msra.mxu0 0
      %2439 = vmatprep.mubr.bf16.mxu0 0
      %2440 = vmatmul.mubr.bf16.gmra.mxu0 %v2351
      %v2441 = vpop.f32.mrf.mxu0
      %v2442 = vadd.f32 0.0, %v2441
      %v2443 = vpop.f32.mrf.mxu0
      %v2444 = vpop.f32.mrf.mxu0
      %v2445 = vadd.f32 0.0, %v2444
      %v2446 = vpop.f32.mrf.mxu0
      %2447 = vmatprep.mubr.bf16.mxu0 0
      %2448 = vmatmul.mubr.bf16.gmra.mxu0 %v2352
      %v2449 = vpop.f32.mrf.mxu0
      %v2450 = vadd.f32 0.0, %v2449
      %v2451 = vpop.f32.mrf.mxu0
      %v2452 = vpop.f32.mrf.mxu0
      %v2453 = vadd.f32 0.0, %v2452
      %v2454 = vpop.f32.mrf.mxu0
      %2455 = vmatprep.mubr.bf16.mxu0 0
      %2456 = vmatmul.mubr.bf16.gmra.mxu0 %v2353
      %v2457 = vpop.f32.mrf.mxu0
      %v2458 = vadd.f32 0.0, %v2457
      %v2459 = vpop.f32.mrf.mxu0
      %v2460 = vpop.f32.mrf.mxu0
      %v2461 = vadd.f32 0.0, %v2460
      %v2462 = vpop.f32.mrf.mxu0
      %2463 = vmatprep.mubr.bf16.mxu0 0
      %2464 = vmatmul.mubr.bf16.gmra.mxu0 %v2354
      %v2465 = vpop.f32.mrf.mxu0
      %v2466 = vadd.f32 0.0, %v2465
      %v2467 = vpop.f32.mrf.mxu0
      %v2468 = vpop.f32.mrf.mxu0
      %v2469 = vadd.f32 0.0, %v2468
      %v2470 = vpop.f32.mrf.mxu0
      %2471 = vdwg.mxu0
      %v2472 = vadd.f32 %v2318, %v2442
      %v2473 = vadd.f32 %v2319, %v2445
      %v2474 = vadd.f32 %v2320, %v2450
      %v2475 = vadd.f32 %v2321, %v2453
      %v2476 = vadd.f32 %v2322, %v2458
      %v2477 = vadd.f32 %v2323, %v2461
      %v2478 = vadd.f32 %v2324, %v2466
      %v2479 = vadd.f32 %v2325, %v2469
      %2480 = vst [vmem:[#allocation2] sm:$0xff] %v2472
      %2481 = vst [vmem:[#allocation2 + $0x8] sm:$0xff] %v2473
      %2482 = vst [vmem:[#allocation2 + $0x10] sm:$0xff] %v2474
      %2483 = vst [vmem:[#allocation2 + $0x18] sm:$0xff] %v2475
      %2484 = vst [vmem:[#allocation2 + $0x20] sm:$0xff] %v2476
      %2485 = vst [vmem:[#allocation2 + $0x28] sm:$0xff] %v2477
      %2486 = vst [vmem:[#allocation2 + $0x30] sm:$0xff] %v2478
      %2487 = vst [vmem:[#allocation2 + $0x38] sm:$0xff] %v2479
      // Predicated region
      $region41: #{basic_block_forward.5} parent=35 // pred_check
        %p2488 = pneg %p315
      $region42: #{basic_block_forward.5} parent=35 // pred_check_branch
        %2490 = sbr.rel (%p2488) target = $region44
      $region43: #{basic_block_forward.5} parent=35 // pred_region
        %v2491 = vld [vmem:[#allocation2] sm:$0xff]
        %v2492 = vld [vmem:[#allocation2 + $0x8] sm:$0xff]
        %v2493 = vld [vmem:[#allocation2 + $0x10] sm:$0xff]
        %v2494 = vld [vmem:[#allocation2 + $0x18] sm:$0xff]
        %v2495 = vld [vmem:[#allocation2 + $0x20] sm:$0xff]
        %v2496 = vld [vmem:[#allocation2 + $0x28] sm:$0xff]
        %v2497 = vld [vmem:[#allocation2 + $0x30] sm:$0xff]
        %v2498 = vld [vmem:[#allocation2 + $0x38] sm:$0xff]
        %v2499 = vld [vmem:[%s297] sm:$0x1]
        %v2501 = vlaneseq
        %v2502 = vshrl.u32 %v2501, 7
        %v2503 = vsub.s32 0, %v2502
        %v2504 = vrot.slane %v2499, %v2503
        %v2506 = vadd.f32 %v2491, %v2504
        %v2507 = vadd.f32 %v2492, %v2504
        %v2508 = vadd.f32 %v2493, %v2504
        %v2509 = vadd.f32 %v2494, %v2504
        %v2510 = vadd.f32 %v2495, %v2504
        %v2511 = vadd.f32 %v2496, %v2504
        %v2512 = vadd.f32 %v2497, %v2504
        %v2513 = vadd.f32 %v2498, %v2504
        %v2514 = vld [vmem:[%s305] sm:$0xf]
        %v2515 = vld [vmem:[%s305 + $0x4] sm:$0xf]
        %v2516 = vld [vmem:[%s305 + $0x8] sm:$0xf]
        %v2517 = vld [vmem:[%s305 + $0xc] sm:$0xf]
        %v2518 = vld [vmem:[%s305 + $0x10] sm:$0xf]
        %v2519 = vld [vmem:[%s305 + $0x14] sm:$0xf]
        %v2520 = vld [vmem:[%s305 + $0x18] sm:$0xf]
        %v2521 = vld [vmem:[%s305 + $0x1c] sm:$0xf]
        %v2522 = vunpack.c.l.bf16 %v2514
        %v2523 = vunpack.c.l.bf16 %v2515
        %v2524 = vunpack.c.l.bf16 %v2516
        %v2525 = vunpack.c.l.bf16 %v2517
        %v2526 = vunpack.c.l.bf16 %v2518
        %v2527 = vunpack.c.l.bf16 %v2519
        %v2528 = vunpack.c.l.bf16 %v2520
        %v2529 = vunpack.c.l.bf16 %v2521
        %v2530 = vadd.f32 %v2506, %v2522
        %v2531 = vadd.f32 %v2507, %v2523
        %v2532 = vadd.f32 %v2508, %v2524
        %v2533 = vadd.f32 %v2509, %v2525
        %v2534 = vadd.f32 %v2510, %v2526
        %v2535 = vadd.f32 %v2511, %v2527
        %v2536 = vadd.f32 %v2512, %v2528
        %v2537 = vadd.f32 %v2513, %v2529
        %v2538 = vmax.f32 %v2530, 0.0
        %v2539 = vmax.f32 %v2531, 0.0
        %v2540 = vmax.f32 %v2532, 0.0
        %v2541 = vmax.f32 %v2533, 0.0
        %v2542 = vmax.f32 %v2534, 0.0
        %v2543 = vmax.f32 %v2535, 0.0
        %v2544 = vmax.f32 %v2536, 0.0
        %v2545 = vmax.f32 %v2537, 0.0
        %2546 = vst [vmem:[%s313] sm:$0xff] %v2538
        %2547 = vst [vmem:[%s313 + $0x8] sm:$0xff] %v2539
        %2548 = vst [vmem:[%s313 + $0x10] sm:$0xff] %v2540
        %2549 = vst [vmem:[%s313 + $0x18] sm:$0xff] %v2541
        %2550 = vst [vmem:[%s313 + $0x20] sm:$0xff] %v2542
        %2551 = vst [vmem:[%s313 + $0x28] sm:$0xff] %v2543
        %2552 = vst [vmem:[%s313 + $0x30] sm:$0xff] %v2544
        %2553 = vst [vmem:[%s313 + $0x38] sm:$0xff] %v2545
      $region44: #{basic_block_forward.5} parent=35 // pred_fallthru
        _
      %p2554 = scmp.lt.s32.totalorder %s20, 1
      %s2555 = scalar_select %p2554, %s20, 1
      %p2556 = scmp.lt.s32.totalorder %s21, 0
      %s2557 = scalar_select %p2556, %s21, 0
      %s2558 = smul.addr %s2555, 8
      %s2559 = sadd.s32 %s2557, %s2558
      %s2560 = smul.addr %s2559, 8
      %s2561 = scalar_lea.vmem %s4, %s2560
      // Predicated region
      $region45: #{basic_block_forward.5} parent=35 // pred_check
        %p2562 = pneg %p164
      $region46: #{basic_block_forward.5} parent=35 // pred_check_branch
        %2564 = sbr.rel (%p2562) target = $region48
      $region47: #{basic_block_forward.5} parent=35 // pred_region
        _
      $region48: #{basic_block_forward.5} parent=35 // pred_fallthru
        _
    $region36: #{basic_block_forward.5} parent=5 // pred_fallthru
      _
    %p2565 = scmp.le.s32.totalorder 2, %s10
    // Predicated region
    $region49: #{basic_block_forward.5} parent=5 // pred_check
      %p2566 = pneg %p2565
    $region50: #{basic_block_forward.5} parent=5 // pred_check_branch
      %2568 = sbr.rel (%p2566) target = $region52
    $region51: #{basic_block_forward.5} parent=5 // pred_region
      %s2569 = ssub.s32 %s10, 2
      // Predicated region
      $region53: #{basic_block_forward.5} parent=51 // pred_check
        %p2570 = pneg %p170
      $region54: #{basic_block_forward.5} parent=51 // pred_check_branch
        %2572 = sbr.rel (%p2570) target = $region56
      $region55: #{basic_block_forward.5} parent=51 // pred_region
        %p2573 = scmp.lt.s32.totalorder %s23, 1
        %s2574 = scalar_select %p2573, %s23, 1
        %p2575 = scmp.lt.s32.totalorder %s24, 0
        %s2576 = scalar_select %p2575, %s24, 0
        %s2577 = smul.addr %s2574, 8
        %s2578 = sadd.s32 %s2576, %s2577
        %s2579 = smul.addr %s2578, 8
        %s2580 = scalar_lea.vmem %s4, %s2579
      $region56: #{basic_block_forward.5} parent=51 // pred_fallthru
        _
    $region52: #{basic_block_forward.5} parent=5 // pred_fallthru
      _
  $region6: #{basic_block_forward.5} parent=0 // loop_footer
    %s14 = sadd.s32 1, %s10
  $region7: #{basic_block_forward.5} parent=0 // loop_footer_branch
    %9 = sbr.rel target = $region3
  $region8: #{basic_block_forward.5} parent=0 // loop_exit
    _

</llo_original>
